<compile_context>
chip_gen: v7x
topology: tpu7x:2x2x1
jax: 0.10.0
libtpu: 0.0.40
codegen_flags: <defaults>
</compile_context>

<pallas_src>
import jax
import jax.numpy as jnp
import numpy as np
from jax.experimental import pallas as pl
from jax.experimental.pallas import tpu as pltpu

DTYPE = jnp.float32
LANES = 128


def _round_up(x, m):
    return ((x + m - 1) // m) * m


# ----------------------------------------------------------------------------
# Fused GNN kernel: one grid step == G graphs, everything stays in VMEM.
# ----------------------------------------------------------------------------
def _make_gnn_kernel(G, K, H, Hp, n_layers, n_iters=1):
    """G graphs/step, K objects/graph, H real hidden width, Hp padded width."""
    # Stacked-parameter layout (see GNNPallas.__init__):
    #   W: [Ni0, Ni1, Ni2, E0a, E0b, E1..E_{L-1}, N0..N_{L-1}]
    #   B: [Nib0, Nib1, Nib2, Eb0..Eb_{L-1}, Nb0..Nb_{L-1}]
    IW_E0A = 3
    IW_E0B = 4
    IW_E = 4                      # E layer li (li >= 1) weight index = IW_E + li
    IW_N = 4 + n_layers
    IB_E = 3
    IB_N = 3 + n_layers
    inv_cnt = 1.0 / float(K * K * H)   # padded lanes are exactly 0 -> exact mean

    def kernel(of_ref, w_ref, b_ref, out_ref):
        def layer(h, wi, bi, relu):
            h = jnp.dot(h, w_ref[wi], preferred_element_type=jnp.float32)
            h = h + b_ref[bi:bi + 1, :]
            return jnp.maximum(h, 0.0) if relu else h

        # ---- embed_node: Ni (3 Linear layers, ReLU between) -----------------
        x = of_ref[...].reshape(G * K, Hp)             # lane-dense input block
        hn = layer(x, 0, 0, True)
        hn = layer(hn, 1, 1, True)
        hn = layer(hn, 2, 2, False)                    # (G*K, Hp)

        # ---- edge MLP: he[g,i,j] = E(concat(hn_i, hn_j)) ---------------------
        # Layer-0 weight is split so the (G,K,K,2H) concat never exists:
        #   z0[g,i,j] = hn[g,i] @ W0a + hn[g,j] @ W0b + b0
        def edge_fn(hn2):
            a = jnp.dot(hn2, w_ref[IW_E0A],
                        preferred_element_type=jnp.float32).reshape(G, K, Hp)
            c = jnp.dot(hn2, w_ref[IW_E0B],
                        preferred_element_type=jnp.float32).reshape(G, K, Hp)
            z = a[:, :, None, :] + c[:, None, :, :] + b_ref[IB_E:IB_E + 1, :]
            h = z.reshape(G * K * K, Hp)
            if n_layers > 1:
                h = jnp.maximum(h, 0.0)
                for li in range(1, n_layers):
                    h = layer(h, IW_E + li, IB_E + li, li < n_layers - 1)
            return h                                   # (G*K*K, Hp)

        # ---- node MLP over summed incoming edges (fused edge_sum) ------------
        def node_fn(he_flat):
            hs = jnp.sum(he_flat.reshape(G * K, K, Hp), axis=1)   # sum over j
            h = hs
            for li in range(n_layers):
                h = layer(h, IW_N + li, IB_N + li, li < n_layers - 1)
            return h                                   # (G*K, Hp)

        he = edge_fn(hn)                               # embed_edge (TODO above)
        for _ in range(n_iters):                       # I = 1 in the reference
            hn = node_fn(he)
            he = edge_fn(hn)

        # ---- final_pred: sigmoid(mean(he)) per graph --------------------------
        t = jnp.sum(he.reshape(G, K * K, Hp), axis=1)  # (G, Hp)
        tot = jnp.sum(t, axis=1, keepdims=True)        # (G, 1)
        y = 1.0 / (1.0 + jnp.exp(-tot * jnp.float32(inv_cnt)))
        # Full (G, 128) tile write -> unmasked stores; wrapper reads column 0.
        out_ref[...] = jnp.broadcast_to(y, (G, LANES)).astype(out_ref.dtype)

    return kernel


# ----------------------------------------------------------------------------
# Parameter construction (mirrors nn.Linear default init) + lane padding
# ----------------------------------------------------------------------------
def init_linear(key, fan_in, fan_out):
    kw, kb = jax.random.split(key)
    bound = 1.0 / jnp.sqrt(jnp.asarray(fan_in, DTYPE))
    w = jax.random.uniform(kw, (fan_in, fan_out), DTYPE, -bound, bound)
    b = jax.random.uniform(kb, (1, fan_out), DTYPE, -bound, bound)
    return w, b


def make_layers_params(key, n_input, n_output, n_hidden, n_layers):
    """Mirrors make_layers: n_layers Linear layers, ReLU between them."""
    dims = [n_input] + [n_hidden] * (n_layers - 1) + [n_output]
    keys = jax.random.split(key, n_layers)
    return [init_linear(keys[l], dims[l], dims[l + 1]) for l in range(n_layers)]


def _default_vmem_budget():
    # 48 MiB fits every listed chip (v7x has 64 MiB physical VMEM per TC);
    # v5e / v6e have 128 MiB physical, so allow a larger scoped budget there.
    budget = 48 * 1024 * 1024
    try:
        kind = jax.devices()[0].device_kind.lower()
        if ("v5" in kind) or ("v6" in kind):
            budget = 96 * 1024 * 1024
    except Exception:
        pass
    return budget


# ----------------------------------------------------------------------------
# GNN forward
# ----------------------------------------------------------------------------
class GNNPallas:
    def __init__(self, n_of_in, n_ef_in, n_hidden, n_layers, key):
        self.n_of_in, self.n_ef_in = n_of_in, n_ef_in
        self.n_hidden, self.n_layers = n_hidden, n_layers
        self.Hp = _round_up(max(n_hidden, 1), LANES)     # lane-dense hidden width
        assert n_of_in <= self.Hp, "object-feature dim must fit in one Hp slab"
        self.vmem_budget = _default_vmem_budget()

        k1, k2, k3 = jax.random.split(key, 3)
        Ni = make_layers_params(k1, n_of_in, n_hidden, n_hidden, 3)
        E = make_layers_params(k2, 2 * n_hidden, n_hidden, n_hidden, n_layers)
        N_ = make_layers_params(k3, n_hidden, n_hidden, n_hidden, n_layers)
        self.raw = dict(Ni=Ni, E=E, N=N_)                # for the pure-JAX reference

        H, Hp = n_hidden, self.Hp

        def padW(w):   # (fi, fo) -> (Hp, Hp), zero padded (exact: zero rows/cols)
            return jnp.pad(w, ((0, Hp - w.shape[0]), (0, Hp - w.shape[1])))

        def padB(b):   # (1, fo) -> (Hp,)
            return jnp.pad(b[0], (0, Hp - b.shape[1]))

        Ws, Bs = [], []
        for (w, b) in Ni:                                # Ni0 rows n_of_in -> Hp
            Ws.append(padW(w)); Bs.append(padB(b))
        w0, b0 = E[0]                                    # split 2H concat weight
        Ws.append(padW(w0[:H])); Ws.append(padW(w0[H:])); Bs.append(padB(b0))
        for (w, b) in E[1:]:
            Ws.append(padW(w)); Bs.append(padB(b))
        for (w, b) in N_:
            Ws.append(padW(w)); Bs.append(padB(b))
        self.W_stack = jnp.stack(Ws)                     # (LW, Hp, Hp)
        self.B_stack = jnp.stack(Bs)                     # (LB, Hp)

    # ---- choose graphs-per-step G and scoped VMEM from actual buffer sizes ----
    def _plan(self, Ngr, K):
        Hp = self.Hp
        param_bytes = 2 * 4 * (int(self.W_stack.size) + int(self.B_stack.size))
        per_graph = 4 * (4 * K * K * Hp      # he + edge-MLP in/out activation slabs
                         + 8 * K * Hp        # hn / he_sum / node slabs + 2x input block
                         + 2 * LANES)        # double-buffered output rows
        budget = self.vmem_budget - param_bytes - (2 << 20)
        g = min(max(budget // per_graph, 8), 128)
        if Ngr > 8:
            # keep >=2 grid steps so ("parallel",) can use both TCs on v7x
            g = min(g, _round_up(pl.cdiv(Ngr, 2), 8))
        else:
            g = 8
        g = int(max(8, (g // 8) * 8))
        est = param_bytes + per_graph * g + (2 << 20)
        vmem_limit = int(min(max(est, 32 * 1024 * 1024), self.vmem_budget))
        return g, vmem_limit

    def __call__(self, inputs):
        object_features = inputs[0]                      # (N, K, n_of_in)
        # TODO(synk): embed_edge is undefined in the reference; edge features
        # inputs[1] are unused (the only declared edge MLP is self.E over 2*H).
        Ngr, K, n_of_in = object_features.shape
        assert n_of_in == self.n_of_in
        Hp = self.Hp

        G, vmem_limit = self._plan(Ngr, K)
        N_pad = _round_up(Ngr, G)

        # Lane-dense input (pad features to Hp lanes; zero rows of the padded Ni
        # layer-0 weight keep this exact) and pad graphs so N_pad % G == 0
        # (padded graphs are computed and discarded).
        x = jnp.pad(object_features.astype(DTYPE),
                    ((0, N_pad - Ngr), (0, 0), (0, Hp - n_of_in)))

        kernel = _make_gnn_kernel(G, K, self.n_hidden, Hp, self.n_layers)

        out = pl.pallas_call(
            kernel,
            grid=(N_pad // G,),
            in_specs=[
                pl.BlockSpec((G, K, Hp), lambda n: (n, 0, 0)),
                # Stacked params: constant block index -> DMA'd once, resident.
                pl.BlockSpec(self.W_stack.shape, lambda n: (0, 0, 0)),
                pl.BlockSpec(self.B_stack.shape, lambda n: (0, 0)),
            ],
            out_specs=pl.BlockSpec((G, LANES), lambda n: (n, 0)),
            out_shape=jax.ShapeDtypeStruct((N_pad, LANES), DTYPE),
            compiler_params=pltpu.CompilerParams(
                dimension_semantics=("parallel",),
                vmem_limit_bytes=vmem_limit,
            ),
        )(x, self.W_stack, self.B_stack)
        return out[:Ngr, 0]                              # (N,)


# ----------------------------------------------------------------------------
# Pure-JAX reference (unfused, unpadded) for correctness checking
# ----------------------------------------------------------------------------
def _mlp_ref(x, layers):
    for i, (w, b) in enumerate(layers):
        x = x @ w + b
        if i < len(layers) - 1:
            x = jnp.maximum(x, 0.0)
    return x


def _gnn_reference(raw, object_features, n_hidden, n_iters=1):
    Ni, E, N_ = raw["Ni"], raw["E"], raw["N"]
    Ngr, K, n_of_in = object_features.shape
    hn = _mlp_ref(object_features.reshape(-1, n_of_in), Ni).reshape(Ngr, K, n_hidden)

    def edge_fn(hn):
        x = jnp.broadcast_to(hn[:, :, None, :], (Ngr, K, K, n_hidden))
        xx = jnp.concatenate([x, jnp.swapaxes(x, 1, 2)], axis=3)
        return _mlp_ref(xx.reshape(-1, 2 * n_hidden), E).reshape(Ngr, K, K, n_hidden)

    def node_fn(he):
        hs = jnp.sum(he, axis=2).reshape(-1, n_hidden)
        return _mlp_ref(hs, N_).reshape(Ngr, K, n_hidden)

    he = edge_fn(hn)
    for _ in range(n_iters):
        hn = node_fn(he)
        he = edge_fn(hn)
    return jax.nn.sigmoid(jnp.mean(he, axis=(1, 2, 3)))


# ----------------------------------------------------------------------------
if __name__ == "__main__":
    key = jax.random.PRNGKey(0)

    # Case 1: tiny batch (exercises single padded graph-block).
    k_param, k_obj, k_edge = jax.random.split(key, 3)
    N, K = 2, 8
    n_of_in, n_ef_in, n_hidden, n_layers = 4, 3, 32, 2
    object_features = jax.random.normal(k_obj, (N, K, n_of_in), DTYPE)
    edge_features = jax.random.normal(k_edge, (N, K, K, n_ef_in), DTYPE)  # unused
    model = GNNPallas(n_of_in, n_ef_in, n_hidden, n_layers, k_param)
    y = jax.block_until_ready(model([object_features, edge_features]))
    assert y.shape == (N,)
    y_ref = jax.block_until_ready(_gnn_reference(model.raw, object_features, n_hidden))
    np.testing.assert_allclose(np.asarray(y), np.asarray(y_ref), atol=2e-2, rtol=0)

    # Case 2: more graphs + deeper MLPs (exercises multi-step grid, graph
    # padding and batched (G*K*K, Hp) edge-MLP path).
    k_param2, k_obj2 = jax.random.split(jax.random.PRNGKey(1), 2)
    N2, nl2 = 20, 3
    of2 = jax.random.normal(k_obj2, (N2, K, n_of_in), DTYPE)
    ef2 = jnp.zeros((N2, K, K, n_ef_in), DTYPE)                           # unused
    model2 = GNNPallas(n_of_in, n_ef_in, n_hidden, nl2, k_param2)
    y2 = jax.block_until_ready(model2([of2, ef2]))
    assert y2.shape == (N2,)
    y2_ref = jax.block_until_ready(_gnn_reference(model2.raw, of2, n_hidden))
    np.testing.assert_allclose(np.asarray(y2), np.asarray(y2_ref), atol=2e-2, rtol=0)

    print("KERNEL_OK")
</pallas_src>

<mosaic_0001>
module attributes {stable_mosaic.version = 11 : i64} {
  func.func @kernel(%arg0: i32, %arg1: memref<8x8x128xf32, #tpu.memory_space<vmem>>, %arg2: memref<8x128x128xf32, #tpu.memory_space<vmem>>, %arg3: memref<7x128xf32, #tpu.memory_space<vmem>>, %arg4: memref<8x128xf32, #tpu.memory_space<vmem>>) attributes {dimension_semantics = [#tpu.dimension_semantics<parallel>], iteration_bounds = array<i64: 1>, scalar_prefetch = 0 : i64, scratch_operands = 0 : i64, tpu.core_type = #tpu.core_type<tc>, window_params = [{transform_indices = @transform_0, window_bounds = array<i64: 8, 8, 128>}, {pipeline_mode = #tpu.pipeline_mode<synchronous>, transform_indices = @transform_1, window_bounds = array<i64: 8, 128, 128>}, {pipeline_mode = #tpu.pipeline_mode<synchronous>, transform_indices = @transform_2, window_bounds = array<i64: 7, 128>}, {transform_indices = @transform_3, window_bounds = array<i64: 8, 128>}]} {
    %c0 = arith.constant 0 : index
    %c0_0 = arith.constant 0 : index
    %c0_1 = arith.constant 0 : index
    %0 = vector.load %arg1[%c0, %c0_0, %c0_1] : memref<8x8x128xf32, #tpu.memory_space<vmem>>, vector<8x8x128xf32>
    %1 = vector.shape_cast %0 : vector<8x8x128xf32> to vector<64x128xf32>
    %c0_2 = arith.constant 0 : index
    %c0_3 = arith.constant 0 : index
    %c0_4 = arith.constant 0 : index
    %2 = vector.load %arg2[%c0_2, %c0_3, %c0_4] : memref<8x128x128xf32, #tpu.memory_space<vmem>>, vector<1x128x128xf32>
    %3 = vector.shape_cast %2 : vector<1x128x128xf32> to vector<128x128xf32>
    %cst = arith.constant dense<0.000000e+00> : vector<64x128xf32>
    %4 = tpu.matmul %1, %3, %cst {dimension_numbers = #tpu.dot_dimension_numbers<[1], [0], [0], [1], [0, 0, 1, 1], [], []>} : vector<64x128xf32>, vector<128x128xf32>, vector<64x128xf32> -> vector<64x128xf32>
    %c0_5 = arith.constant 0 : index
    %c0_6 = arith.constant 0 : index
    %5 = vector.load %arg3[%c0_5, %c0_6] : memref<7x128xf32, #tpu.memory_space<vmem>>, vector<1x128xf32>
    %6 = vector.broadcast %5 : vector<1x128xf32> to vector<64x128xf32>
    %7 = arith.addf %4, %6 : vector<64x128xf32>
    %cst_7 = arith.constant 0.000000e+00 : f32
    %8 = vector.broadcast %cst_7 : f32 to vector<64x128xf32>
    %9 = arith.maximumf %7, %8 : vector<64x128xf32>
    %c1 = arith.constant 1 : index
    %c0_8 = arith.constant 0 : index
    %c0_9 = arith.constant 0 : index
    %10 = vector.load %arg2[%c1, %c0_8, %c0_9] : memref<8x128x128xf32, #tpu.memory_space<vmem>>, vector<1x128x128xf32>
    %11 = vector.shape_cast %10 : vector<1x128x128xf32> to vector<128x128xf32>
    %cst_10 = arith.constant dense<0.000000e+00> : vector<64x128xf32>
    %12 = tpu.matmul %9, %11, %cst_10 {dimension_numbers = #tpu.dot_dimension_numbers<[1], [0], [0], [1], [0, 0, 1, 1], [], []>} : vector<64x128xf32>, vector<128x128xf32>, vector<64x128xf32> -> vector<64x128xf32>
    %c1_11 = arith.constant 1 : index
    %c0_12 = arith.constant 0 : index
    %13 = vector.load %arg3[%c1_11, %c0_12] : memref<7x128xf32, #tpu.memory_space<vmem>>, vector<1x128xf32>
    %14 = vector.broadcast %13 : vector<1x128xf32> to vector<64x128xf32>
    %15 = arith.addf %12, %14 : vector<64x128xf32>
    %cst_13 = arith.constant 0.000000e+00 : f32
    %16 = vector.broadcast %cst_13 : f32 to vector<64x128xf32>
    %17 = arith.maximumf %15, %16 : vector<64x128xf32>
    %c2 = arith.constant 2 : index
    %c0_14 = arith.constant 0 : index
    %c0_15 = arith.constant 0 : index
    %18 = vector.load %arg2[%c2, %c0_14, %c0_15] : memref<8x128x128xf32, #tpu.memory_space<vmem>>, vector<1x128x128xf32>
    %19 = vector.shape_cast %18 : vector<1x128x128xf32> to vector<128x128xf32>
    %cst_16 = arith.constant dense<0.000000e+00> : vector<64x128xf32>
    %20 = tpu.matmul %17, %19, %cst_16 {dimension_numbers = #tpu.dot_dimension_numbers<[1], [0], [0], [1], [0, 0, 1, 1], [], []>} : vector<64x128xf32>, vector<128x128xf32>, vector<64x128xf32> -> vector<64x128xf32>
    %c2_17 = arith.constant 2 : index
    %c0_18 = arith.constant 0 : index
    %21 = vector.load %arg3[%c2_17, %c0_18] : memref<7x128xf32, #tpu.memory_space<vmem>>, vector<1x128xf32>
    %22 = vector.broadcast %21 : vector<1x128xf32> to vector<64x128xf32>
    %23 = arith.addf %20, %22 : vector<64x128xf32>
    %c3 = arith.constant 3 : index
    %c0_19 = arith.constant 0 : index
    %c0_20 = arith.constant 0 : index
    %24 = vector.load %arg2[%c3, %c0_19, %c0_20] : memref<8x128x128xf32, #tpu.memory_space<vmem>>, vector<1x128x128xf32>
    %25 = vector.shape_cast %24 : vector<1x128x128xf32> to vector<128x128xf32>
    %cst_21 = arith.constant dense<0.000000e+00> : vector<64x128xf32>
    %26 = tpu.matmul %23, %25, %cst_21 {dimension_numbers = #tpu.dot_dimension_numbers<[1], [0], [0], [1], [0, 0, 1, 1], [], []>} : vector<64x128xf32>, vector<128x128xf32>, vector<64x128xf32> -> vector<64x128xf32>
    %27 = vector.shape_cast %26 : vector<64x128xf32> to vector<8x8x128xf32>
    %c4 = arith.constant 4 : index
    %c0_22 = arith.constant 0 : index
    %c0_23 = arith.constant 0 : index
    %28 = vector.load %arg2[%c4, %c0_22, %c0_23] : memref<8x128x128xf32, #tpu.memory_space<vmem>>, vector<1x128x128xf32>
    %29 = vector.shape_cast %28 : vector<1x128x128xf32> to vector<128x128xf32>
    %cst_24 = arith.constant dense<0.000000e+00> : vector<64x128xf32>
    %30 = tpu.matmul %23, %29, %cst_24 {dimension_numbers = #tpu.dot_dimension_numbers<[1], [0], [0], [1], [0, 0, 1, 1], [], []>} : vector<64x128xf32>, vector<128x128xf32>, vector<64x128xf32> -> vector<64x128xf32>
    %31 = vector.shape_cast %30 : vector<64x128xf32> to vector<8x8x128xf32>
    %32 = vector.shape_cast %27 : vector<8x8x128xf32> to vector<8x8x1x128xf32>
    %33 = vector.shape_cast %31 : vector<8x8x128xf32> to vector<8x1x8x128xf32>
    %34 = vector.broadcast %32 : vector<8x8x1x128xf32> to vector<8x8x8x128xf32>
    %35 = vector.broadcast %33 : vector<8x1x8x128xf32> to vector<8x8x8x128xf32>
    %36 = arith.addf %34, %35 : vector<8x8x8x128xf32>
    %c3_25 = arith.constant 3 : index
    %c0_26 = arith.constant 0 : index
    %37 = vector.load %arg3[%c3_25, %c0_26] : memref<7x128xf32, #tpu.memory_space<vmem>>, vector<1x128xf32>
    %38 = vector.shape_cast %37 : vector<1x128xf32> to vector<1x1x1x128xf32>
    %39 = vector.broadcast %38 : vector<1x1x1x128xf32> to vector<8x8x8x128xf32>
    %40 = arith.addf %36, %39 : vector<8x8x8x128xf32>
    %41 = vector.shape_cast %40 : vector<8x8x8x128xf32> to vector<512x128xf32>
    %cst_27 = arith.constant 0.000000e+00 : f32
    %42 = vector.broadcast %cst_27 : f32 to vector<512x128xf32>
    %43 = arith.maximumf %41, %42 : vector<512x128xf32>
    %c5 = arith.constant 5 : index
    %c0_28 = arith.constant 0 : index
    %c0_29 = arith.constant 0 : index
    %44 = vector.load %arg2[%c5, %c0_28, %c0_29] : memref<8x128x128xf32, #tpu.memory_space<vmem>>, vector<1x128x128xf32>
    %45 = vector.shape_cast %44 : vector<1x128x128xf32> to vector<128x128xf32>
    %cst_30 = arith.constant dense<0.000000e+00> : vector<512x128xf32>
    %46 = tpu.matmul %43, %45, %cst_30 {dimension_numbers = #tpu.dot_dimension_numbers<[1], [0], [0], [1], [0, 0, 1, 1], [], []>} : vector<512x128xf32>, vector<128x128xf32>, vector<512x128xf32> -> vector<512x128xf32>
    %c4_31 = arith.constant 4 : index
    %c0_32 = arith.constant 0 : index
    %47 = vector.load %arg3[%c4_31, %c0_32] : memref<7x128xf32, #tpu.memory_space<vmem>>, vector<1x128xf32>
    %48 = vector.broadcast %47 : vector<1x128xf32> to vector<512x128xf32>
    %49 = arith.addf %46, %48 : vector<512x128xf32>
    %50 = vector.shape_cast %49 : vector<512x128xf32> to vector<64x8x128xf32>
    %cst_33 = arith.constant dense<0.000000e+00> : vector<64x128xf32>
    %51 = vector.multi_reduction <add>, %50, %cst_33 [1] : vector<64x8x128xf32> to vector<64x128xf32>
    %c6 = arith.constant 6 : index
    %c0_34 = arith.constant 0 : index
    %c0_35 = arith.constant 0 : index
    %52 = vector.load %arg2[%c6, %c0_34, %c0_35] : memref<8x128x128xf32, #tpu.memory_space<vmem>>, vector<1x128x128xf32>
    %53 = vector.shape_cast %52 : vector<1x128x128xf32> to vector<128x128xf32>
    %cst_36 = arith.constant dense<0.000000e+00> : vector<64x128xf32>
    %54 = tpu.matmul %51, %53, %cst_36 {dimension_numbers = #tpu.dot_dimension_numbers<[1], [0], [0], [1], [0, 0, 1, 1], [], []>} : vector<64x128xf32>, vector<128x128xf32>, vector<64x128xf32> -> vector<64x128xf32>
    %c5_37 = arith.constant 5 : index
    %c0_38 = arith.constant 0 : index
    %55 = vector.load %arg3[%c5_37, %c0_38] : memref<7x128xf32, #tpu.memory_space<vmem>>, vector<1x128xf32>
    %56 = vector.broadcast %55 : vector<1x128xf32> to vector<64x128xf32>
    %57 = arith.addf %54, %56 : vector<64x128xf32>
    %cst_39 = arith.constant 0.000000e+00 : f32
    %58 = vector.broadcast %cst_39 : f32 to vector<64x128xf32>
    %59 = arith.maximumf %57, %58 : vector<64x128xf32>
    %c7 = arith.constant 7 : index
    %c0_40 = arith.constant 0 : index
    %c0_41 = arith.constant 0 : index
    %60 = vector.load %arg2[%c7, %c0_40, %c0_41] : memref<8x128x128xf32, #tpu.memory_space<vmem>>, vector<1x128x128xf32>
    %61 = vector.shape_cast %60 : vector<1x128x128xf32> to vector<128x128xf32>
    %cst_42 = arith.constant dense<0.000000e+00> : vector<64x128xf32>
    %62 = tpu.matmul %59, %61, %cst_42 {dimension_numbers = #tpu.dot_dimension_numbers<[1], [0], [0], [1], [0, 0, 1, 1], [], []>} : vector<64x128xf32>, vector<128x128xf32>, vector<64x128xf32> -> vector<64x128xf32>
    %c6_43 = arith.constant 6 : index
    %c0_44 = arith.constant 0 : index
    %63 = vector.load %arg3[%c6_43, %c0_44] : memref<7x128xf32, #tpu.memory_space<vmem>>, vector<1x128xf32>
    %64 = vector.broadcast %63 : vector<1x128xf32> to vector<64x128xf32>
    %65 = arith.addf %62, %64 : vector<64x128xf32>
    %c3_45 = arith.constant 3 : index
    %c0_46 = arith.constant 0 : index
    %c0_47 = arith.constant 0 : index
    %66 = vector.load %arg2[%c3_45, %c0_46, %c0_47] : memref<8x128x128xf32, #tpu.memory_space<vmem>>, vector<1x128x128xf32>
    %67 = vector.shape_cast %66 : vector<1x128x128xf32> to vector<128x128xf32>
    %cst_48 = arith.constant dense<0.000000e+00> : vector<64x128xf32>
    %68 = tpu.matmul %65, %67, %cst_48 {dimension_numbers = #tpu.dot_dimension_numbers<[1], [0], [0], [1], [0, 0, 1, 1], [], []>} : vector<64x128xf32>, vector<128x128xf32>, vector<64x128xf32> -> vector<64x128xf32>
    %69 = vector.shape_cast %68 : vector<64x128xf32> to vector<8x8x128xf32>
    %c4_49 = arith.constant 4 : index
    %c0_50 = arith.constant 0 : index
    %c0_51 = arith.constant 0 : index
    %70 = vector.load %arg2[%c4_49, %c0_50, %c0_51] : memref<8x128x128xf32, #tpu.memory_space<vmem>>, vector<1x128x128xf32>
    %71 = vector.shape_cast %70 : vector<1x128x128xf32> to vector<128x128xf32>
    %cst_52 = arith.constant dense<0.000000e+00> : vector<64x128xf32>
    %72 = tpu.matmul %65, %71, %cst_52 {dimension_numbers = #tpu.dot_dimension_numbers<[1], [0], [0], [1], [0, 0, 1, 1], [], []>} : vector<64x128xf32>, vector<128x128xf32>, vector<64x128xf32> -> vector<64x128xf32>
    %73 = vector.shape_cast %72 : vector<64x128xf32> to vector<8x8x128xf32>
    %74 = vector.shape_cast %69 : vector<8x8x128xf32> to vector<8x8x1x128xf32>
    %75 = vector.shape_cast %73 : vector<8x8x128xf32> to vector<8x1x8x128xf32>
    %76 = vector.broadcast %74 : vector<8x8x1x128xf32> to vector<8x8x8x128xf32>
    %77 = vector.broadcast %75 : vector<8x1x8x128xf32> to vector<8x8x8x128xf32>
    %78 = arith.addf %76, %77 : vector<8x8x8x128xf32>
    %c3_53 = arith.constant 3 : index
    %c0_54 = arith.constant 0 : index
    %79 = vector.load %arg3[%c3_53, %c0_54] : memref<7x128xf32, #tpu.memory_space<vmem>>, vector<1x128xf32>
    %80 = vector.shape_cast %79 : vector<1x128xf32> to vector<1x1x1x128xf32>
    %81 = vector.broadcast %80 : vector<1x1x1x128xf32> to vector<8x8x8x128xf32>
    %82 = arith.addf %78, %81 : vector<8x8x8x128xf32>
    %83 = vector.shape_cast %82 : vector<8x8x8x128xf32> to vector<512x128xf32>
    %cst_55 = arith.constant 0.000000e+00 : f32
    %84 = vector.broadcast %cst_55 : f32 to vector<512x128xf32>
    %85 = arith.maximumf %83, %84 : vector<512x128xf32>
    %c5_56 = arith.constant 5 : index
    %c0_57 = arith.constant 0 : index
    %c0_58 = arith.constant 0 : index
    %86 = vector.load %arg2[%c5_56, %c0_57, %c0_58] : memref<8x128x128xf32, #tpu.memory_space<vmem>>, vector<1x128x128xf32>
    %87 = vector.shape_cast %86 : vector<1x128x128xf32> to vector<128x128xf32>
    %cst_59 = arith.constant dense<0.000000e+00> : vector<512x128xf32>
    %88 = tpu.matmul %85, %87, %cst_59 {dimension_numbers = #tpu.dot_dimension_numbers<[1], [0], [0], [1], [0, 0, 1, 1], [], []>} : vector<512x128xf32>, vector<128x128xf32>, vector<512x128xf32> -> vector<512x128xf32>
    %c4_60 = arith.constant 4 : index
    %c0_61 = arith.constant 0 : index
    %89 = vector.load %arg3[%c4_60, %c0_61] : memref<7x128xf32, #tpu.memory_space<vmem>>, vector<1x128xf32>
    %90 = vector.broadcast %89 : vector<1x128xf32> to vector<512x128xf32>
    %91 = arith.addf %88, %90 : vector<512x128xf32>
    %92 = vector.shape_cast %91 : vector<512x128xf32> to vector<8x64x128xf32>
    %cst_62 = arith.constant dense<0.000000e+00> : vector<8x128xf32>
    %93 = vector.multi_reduction <add>, %92, %cst_62 [1] : vector<8x64x128xf32> to vector<8x128xf32>
    %cst_63 = arith.constant dense<0.000000e+00> : vector<8xf32>
    %94 = vector.multi_reduction <add>, %93, %cst_63 [1] : vector<8x128xf32> to vector<8xf32>
    %95 = vector.shape_cast %94 : vector<8xf32> to vector<8x1xf32>
    %cst_64 = arith.constant 0.000000e+00 : f32
    %96 = vector.broadcast %cst_64 : f32 to vector<8x1xf32>
    %97 = arith.subf %96, %95 : vector<8x1xf32>
    %cst_65 = arith.constant 4.8828125E-4 : f32
    %98 = vector.broadcast %cst_65 : f32 to vector<8x1xf32>
    %99 = arith.mulf %97, %98 : vector<8x1xf32>
    %100 = math.exp %99 : vector<8x1xf32>
    %cst_66 = arith.constant 1.000000e+00 : f32
    %101 = vector.broadcast %cst_66 : f32 to vector<8x1xf32>
    %102 = arith.addf %101, %100 : vector<8x1xf32>
    %cst_67 = arith.constant 1.000000e+00 : f32
    %103 = vector.broadcast %cst_67 : f32 to vector<8x1xf32>
    %104 = arith.divf %103, %102 : vector<8x1xf32>
    %105 = vector.shape_cast %104 : vector<8x1xf32> to vector<8x1xf32>
    %106 = vector.broadcast %105 : vector<8x1xf32> to vector<8x128xf32>
    %c0_68 = arith.constant 0 : index
    %c0_69 = arith.constant 0 : index
    %107 = vector.load %arg4[%c0_68, %c0_69] : memref<8x128xf32, #tpu.memory_space<vmem>>, vector<8x128xf32>
    tpu.vector_store %arg4[%c0_68, %c0_69], %106 {strides = array<i32>} : memref<8x128xf32, #tpu.memory_space<vmem>>, vector<8x128xf32>,
    return
  }
  func.func @transform_0(%arg0: i32) -> (i32, i32, i32) {
    %c0_i32 = arith.constant 0 : i32
    %c0_i32_0 = arith.constant 0 : i32
    %c0_i32_1 = arith.constant 0 : i32
    return %arg0, %c0_i32, %c0_i32_0 : i32, i32, i32
  }
  func.func @transform_1(%arg0: i32) -> (i32, i32, i32) {
    %c0_i32 = arith.constant 0 : i32
    %c0_i32_0 = arith.constant 0 : i32
    %c0_i32_1 = arith.constant 0 : i32
    %c0_i32_2 = arith.constant 0 : i32
    return %c0_i32, %c0_i32_0, %c0_i32_1 : i32, i32, i32
  }
  func.func @transform_2(%arg0: i32) -> (i32, i32) {
    %c0_i32 = arith.constant 0 : i32
    %c0_i32_0 = arith.constant 0 : i32
    %c0_i32_1 = arith.constant 0 : i32
    return %c0_i32, %c0_i32_0 : i32, i32
  }
  func.func @transform_3(%arg0: i32) -> (i32, i32) {
    %c0_i32 = arith.constant 0 : i32
    %c0_i32_0 = arith.constant 0 : i32
    return %arg0, %c0_i32 : i32, i32
  }
}

</mosaic_0001>

<llo_original>
// kernel: tpu_custom_call.1
$region0: #{tpu_custom_call.1}
  #allocation0 [shape = 'u32[]', space=smem, size = 0x4, offset = 0x4, fixed_abs, tag = 'smem constant byte address 0x4 - core index']
  #allocation1 [shape = 'u32[144,128]{1,0:T(1,128)}', space=vmem, size = 0x12000, scoped, tag = 'internal scratch']
  %s0 = inlined_call_operand.hbm [shape: f32[8,8,128], index: 0, kind: input, shape index: {}]
  %s1 = inlined_call_operand.hbm [shape: f32[8,128,128], index: 1, kind: input, shape index: {}]
  %s2 = inlined_call_operand.hbm [shape: f32[7,128], index: 2, kind: input, shape index: {}]
  %s3 = inlined_call_operand.hbm [shape: f32[8,128], index: 3, kind: output, shape index: {}]
  %s4 = sld [smem:[#allocation0]]
  $region34: #{tpu_custom_call.1} parent=0
    _
  %s6 = ssub.s32 1, %s4
  %s7 = scalar_select 0, %s6, %s4
  $region1: #{tpu_custom_call.1} parent=0
    #allocation2 [shape = 'u8[32768]{0}', space=vmem, size = 0x8000, scoped, tag = 'input window, operand 0, single buffered']
    #allocation3 [shape = 's32[1]{0}', space=sflag, size = 0x4, scoped, tag = 'scoped memory for tpu_custom_call.1']
    #allocation4 [shape = 's32[1]{0}', space=sflag, size = 0x4, scoped, tag = 'scoped memory for tpu_custom_call.1']
    #allocation5 [shape = 'u8[524288]{0}', space=vmem, size = 0x80000, scoped, tag = 'input window, operand 1, single buffered']
    #allocation6 [shape = 's32[1]{0}', space=sflag, size = 0x4, scoped, tag = 'scoped memory for tpu_custom_call.1']
    #allocation7 [shape = 'u8[4096]{0}', space=vmem, size = 0x1000, scoped, tag = 'input window, operand 2, single buffered']
    #allocation8 [shape = 'u8[4096]{0}', space=vmem, size = 0x1000, scoped, tag = 'output window, operand 0, single buffered']
    %8 = vsyncpa [#allocation3], 0
    %9 = vsyncpa [#allocation6], 0
    %10 = vsyncpa [#allocation4], 0
    // Predicated region
    $region2: #{tpu_custom_call.1} parent=1 // pred_check
      _
    $region3: #{tpu_custom_call.1} parent=1 // pred_check_branch
      %12 = sbr.rel (0) target = $region5
    $region4: #{tpu_custom_call.1} parent=1 // pred_region
      %s14 = ssub.s32 1024, 1024
      %15 = vsyncadd [#allocation3], %s14
      %s16 = sshll.u32 [#allocation2], 4
      %s17 = int_to_ptr.vmem [resolvable:$true] %s16
      %22 = dma.hbm_to_vmem [thread:$0]  %s0, 1024, %s17, [#allocation3], 128, 128, 8
    $region5: #{tpu_custom_call.1} parent=1 // pred_fallthru
      _
    // Predicated region
    $region6: #{tpu_custom_call.1} parent=1 // pred_check
      _
    $region7: #{tpu_custom_call.1} parent=1 // pred_check_branch
      %24 = sbr.rel (0) target = $region9
    $region8: #{tpu_custom_call.1} parent=1 // pred_region
      %s26 = ssub.s32 16384, 16384
      %27 = vsyncadd [#allocation6], %s26
      %s28 = sshll.u32 [#allocation5], 4
      %s29 = int_to_ptr.vmem [resolvable:$true] %s28
      %34 = dma.hbm_to_vmem [thread:$0]  %s1, 16384, %s29, [#allocation6], 128, 128, 8
    $region9: #{tpu_custom_call.1} parent=1 // pred_fallthru
      _
    // Predicated region
    $region10: #{tpu_custom_call.1} parent=1 // pred_check
      _
    $region11: #{tpu_custom_call.1} parent=1 // pred_check_branch
      %36 = sbr.rel (0) target = $region13
    $region12: #{tpu_custom_call.1} parent=1 // pred_region
      %s38 = ssub.s32 128, 128
      %39 = vsyncadd [#allocation6], %s38
      %s41 = sshll.u32 [#allocation7], 4
      %s42 = int_to_ptr.vmem [resolvable:$true] %s41
      %44 = dma.hbm_to_vmem [thread:$0]  %s2, 128, %s42, [#allocation6]
    $region13: #{tpu_custom_call.1} parent=1 // pred_fallthru
      _
    // Predicated region
    $region14: #{tpu_custom_call.1} parent=1 // pred_check
      _
    $region15: #{tpu_custom_call.1} parent=1 // pred_check_branch
      %46 = sbr.rel (0) target = $region17
    $region16: #{tpu_custom_call.1} parent=1 // pred_region
      %47 = dma.done [#allocation3], 1024
    $region17: #{tpu_custom_call.1} parent=1 // pred_fallthru
      _
    // Predicated region
    $region18: #{tpu_custom_call.1} parent=1 // pred_check
      _
    $region19: #{tpu_custom_call.1} parent=1 // pred_check_branch
      %49 = sbr.rel (0) target = $region21
    $region20: #{tpu_custom_call.1} parent=1 // pred_region
      %50 = dma.done [#allocation6], 16384
    $region21: #{tpu_custom_call.1} parent=1 // pred_fallthru
      _
    // Predicated region
    $region22: #{tpu_custom_call.1} parent=1 // pred_check
      _
    $region23: #{tpu_custom_call.1} parent=1 // pred_check_branch
      %52 = sbr.rel (0) target = $region25
    $region24: #{tpu_custom_call.1} parent=1 // pred_region
      %53 = dma.done [#allocation6], 128
    $region25: #{tpu_custom_call.1} parent=1 // pred_fallthru
      _
    %v54 = vld [vmem:[#allocation2] sm:$0xff]
    %v55 = vld [vmem:[#allocation2 + $0x8] sm:$0xff]
    %v56 = vld [vmem:[#allocation2 + $0x10] sm:$0xff]
    %v57 = vld [vmem:[#allocation2 + $0x18] sm:$0xff]
    %v58 = vld [vmem:[#allocation2 + $0x20] sm:$0xff]
    %v59 = vld [vmem:[#allocation2 + $0x28] sm:$0xff]
    %v60 = vld [vmem:[#allocation2 + $0x30] sm:$0xff]
    %v61 = vld [vmem:[#allocation2 + $0x38] sm:$0xff]
    %v62 = vld [vmem:[#allocation5] sm:$0xff]
    %v63 = vld [vmem:[#allocation5 + $0x8] sm:$0xff]
    %v64 = vld [vmem:[#allocation5 + $0x10] sm:$0xff]
    %v65 = vld [vmem:[#allocation5 + $0x18] sm:$0xff]
    %v66 = vld [vmem:[#allocation5 + $0x20] sm:$0xff]
    %v67 = vld [vmem:[#allocation5 + $0x28] sm:$0xff]
    %v68 = vld [vmem:[#allocation5 + $0x30] sm:$0xff]
    %v69 = vld [vmem:[#allocation5 + $0x38] sm:$0xff]
    %v70 = vld [vmem:[#allocation5 + $0x40] sm:$0xff]
    %v71 = vld [vmem:[#allocation5 + $0x48] sm:$0xff]
    %v72 = vld [vmem:[#allocation5 + $0x50] sm:$0xff]
    %v73 = vld [vmem:[#allocation5 + $0x58] sm:$0xff]
    %v74 = vld [vmem:[#allocation5 + $0x60] sm:$0xff]
    %v75 = vld [vmem:[#allocation5 + $0x68] sm:$0xff]
    %v76 = vld [vmem:[#allocation5 + $0x70] sm:$0xff]
    %v77 = vld [vmem:[#allocation5 + $0x78] sm:$0xff]
    %v78 = vld [vmem:[#allocation7] sm:$0x1]
    %v79 = vlaneseq
    %v80 = vshrl.u32 %v79, 7
    %v81 = vsub.s32 0, %v80
    %v82 = vrot.slane %v78, %v81
    %83 = vmatprep.subr.mxu0 0.0
    %84 = vmatpush1.msra.mxu0 %v62
    %85 = vmatprep.subr.mxu0 0.0
    %86 = vmatpush1.msra.mxu0 %v63
    %87 = vmatprep.subr.mxu0 0.0
    %88 = vmatpush1.msra.mxu0 %v64
    %89 = vmatprep.subr.mxu0 0.0
    %90 = vmatpush1.msra.mxu0 %v65
    %91 = vmatprep.subr.mxu0 0.0
    %92 = vmatpush1.msra.mxu0 %v66
    %93 = vmatprep.subr.mxu0 0.0
    %94 = vmatpush1.msra.mxu0 %v67
    %95 = vmatprep.subr.mxu0 0.0
    %96 = vmatpush1.msra.mxu0 %v68
    %97 = vmatprep.subr.mxu0 0.0
    %98 = vmatpush1.msra.mxu0 %v69
    %99 = vmatprep.subr.mxu0 0.0
    %100 = vmatpush1.msra.mxu0 %v70
    %101 = vmatprep.subr.mxu0 0.0
    %102 = vmatpush1.msra.mxu0 %v71
    %103 = vmatprep.subr.mxu0 0.0
    %104 = vmatpush1.msra.mxu0 %v72
    %105 = vmatprep.subr.mxu0 0.0
    %106 = vmatpush1.msra.mxu0 %v73
    %107 = vmatprep.subr.mxu0 0.0
    %108 = vmatpush1.msra.mxu0 %v74
    %109 = vmatprep.subr.mxu0 0.0
    %110 = vmatpush1.msra.mxu0 %v75
    %111 = vmatprep.subr.mxu0 0.0
    %112 = vmatpush1.msra.mxu0 %v76
    %113 = vmatprep.subr.mxu0 0.0
    %114 = vmatpush1.msra.mxu0 %v77
    %115 = vmatprep.subr.mxu0 0.0
    %116 = vmatpush1.msra.mxu0 0.0
    %117 = vmatprep.subr.mxu0 0.0
    %118 = vmatpush1.msra.mxu0 0.0
    %119 = vmatprep.subr.mxu0 0.0
    %120 = vmatpush1.msra.mxu0 0.0
    %121 = vmatprep.subr.mxu0 0.0
    %122 = vmatpush1.msra.mxu0 0.0
    %123 = vmatprep.subr.mxu0 0.0
    %124 = vmatpush1.msra.mxu0 0.0
    %125 = vmatprep.subr.mxu0 0.0
    %126 = vmatpush1.msra.mxu0 0.0
    %127 = vmatprep.subr.mxu0 0.0
    %128 = vmatpush1.msra.mxu0 0.0
    %129 = vmatprep.subr.mxu0 0.0
    %130 = vmatpush1.msra.mxu0 0.0
    %131 = vmatprep.subr.mxu0 0.0
    %132 = vmatpush1.msra.mxu0 0.0
    %133 = vmatprep.subr.mxu0 0.0
    %134 = vmatpush1.msra.mxu0 0.0
    %135 = vmatprep.subr.mxu0 0.0
    %136 = vmatpush1.msra.mxu0 0.0
    %137 = vmatprep.subr.mxu0 0.0
    %138 = vmatpush1.msra.mxu0 0.0
    %139 = vmatprep.subr.mxu0 0.0
    %140 = vmatpush1.msra.mxu0 0.0
    %141 = vmatprep.subr.mxu0 0.0
    %142 = vmatpush1.msra.mxu0 0.0
    %143 = vmatprep.subr.mxu0 0.0
    %144 = vmatpush1.msra.mxu0 0.0
    %145 = vmatprep.subr.mxu0 0.0
    %146 = vmatpush1.msra.mxu0 0.0
    %147 = vmatprep.mubr.f32.mxu0 0.0
    %148 = vmatmul.mubr.f32.gmra.mrb[0].mxu0 %v54
    %v149 = vpop.f32.mrb[0].mxu0
    %v150 = vadd.f32 %v82, %v149
    %v151 = vpop.f32.mrb[0].mxu0
    %152 = vmatprep.mubr.f32.mxu0 0.0
    %153 = vmatmul.mubr.f32.gmra.mrb[0].mxu0 %v55
    %v154 = vpop.f32.mrb[0].mxu0
    %v155 = vadd.f32 %v82, %v154
    %v156 = vpop.f32.mrb[0].mxu0
    %157 = vmatprep.mubr.f32.mxu0 0.0
    %158 = vmatmul.mubr.f32.gmra.mrb[0].mxu0 %v56
    %v159 = vpop.f32.mrb[0].mxu0
    %v160 = vadd.f32 %v82, %v159
    %v161 = vpop.f32.mrb[0].mxu0
    %162 = vmatprep.mubr.f32.mxu0 0.0
    %163 = vmatmul.mubr.f32.gmra.mrb[0].mxu0 %v57
    %v164 = vpop.f32.mrb[0].mxu0
    %v165 = vadd.f32 %v82, %v164
    %v166 = vpop.f32.mrb[0].mxu0
    %167 = vmatprep.mubr.f32.mxu0 0.0
    %168 = vmatmul.mubr.f32.gmra.mrb[0].mxu0 %v58
    %v169 = vpop.f32.mrb[0].mxu0
    %v170 = vadd.f32 %v82, %v169
    %v171 = vpop.f32.mrb[0].mxu0
    %172 = vmatprep.mubr.f32.mxu0 0.0
    %173 = vmatmul.mubr.f32.gmra.mrb[0].mxu0 %v59
    %v174 = vpop.f32.mrb[0].mxu0
    %v175 = vadd.f32 %v82, %v174
    %v176 = vpop.f32.mrb[0].mxu0
    %177 = vmatprep.mubr.f32.mxu0 0.0
    %178 = vmatmul.mubr.f32.gmra.mrb[0].mxu0 %v60
    %v179 = vpop.f32.mrb[0].mxu0
    %v180 = vadd.f32 %v82, %v179
    %v181 = vpop.f32.mrb[0].mxu0
    %182 = vmatprep.mubr.f32.mxu0 0.0
    %183 = vmatmul.mubr.f32.gmra.mrb[0].mxu0 %v61
    %v184 = vpop.f32.mrb[0].mxu0
    %v185 = vadd.f32 %v82, %v184
    %v186 = vpop.f32.mrb[0].mxu0
    %187 = vdwg.mxu0
    %v188 = vmax.f32 %v150, 0.0
    %v189 = vmax.f32 %v155, 0.0
    %v190 = vmax.f32 %v160, 0.0
    %v191 = vmax.f32 %v165, 0.0
    %v192 = vmax.f32 %v170, 0.0
    %v193 = vmax.f32 %v175, 0.0
    %v194 = vmax.f32 %v180, 0.0
    %v195 = vmax.f32 %v185, 0.0
    %s196 = scalar_lea.vmem [#allocation5], 128
    %v197 = vld [vmem:[%s196] sm:$0xff]
    %v198 = vld [vmem:[%s196 + $0x8] sm:$0xff]
    %v199 = vld [vmem:[%s196 + $0x10] sm:$0xff]
    %v200 = vld [vmem:[%s196 + $0x18] sm:$0xff]
    %v201 = vld [vmem:[%s196 + $0x20] sm:$0xff]
    %v202 = vld [vmem:[%s196 + $0x28] sm:$0xff]
    %v203 = vld [vmem:[%s196 + $0x30] sm:$0xff]
    %v204 = vld [vmem:[%s196 + $0x38] sm:$0xff]
    %v205 = vld [vmem:[%s196 + $0x40] sm:$0xff]
    %v206 = vld [vmem:[%s196 + $0x48] sm:$0xff]
    %v207 = vld [vmem:[%s196 + $0x50] sm:$0xff]
    %v208 = vld [vmem:[%s196 + $0x58] sm:$0xff]
    %v209 = vld [vmem:[%s196 + $0x60] sm:$0xff]
    %v210 = vld [vmem:[%s196 + $0x68] sm:$0xff]
    %v211 = vld [vmem:[%s196 + $0x70] sm:$0xff]
    %v212 = vld [vmem:[%s196 + $0x78] sm:$0xff]
    %v213 = vld [vmem:[#allocation7 + $0x1] sm:$0x1]
    %v214 = vlaneseq
    %v215 = vshrl.u32 %v214, 7
    %v216 = vsub.s32 0, %v215
    %v217 = vrot.slane %v213, %v216
    %218 = vmatprep.subr.mxu0 0.0
    %219 = vmatpush1.msra.mxu0 %v197
    %220 = vmatprep.subr.mxu0 0.0
    %221 = vmatpush1.msra.mxu0 %v198
    %222 = vmatprep.subr.mxu0 0.0
    %223 = vmatpush1.msra.mxu0 %v199
    %224 = vmatprep.subr.mxu0 0.0
    %225 = vmatpush1.msra.mxu0 %v200
    %226 = vmatprep.subr.mxu0 0.0
    %227 = vmatpush1.msra.mxu0 %v201
    %228 = vmatprep.subr.mxu0 0.0
    %229 = vmatpush1.msra.mxu0 %v202
    %230 = vmatprep.subr.mxu0 0.0
    %231 = vmatpush1.msra.mxu0 %v203
    %232 = vmatprep.subr.mxu0 0.0
    %233 = vmatpush1.msra.mxu0 %v204
    %234 = vmatprep.subr.mxu0 0.0
    %235 = vmatpush1.msra.mxu0 %v205
    %236 = vmatprep.subr.mxu0 0.0
    %237 = vmatpush1.msra.mxu0 %v206
    %238 = vmatprep.subr.mxu0 0.0
    %239 = vmatpush1.msra.mxu0 %v207
    %240 = vmatprep.subr.mxu0 0.0
    %241 = vmatpush1.msra.mxu0 %v208
    %242 = vmatprep.subr.mxu0 0.0
    %243 = vmatpush1.msra.mxu0 %v209
    %244 = vmatprep.subr.mxu0 0.0
    %245 = vmatpush1.msra.mxu0 %v210
    %246 = vmatprep.subr.mxu0 0.0
    %247 = vmatpush1.msra.mxu0 %v211
    %248 = vmatprep.subr.mxu0 0.0
    %249 = vmatpush1.msra.mxu0 %v212
    %250 = vmatprep.subr.mxu0 0.0
    %251 = vmatpush1.msra.mxu0 0.0
    %252 = vmatprep.subr.mxu0 0.0
    %253 = vmatpush1.msra.mxu0 0.0
    %254 = vmatprep.subr.mxu0 0.0
    %255 = vmatpush1.msra.mxu0 0.0
    %256 = vmatprep.subr.mxu0 0.0
    %257 = vmatpush1.msra.mxu0 0.0
    %258 = vmatprep.subr.mxu0 0.0
    %259 = vmatpush1.msra.mxu0 0.0
    %260 = vmatprep.subr.mxu0 0.0
    %261 = vmatpush1.msra.mxu0 0.0
    %262 = vmatprep.subr.mxu0 0.0
    %263 = vmatpush1.msra.mxu0 0.0
    %264 = vmatprep.subr.mxu0 0.0
    %265 = vmatpush1.msra.mxu0 0.0
    %266 = vmatprep.subr.mxu0 0.0
    %267 = vmatpush1.msra.mxu0 0.0
    %268 = vmatprep.subr.mxu0 0.0
    %269 = vmatpush1.msra.mxu0 0.0
    %270 = vmatprep.subr.mxu0 0.0
    %271 = vmatpush1.msra.mxu0 0.0
    %272 = vmatprep.subr.mxu0 0.0
    %273 = vmatpush1.msra.mxu0 0.0
    %274 = vmatprep.subr.mxu0 0.0
    %275 = vmatpush1.msra.mxu0 0.0
    %276 = vmatprep.subr.mxu0 0.0
    %277 = vmatpush1.msra.mxu0 0.0
    %278 = vmatprep.subr.mxu0 0.0
    %279 = vmatpush1.msra.mxu0 0.0
    %280 = vmatprep.subr.mxu0 0.0
    %281 = vmatpush1.msra.mxu0 0.0
    %282 = vmatprep.mubr.f32.mxu0 0.0
    %283 = vmatmul.mubr.f32.gmra.mrb[0].mxu0 %v188
    %v284 = vpop.f32.mrb[0].mxu0
    %v285 = vadd.f32 %v217, %v284
    %v286 = vpop.f32.mrb[0].mxu0
    %287 = vmatprep.mubr.f32.mxu0 0.0
    %288 = vmatmul.mubr.f32.gmra.mrb[0].mxu0 %v189
    %v289 = vpop.f32.mrb[0].mxu0
    %v290 = vadd.f32 %v217, %v289
    %v291 = vpop.f32.mrb[0].mxu0
    %292 = vmatprep.mubr.f32.mxu0 0.0
    %293 = vmatmul.mubr.f32.gmra.mrb[0].mxu0 %v190
    %v294 = vpop.f32.mrb[0].mxu0
    %v295 = vadd.f32 %v217, %v294
    %v296 = vpop.f32.mrb[0].mxu0
    %297 = vmatprep.mubr.f32.mxu0 0.0
    %298 = vmatmul.mubr.f32.gmra.mrb[0].mxu0 %v191
    %v299 = vpop.f32.mrb[0].mxu0
    %v300 = vadd.f32 %v217, %v299
    %v301 = vpop.f32.mrb[0].mxu0
    %302 = vmatprep.mubr.f32.mxu0 0.0
    %303 = vmatmul.mubr.f32.gmra.mrb[0].mxu0 %v192
    %v304 = vpop.f32.mrb[0].mxu0
    %v305 = vadd.f32 %v217, %v304
    %v306 = vpop.f32.mrb[0].mxu0
    %307 = vmatprep.mubr.f32.mxu0 0.0
    %308 = vmatmul.mubr.f32.gmra.mrb[0].mxu0 %v193
    %v309 = vpop.f32.mrb[0].mxu0
    %v310 = vadd.f32 %v217, %v309
    %v311 = vpop.f32.mrb[0].mxu0
    %312 = vmatprep.mubr.f32.mxu0 0.0
    %313 = vmatmul.mubr.f32.gmra.mrb[0].mxu0 %v194
    %v314 = vpop.f32.mrb[0].mxu0
    %v315 = vadd.f32 %v217, %v314
    %v316 = vpop.f32.mrb[0].mxu0
    %317 = vmatprep.mubr.f32.mxu0 0.0
    %318 = vmatmul.mubr.f32.gmra.mrb[0].mxu0 %v195
    %v319 = vpop.f32.mrb[0].mxu0
    %v320 = vadd.f32 %v217, %v319
    %v321 = vpop.f32.mrb[0].mxu0
    %322 = vdwg.mxu0
    %v323 = vmax.f32 %v285, 0.0
    %v324 = vmax.f32 %v290, 0.0
    %v325 = vmax.f32 %v295, 0.0
    %v326 = vmax.f32 %v300, 0.0
    %v327 = vmax.f32 %v305, 0.0
    %v328 = vmax.f32 %v310, 0.0
    %v329 = vmax.f32 %v315, 0.0
    %v330 = vmax.f32 %v320, 0.0
    %s331 = scalar_lea.vmem [#allocation5], 256
    %v332 = vld [vmem:[%s331] sm:$0xff]
    %v333 = vld [vmem:[%s331 + $0x8] sm:$0xff]
    %v334 = vld [vmem:[%s331 + $0x10] sm:$0xff]
    %v335 = vld [vmem:[%s331 + $0x18] sm:$0xff]
    %v336 = vld [vmem:[%s331 + $0x20] sm:$0xff]
    %v337 = vld [vmem:[%s331 + $0x28] sm:$0xff]
    %v338 = vld [vmem:[%s331 + $0x30] sm:$0xff]
    %v339 = vld [vmem:[%s331 + $0x38] sm:$0xff]
    %v340 = vld [vmem:[%s331 + $0x40] sm:$0xff]
    %v341 = vld [vmem:[%s331 + $0x48] sm:$0xff]
    %v342 = vld [vmem:[%s331 + $0x50] sm:$0xff]
    %v343 = vld [vmem:[%s331 + $0x58] sm:$0xff]
    %v344 = vld [vmem:[%s331 + $0x60] sm:$0xff]
    %v345 = vld [vmem:[%s331 + $0x68] sm:$0xff]
    %v346 = vld [vmem:[%s331 + $0x70] sm:$0xff]
    %v347 = vld [vmem:[%s331 + $0x78] sm:$0xff]
    %v348 = vld [vmem:[#allocation7 + $0x2] sm:$0x1]
    %v349 = vlaneseq
    %v350 = vshrl.u32 %v349, 7
    %v351 = vsub.s32 0, %v350
    %v352 = vrot.slane %v348, %v351
    %353 = vmatprep.subr.mxu0 0.0
    %354 = vmatpush1.msra.mxu0 %v332
    %355 = vmatprep.subr.mxu0 0.0
    %356 = vmatpush1.msra.mxu0 %v333
    %357 = vmatprep.subr.mxu0 0.0
    %358 = vmatpush1.msra.mxu0 %v334
    %359 = vmatprep.subr.mxu0 0.0
    %360 = vmatpush1.msra.mxu0 %v335
    %361 = vmatprep.subr.mxu0 0.0
    %362 = vmatpush1.msra.mxu0 %v336
    %363 = vmatprep.subr.mxu0 0.0
    %364 = vmatpush1.msra.mxu0 %v337
    %365 = vmatprep.subr.mxu0 0.0
    %366 = vmatpush1.msra.mxu0 %v338
    %367 = vmatprep.subr.mxu0 0.0
    %368 = vmatpush1.msra.mxu0 %v339
    %369 = vmatprep.subr.mxu0 0.0
    %370 = vmatpush1.msra.mxu0 %v340
    %371 = vmatprep.subr.mxu0 0.0
    %372 = vmatpush1.msra.mxu0 %v341
    %373 = vmatprep.subr.mxu0 0.0
    %374 = vmatpush1.msra.mxu0 %v342
    %375 = vmatprep.subr.mxu0 0.0
    %376 = vmatpush1.msra.mxu0 %v343
    %377 = vmatprep.subr.mxu0 0.0
    %378 = vmatpush1.msra.mxu0 %v344
    %379 = vmatprep.subr.mxu0 0.0
    %380 = vmatpush1.msra.mxu0 %v345
    %381 = vmatprep.subr.mxu0 0.0
    %382 = vmatpush1.msra.mxu0 %v346
    %383 = vmatprep.subr.mxu0 0.0
    %384 = vmatpush1.msra.mxu0 %v347
    %385 = vmatprep.subr.mxu0 0.0
    %386 = vmatpush1.msra.mxu0 0.0
    %387 = vmatprep.subr.mxu0 0.0
    %388 = vmatpush1.msra.mxu0 0.0
    %389 = vmatprep.subr.mxu0 0.0
    %390 = vmatpush1.msra.mxu0 0.0
    %391 = vmatprep.subr.mxu0 0.0
    %392 = vmatpush1.msra.mxu0 0.0
    %393 = vmatprep.subr.mxu0 0.0
    %394 = vmatpush1.msra.mxu0 0.0
    %395 = vmatprep.subr.mxu0 0.0
    %396 = vmatpush1.msra.mxu0 0.0
    %397 = vmatprep.subr.mxu0 0.0
    %398 = vmatpush1.msra.mxu0 0.0
    %399 = vmatprep.subr.mxu0 0.0
    %400 = vmatpush1.msra.mxu0 0.0
    %401 = vmatprep.subr.mxu0 0.0
    %402 = vmatpush1.msra.mxu0 0.0
    %403 = vmatprep.subr.mxu0 0.0
    %404 = vmatpush1.msra.mxu0 0.0
    %405 = vmatprep.subr.mxu0 0.0
    %406 = vmatpush1.msra.mxu0 0.0
    %407 = vmatprep.subr.mxu0 0.0
    %408 = vmatpush1.msra.mxu0 0.0
    %409 = vmatprep.subr.mxu0 0.0
    %410 = vmatpush1.msra.mxu0 0.0
    %411 = vmatprep.subr.mxu0 0.0
    %412 = vmatpush1.msra.mxu0 0.0
    %413 = vmatprep.subr.mxu0 0.0
    %414 = vmatpush1.msra.mxu0 0.0
    %415 = vmatprep.subr.mxu0 0.0
    %416 = vmatpush1.msra.mxu0 0.0
    %417 = vmatprep.mubr.f32.mxu0 0.0
    %418 = vmatmul.mubr.f32.gmra.mrb[0].mxu0 %v323
    %v419 = vpop.f32.mrb[0].mxu0
    %v420 = vadd.f32 %v352, %v419
    %v421 = vpop.f32.mrb[0].mxu0
    %422 = vmatprep.mubr.f32.mxu0 0.0
    %423 = vmatmul.mubr.f32.gmra.mrb[0].mxu0 %v324
    %v424 = vpop.f32.mrb[0].mxu0
    %v425 = vadd.f32 %v352, %v424
    %v426 = vpop.f32.mrb[0].mxu0
    %427 = vmatprep.mubr.f32.mxu0 0.0
    %428 = vmatmul.mubr.f32.gmra.mrb[0].mxu0 %v325
    %v429 = vpop.f32.mrb[0].mxu0
    %v430 = vadd.f32 %v352, %v429
    %v431 = vpop.f32.mrb[0].mxu0
    %432 = vmatprep.mubr.f32.mxu0 0.0
    %433 = vmatmul.mubr.f32.gmra.mrb[0].mxu0 %v326
    %v434 = vpop.f32.mrb[0].mxu0
    %v435 = vadd.f32 %v352, %v434
    %v436 = vpop.f32.mrb[0].mxu0
    %437 = vmatprep.mubr.f32.mxu0 0.0
    %438 = vmatmul.mubr.f32.gmra.mrb[0].mxu0 %v327
    %v439 = vpop.f32.mrb[0].mxu0
    %v440 = vadd.f32 %v352, %v439
    %v441 = vpop.f32.mrb[0].mxu0
    %442 = vmatprep.mubr.f32.mxu0 0.0
    %443 = vmatmul.mubr.f32.gmra.mrb[0].mxu0 %v328
    %v444 = vpop.f32.mrb[0].mxu0
    %v445 = vadd.f32 %v352, %v444
    %v446 = vpop.f32.mrb[0].mxu0
    %447 = vmatprep.mubr.f32.mxu0 0.0
    %448 = vmatmul.mubr.f32.gmra.mrb[0].mxu0 %v329
    %v449 = vpop.f32.mrb[0].mxu0
    %v450 = vadd.f32 %v352, %v449
    %v451 = vpop.f32.mrb[0].mxu0
    %452 = vmatprep.mubr.f32.mxu0 0.0
    %453 = vmatmul.mubr.f32.gmra.mrb[0].mxu0 %v330
    %v454 = vpop.f32.mrb[0].mxu0
    %v455 = vadd.f32 %v352, %v454
    %v456 = vpop.f32.mrb[0].mxu0
    %457 = vdwg.mxu0
    %s458 = scalar_lea.vmem [#allocation5], 384
    %v459 = vld [vmem:[%s458] sm:$0xff]
    %v460 = vld [vmem:[%s458 + $0x8] sm:$0xff]
    %v461 = vld [vmem:[%s458 + $0x10] sm:$0xff]
    %v462 = vld [vmem:[%s458 + $0x18] sm:$0xff]
    %v463 = vld [vmem:[%s458 + $0x20] sm:$0xff]
    %v464 = vld [vmem:[%s458 + $0x28] sm:$0xff]
    %v465 = vld [vmem:[%s458 + $0x30] sm:$0xff]
    %v466 = vld [vmem:[%s458 + $0x38] sm:$0xff]
    %v467 = vld [vmem:[%s458 + $0x40] sm:$0xff]
    %v468 = vld [vmem:[%s458 + $0x48] sm:$0xff]
    %v469 = vld [vmem:[%s458 + $0x50] sm:$0xff]
    %v470 = vld [vmem:[%s458 + $0x58] sm:$0xff]
    %v471 = vld [vmem:[%s458 + $0x60] sm:$0xff]
    %v472 = vld [vmem:[%s458 + $0x68] sm:$0xff]
    %v473 = vld [vmem:[%s458 + $0x70] sm:$0xff]
    %v474 = vld [vmem:[%s458 + $0x78] sm:$0xff]
    %475 = vmatprep.subr.mxu0 0.0
    %476 = vmatpush1.msra.mxu0 %v459
    %477 = vmatprep.subr.mxu0 0.0
    %478 = vmatpush1.msra.mxu0 %v460
    %479 = vmatprep.subr.mxu0 0.0
    %480 = vmatpush1.msra.mxu0 %v461
    %481 = vmatprep.subr.mxu0 0.0
    %482 = vmatpush1.msra.mxu0 %v462
    %483 = vmatprep.subr.mxu0 0.0
    %484 = vmatpush1.msra.mxu0 %v463
    %485 = vmatprep.subr.mxu0 0.0
    %486 = vmatpush1.msra.mxu0 %v464
    %487 = vmatprep.subr.mxu0 0.0
    %488 = vmatpush1.msra.mxu0 %v465
    %489 = vmatprep.subr.mxu0 0.0
    %490 = vmatpush1.msra.mxu0 %v466
    %491 = vmatprep.subr.mxu0 0.0
    %492 = vmatpush1.msra.mxu0 %v467
    %493 = vmatprep.subr.mxu0 0.0
    %494 = vmatpush1.msra.mxu0 %v468
    %495 = vmatprep.subr.mxu0 0.0
    %496 = vmatpush1.msra.mxu0 %v469
    %497 = vmatprep.subr.mxu0 0.0
    %498 = vmatpush1.msra.mxu0 %v470
    %499 = vmatprep.subr.mxu0 0.0
    %500 = vmatpush1.msra.mxu0 %v471
    %501 = vmatprep.subr.mxu0 0.0
    %502 = vmatpush1.msra.mxu0 %v472
    %503 = vmatprep.subr.mxu0 0.0
    %504 = vmatpush1.msra.mxu0 %v473
    %505 = vmatprep.subr.mxu0 0.0
    %506 = vmatpush1.msra.mxu0 %v474
    %507 = vmatprep.subr.mxu0 0.0
    %508 = vmatpush1.msra.mxu0 0.0
    %509 = vmatprep.subr.mxu0 0.0
    %510 = vmatpush1.msra.mxu0 0.0
    %511 = vmatprep.subr.mxu0 0.0
    %512 = vmatpush1.msra.mxu0 0.0
    %513 = vmatprep.subr.mxu0 0.0
    %514 = vmatpush1.msra.mxu0 0.0
    %515 = vmatprep.subr.mxu0 0.0
    %516 = vmatpush1.msra.mxu0 0.0
    %517 = vmatprep.subr.mxu0 0.0
    %518 = vmatpush1.msra.mxu0 0.0
    %519 = vmatprep.subr.mxu0 0.0
    %520 = vmatpush1.msra.mxu0 0.0
    %521 = vmatprep.subr.mxu0 0.0
    %522 = vmatpush1.msra.mxu0 0.0
    %523 = vmatprep.subr.mxu0 0.0
    %524 = vmatpush1.msra.mxu0 0.0
    %525 = vmatprep.subr.mxu0 0.0
    %526 = vmatpush1.msra.mxu0 0.0
    %527 = vmatprep.subr.mxu0 0.0
    %528 = vmatpush1.msra.mxu0 0.0
    %529 = vmatprep.subr.mxu0 0.0
    %530 = vmatpush1.msra.mxu0 0.0
    %531 = vmatprep.subr.mxu0 0.0
    %532 = vmatpush1.msra.mxu0 0.0
    %533 = vmatprep.subr.mxu0 0.0
    %534 = vmatpush1.msra.mxu0 0.0
    %535 = vmatprep.subr.mxu0 0.0
    %536 = vmatpush1.msra.mxu0 0.0
    %537 = vmatprep.subr.mxu0 0.0
    %538 = vmatpush1.msra.mxu0 0.0
    %539 = vmatprep.mubr.f32.mxu0 0.0
    %540 = vmatmul.mubr.f32.gmra.mrb[0].mxu0 %v420
    %v541 = vpop.f32.mrb[0].mxu0
    %v542 = vadd.f32 0.0, %v541
    %v543 = vpop.f32.mrb[0].mxu0
    %544 = vmatprep.mubr.f32.mxu0 0.0
    %545 = vmatmul.mubr.f32.gmra.mrb[0].mxu0 %v425
    %v546 = vpop.f32.mrb[0].mxu0
    %v547 = vadd.f32 0.0, %v546
    %v548 = vpop.f32.mrb[0].mxu0
    %549 = vmatprep.mubr.f32.mxu0 0.0
    %550 = vmatmul.mubr.f32.gmra.mrb[0].mxu0 %v430
    %v551 = vpop.f32.mrb[0].mxu0
    %v552 = vadd.f32 0.0, %v551
    %v553 = vpop.f32.mrb[0].mxu0
    %554 = vmatprep.mubr.f32.mxu0 0.0
    %555 = vmatmul.mubr.f32.gmra.mrb[0].mxu0 %v435
    %v556 = vpop.f32.mrb[0].mxu0
    %v557 = vadd.f32 0.0, %v556
    %v558 = vpop.f32.mrb[0].mxu0
    %559 = vmatprep.mubr.f32.mxu0 0.0
    %560 = vmatmul.mubr.f32.gmra.mrb[0].mxu0 %v440
    %v561 = vpop.f32.mrb[0].mxu0
    %v562 = vadd.f32 0.0, %v561
    %v563 = vpop.f32.mrb[0].mxu0
    %564 = vmatprep.mubr.f32.mxu0 0.0
    %565 = vmatmul.mubr.f32.gmra.mrb[0].mxu0 %v445
    %v566 = vpop.f32.mrb[0].mxu0
    %v567 = vadd.f32 0.0, %v566
    %v568 = vpop.f32.mrb[0].mxu0
    %569 = vmatprep.mubr.f32.mxu0 0.0
    %570 = vmatmul.mubr.f32.gmra.mrb[0].mxu0 %v450
    %v571 = vpop.f32.mrb[0].mxu0
    %v572 = vadd.f32 0.0, %v571
    %v573 = vpop.f32.mrb[0].mxu0
    %574 = vmatprep.mubr.f32.mxu0 0.0
    %575 = vmatmul.mubr.f32.gmra.mrb[0].mxu0 %v455
    %v576 = vpop.f32.mrb[0].mxu0
    %v577 = vadd.f32 0.0, %v576
    %v578 = vpop.f32.mrb[0].mxu0
    %579 = vdwg.mxu0
    %s580 = scalar_lea.vmem [#allocation5], 512
    %v581 = vld [vmem:[%s580] sm:$0xff]
    %v582 = vld [vmem:[%s580 + $0x8] sm:$0xff]
    %v583 = vld [vmem:[%s580 + $0x10] sm:$0xff]
    %v584 = vld [vmem:[%s580 + $0x18] sm:$0xff]
    %v585 = vld [vmem:[%s580 + $0x20] sm:$0xff]
    %v586 = vld [vmem:[%s580 + $0x28] sm:$0xff]
    %v587 = vld [vmem:[%s580 + $0x30] sm:$0xff]
    %v588 = vld [vmem:[%s580 + $0x38] sm:$0xff]
    %v589 = vld [vmem:[%s580 + $0x40] sm:$0xff]
    %v590 = vld [vmem:[%s580 + $0x48] sm:$0xff]
    %v591 = vld [vmem:[%s580 + $0x50] sm:$0xff]
    %v592 = vld [vmem:[%s580 + $0x58] sm:$0xff]
    %v593 = vld [vmem:[%s580 + $0x60] sm:$0xff]
    %v594 = vld [vmem:[%s580 + $0x68] sm:$0xff]
    %v595 = vld [vmem:[%s580 + $0x70] sm:$0xff]
    %v596 = vld [vmem:[%s580 + $0x78] sm:$0xff]
    %597 = vmatprep.subr.mxu0 0.0
    %598 = vmatpush1.msra.mxu0 %v581
    %599 = vmatprep.subr.mxu0 0.0
    %600 = vmatpush1.msra.mxu0 %v582
    %601 = vmatprep.subr.mxu0 0.0
    %602 = vmatpush1.msra.mxu0 %v583
    %603 = vmatprep.subr.mxu0 0.0
    %604 = vmatpush1.msra.mxu0 %v584
    %605 = vmatprep.subr.mxu0 0.0
    %606 = vmatpush1.msra.mxu0 %v585
    %607 = vmatprep.subr.mxu0 0.0
    %608 = vmatpush1.msra.mxu0 %v586
    %609 = vmatprep.subr.mxu0 0.0
    %610 = vmatpush1.msra.mxu0 %v587
    %611 = vmatprep.subr.mxu0 0.0
    %612 = vmatpush1.msra.mxu0 %v588
    %613 = vmatprep.subr.mxu0 0.0
    %614 = vmatpush1.msra.mxu0 %v589
    %615 = vmatprep.subr.mxu0 0.0
    %616 = vmatpush1.msra.mxu0 %v590
    %617 = vmatprep.subr.mxu0 0.0
    %618 = vmatpush1.msra.mxu0 %v591
    %619 = vmatprep.subr.mxu0 0.0
    %620 = vmatpush1.msra.mxu0 %v592
    %621 = vmatprep.subr.mxu0 0.0
    %622 = vmatpush1.msra.mxu0 %v593
    %623 = vmatprep.subr.mxu0 0.0
    %624 = vmatpush1.msra.mxu0 %v594
    %625 = vmatprep.subr.mxu0 0.0
    %626 = vmatpush1.msra.mxu0 %v595
    %627 = vmatprep.subr.mxu0 0.0
    %628 = vmatpush1.msra.mxu0 %v596
    %629 = vmatprep.subr.mxu0 0.0
    %630 = vmatpush1.msra.mxu0 0.0
    %631 = vmatprep.subr.mxu0 0.0
    %632 = vmatpush1.msra.mxu0 0.0
    %633 = vmatprep.subr.mxu0 0.0
    %634 = vmatpush1.msra.mxu0 0.0
    %635 = vmatprep.subr.mxu0 0.0
    %636 = vmatpush1.msra.mxu0 0.0
    %637 = vmatprep.subr.mxu0 0.0
    %638 = vmatpush1.msra.mxu0 0.0
    %639 = vmatprep.subr.mxu0 0.0
    %640 = vmatpush1.msra.mxu0 0.0
    %641 = vmatprep.subr.mxu0 0.0
    %642 = vmatpush1.msra.mxu0 0.0
    %643 = vmatprep.subr.mxu0 0.0
    %644 = vmatpush1.msra.mxu0 0.0
    %645 = vmatprep.subr.mxu0 0.0
    %646 = vmatpush1.msra.mxu0 0.0
    %647 = vmatprep.subr.mxu0 0.0
    %648 = vmatpush1.msra.mxu0 0.0
    %649 = vmatprep.subr.mxu0 0.0
    %650 = vmatpush1.msra.mxu0 0.0
    %651 = vmatprep.subr.mxu0 0.0
    %652 = vmatpush1.msra.mxu0 0.0
    %653 = vmatprep.subr.mxu0 0.0
    %654 = vmatpush1.msra.mxu0 0.0
    %655 = vmatprep.subr.mxu0 0.0
    %656 = vmatpush1.msra.mxu0 0.0
    %657 = vmatprep.subr.mxu0 0.0
    %658 = vmatpush1.msra.mxu0 0.0
    %659 = vmatprep.subr.mxu0 0.0
    %660 = vmatpush1.msra.mxu0 0.0
    %661 = vmatprep.mubr.f32.mxu0 0.0
    %662 = vmatmul.mubr.f32.gmra.mrb[0].mxu0 %v420
    %v663 = vpop.f32.mrb[0].mxu0
    %v664 = vadd.f32 0.0, %v663
    %v665 = vpop.f32.mrb[0].mxu0
    %666 = vmatprep.mubr.f32.mxu0 0.0
    %667 = vmatmul.mubr.f32.gmra.mrb[0].mxu0 %v425
    %v668 = vpop.f32.mrb[0].mxu0
    %v669 = vadd.f32 0.0, %v668
    %v670 = vpop.f32.mrb[0].mxu0
    %671 = vmatprep.mubr.f32.mxu0 0.0
    %672 = vmatmul.mubr.f32.gmra.mrb[0].mxu0 %v430
    %v673 = vpop.f32.mrb[0].mxu0
    %v674 = vadd.f32 0.0, %v673
    %v675 = vpop.f32.mrb[0].mxu0
    %676 = vmatprep.mubr.f32.mxu0 0.0
    %677 = vmatmul.mubr.f32.gmra.mrb[0].mxu0 %v435
    %v678 = vpop.f32.mrb[0].mxu0
    %v679 = vadd.f32 0.0, %v678
    %v680 = vpop.f32.mrb[0].mxu0
    %681 = vmatprep.mubr.f32.mxu0 0.0
    %682 = vmatmul.mubr.f32.gmra.mrb[0].mxu0 %v440
    %v683 = vpop.f32.mrb[0].mxu0
    %v684 = vadd.f32 0.0, %v683
    %v685 = vpop.f32.mrb[0].mxu0
    %686 = vmatprep.mubr.f32.mxu0 0.0
    %687 = vmatmul.mubr.f32.gmra.mrb[0].mxu0 %v445
    %v688 = vpop.f32.mrb[0].mxu0
    %v689 = vadd.f32 0.0, %v688
    %v690 = vpop.f32.mrb[0].mxu0
    %691 = vmatprep.mubr.f32.mxu0 0.0
    %692 = vmatmul.mubr.f32.gmra.mrb[0].mxu0 %v450
    %v693 = vpop.f32.mrb[0].mxu0
    %v694 = vadd.f32 0.0, %v693
    %v695 = vpop.f32.mrb[0].mxu0
    %696 = vmatprep.mubr.f32.mxu0 0.0
    %697 = vmatmul.mubr.f32.gmra.mrb[0].mxu0 %v455
    %v698 = vpop.f32.mrb[0].mxu0
    %v699 = vadd.f32 0.0, %v698
    %v700 = vpop.f32.mrb[0].mxu0
    %701 = vdwg.mxu0
    %v710 = vcombine.high %v542, %v542
    %v712 = vunpack.c.l.s4 1966171168
    %v713 = vunpack.c.0.s8 %v712
    %v714 = vlaneseq
    %v715 = vshrl.u32 %v714, 7
    %v716 = vsub.s32 %v713, %v715
    %v717 = vrot.slane %v542, %v716
    %v719 = vunpack.c.l.s4 1966171168
    %v720 = vunpack.c.0.s8 %v719
    %v721 = vlaneseq
    %v722 = vshrl.u32 %v721, 7
    %v723 = vsub.s32 %v720, %v722
    %v724 = vrot.slane %v710, %v723
    %v725 = vcombine.high %v717, %v717
    %v726 = vcombine.high %v724, %v724
    %v728 = vunpack.c.l.s4 1966171168
    %v729 = vunpack.c.0.s8 %v728
    %v730 = vlaneseq
    %v731 = vshrl.u32 %v730, 7
    %v732 = vsub.s32 %v729, %v731
    %v733 = vrot.slane %v717, %v732
    %v735 = vunpack.c.l.s4 1966171168
    %v736 = vunpack.c.0.s8 %v735
    %v737 = vlaneseq
    %v738 = vshrl.u32 %v737, 7
    %v739 = vsub.s32 %v736, %v738
    %v740 = vrot.slane %v724, %v739
    %v742 = vunpack.c.l.s4 1966171168
    %v743 = vunpack.c.0.s8 %v742
    %v744 = vlaneseq
    %v745 = vshrl.u32 %v744, 7
    %v746 = vsub.s32 %v743, %v745
    %v747 = vrot.slane %v725, %v746
    %v749 = vunpack.c.l.s4 1966171168
    %v750 = vunpack.c.0.s8 %v749
    %v751 = vlaneseq
    %v752 = vshrl.u32 %v751, 7
    %v753 = vsub.s32 %v750, %v752
    %v754 = vrot.slane %v726, %v753
    %v755 = vcombine.high %v733, %v733
    %v756 = vcombine.high %v740, %v740
    %v757 = vcombine.high %v747, %v747
    %v758 = vcombine.high %v754, %v754
    %v759 = vcombine.high %v547, %v547
    %v761 = vunpack.c.l.s4 1966171168
    %v762 = vunpack.c.0.s8 %v761
    %v763 = vlaneseq
    %v764 = vshrl.u32 %v763, 7
    %v765 = vsub.s32 %v762, %v764
    %v766 = vrot.slane %v547, %v765
    %v768 = vunpack.c.l.s4 1966171168
    %v769 = vunpack.c.0.s8 %v768
    %v770 = vlaneseq
    %v771 = vshrl.u32 %v770, 7
    %v772 = vsub.s32 %v769, %v771
    %v773 = vrot.slane %v759, %v772
    %v774 = vcombine.high %v766, %v766
    %v775 = vcombine.high %v773, %v773
    %v777 = vunpack.c.l.s4 1966171168
    %v778 = vunpack.c.0.s8 %v777
    %v779 = vlaneseq
    %v780 = vshrl.u32 %v779, 7
    %v781 = vsub.s32 %v778, %v780
    %v782 = vrot.slane %v766, %v781
    %v784 = vunpack.c.l.s4 1966171168
    %v785 = vunpack.c.0.s8 %v784
    %v786 = vlaneseq
    %v787 = vshrl.u32 %v786, 7
    %v788 = vsub.s32 %v785, %v787
    %v789 = vrot.slane %v773, %v788
    %v791 = vunpack.c.l.s4 1966171168
    %v792 = vunpack.c.0.s8 %v791
    %v793 = vlaneseq
    %v794 = vshrl.u32 %v793, 7
    %v795 = vsub.s32 %v792, %v794
    %v796 = vrot.slane %v774, %v795
    %v798 = vunpack.c.l.s4 1966171168
    %v799 = vunpack.c.0.s8 %v798
    %v800 = vlaneseq
    %v801 = vshrl.u32 %v800, 7
    %v802 = vsub.s32 %v799, %v801
    %v803 = vrot.slane %v775, %v802
    %v804 = vcombine.high %v782, %v782
    %v805 = vcombine.high %v789, %v789
    %v806 = vcombine.high %v796, %v796
    %v807 = vcombine.high %v803, %v803
    %v808 = vcombine.high %v552, %v552
    %v810 = vunpack.c.l.s4 1966171168
    %v811 = vunpack.c.0.s8 %v810
    %v812 = vlaneseq
    %v813 = vshrl.u32 %v812, 7
    %v814 = vsub.s32 %v811, %v813
    %v815 = vrot.slane %v552, %v814
    %v817 = vunpack.c.l.s4 1966171168
    %v818 = vunpack.c.0.s8 %v817
    %v819 = vlaneseq
    %v820 = vshrl.u32 %v819, 7
    %v821 = vsub.s32 %v818, %v820
    %v822 = vrot.slane %v808, %v821
    %v823 = vcombine.high %v815, %v815
    %v824 = vcombine.high %v822, %v822
    %v826 = vunpack.c.l.s4 1966171168
    %v827 = vunpack.c.0.s8 %v826
    %v828 = vlaneseq
    %v829 = vshrl.u32 %v828, 7
    %v830 = vsub.s32 %v827, %v829
    %v831 = vrot.slane %v815, %v830
    %v833 = vunpack.c.l.s4 1966171168
    %v834 = vunpack.c.0.s8 %v833
    %v835 = vlaneseq
    %v836 = vshrl.u32 %v835, 7
    %v837 = vsub.s32 %v834, %v836
    %v838 = vrot.slane %v822, %v837
    %v840 = vunpack.c.l.s4 1966171168
    %v841 = vunpack.c.0.s8 %v840
    %v842 = vlaneseq
    %v843 = vshrl.u32 %v842, 7
    %v844 = vsub.s32 %v841, %v843
    %v845 = vrot.slane %v823, %v844
    %v847 = vunpack.c.l.s4 1966171168
    %v848 = vunpack.c.0.s8 %v847
    %v849 = vlaneseq
    %v850 = vshrl.u32 %v849, 7
    %v851 = vsub.s32 %v848, %v850
    %v852 = vrot.slane %v824, %v851
    %v853 = vcombine.high %v831, %v831
    %v854 = vcombine.high %v838, %v838
    %v855 = vcombine.high %v845, %v845
    %v856 = vcombine.high %v852, %v852
    %v857 = vcombine.high %v557, %v557
    %v859 = vunpack.c.l.s4 1966171168
    %v860 = vunpack.c.0.s8 %v859
    %v861 = vlaneseq
    %v862 = vshrl.u32 %v861, 7
    %v863 = vsub.s32 %v860, %v862
    %v864 = vrot.slane %v557, %v863
    %v866 = vunpack.c.l.s4 1966171168
    %v867 = vunpack.c.0.s8 %v866
    %v868 = vlaneseq
    %v869 = vshrl.u32 %v868, 7
    %v870 = vsub.s32 %v867, %v869
    %v871 = vrot.slane %v857, %v870
    %v872 = vcombine.high %v864, %v864
    %v873 = vcombine.high %v871, %v871
    %v875 = vunpack.c.l.s4 1966171168
    %v876 = vunpack.c.0.s8 %v875
    %v877 = vlaneseq
    %v878 = vshrl.u32 %v877, 7
    %v879 = vsub.s32 %v876, %v878
    %v880 = vrot.slane %v864, %v879
    %v882 = vunpack.c.l.s4 1966171168
    %v883 = vunpack.c.0.s8 %v882
    %v884 = vlaneseq
    %v885 = vshrl.u32 %v884, 7
    %v886 = vsub.s32 %v883, %v885
    %v887 = vrot.slane %v871, %v886
    %v889 = vunpack.c.l.s4 1966171168
    %v890 = vunpack.c.0.s8 %v889
    %v891 = vlaneseq
    %v892 = vshrl.u32 %v891, 7
    %v893 = vsub.s32 %v890, %v892
    %v894 = vrot.slane %v872, %v893
    %v896 = vunpack.c.l.s4 1966171168
    %v897 = vunpack.c.0.s8 %v896
    %v898 = vlaneseq
    %v899 = vshrl.u32 %v898, 7
    %v900 = vsub.s32 %v897, %v899
    %v901 = vrot.slane %v873, %v900
    %v902 = vcombine.high %v880, %v880
    %v903 = vcombine.high %v887, %v887
    %v904 = vcombine.high %v894, %v894
    %v905 = vcombine.high %v901, %v901
    %v906 = vcombine.high %v562, %v562
    %v908 = vunpack.c.l.s4 1966171168
    %v909 = vunpack.c.0.s8 %v908
    %v910 = vlaneseq
    %v911 = vshrl.u32 %v910, 7
    %v912 = vsub.s32 %v909, %v911
    %v913 = vrot.slane %v562, %v912
    %v915 = vunpack.c.l.s4 1966171168
    %v916 = vunpack.c.0.s8 %v915
    %v917 = vlaneseq
    %v918 = vshrl.u32 %v917, 7
    %v919 = vsub.s32 %v916, %v918
    %v920 = vrot.slane %v906, %v919
    %v921 = vcombine.high %v913, %v913
    %v922 = vcombine.high %v920, %v920
    %v924 = vunpack.c.l.s4 1966171168
    %v925 = vunpack.c.0.s8 %v924
    %v926 = vlaneseq
    %v927 = vshrl.u32 %v926, 7
    %v928 = vsub.s32 %v925, %v927
    %v929 = vrot.slane %v913, %v928
    %v931 = vunpack.c.l.s4 1966171168
    %v932 = vunpack.c.0.s8 %v931
    %v933 = vlaneseq
    %v934 = vshrl.u32 %v933, 7
    %v935 = vsub.s32 %v932, %v934
    %v936 = vrot.slane %v920, %v935
    %v938 = vunpack.c.l.s4 1966171168
    %v939 = vunpack.c.0.s8 %v938
    %v940 = vlaneseq
    %v941 = vshrl.u32 %v940, 7
    %v942 = vsub.s32 %v939, %v941
    %v943 = vrot.slane %v921, %v942
    %v945 = vunpack.c.l.s4 1966171168
    %v946 = vunpack.c.0.s8 %v945
    %v947 = vlaneseq
    %v948 = vshrl.u32 %v947, 7
    %v949 = vsub.s32 %v946, %v948
    %v950 = vrot.slane %v922, %v949
    %v951 = vcombine.high %v929, %v929
    %v952 = vcombine.high %v936, %v936
    %v953 = vcombine.high %v943, %v943
    %v954 = vcombine.high %v950, %v950
    %v955 = vcombine.high %v567, %v567
    %v957 = vunpack.c.l.s4 1966171168
    %v958 = vunpack.c.0.s8 %v957
    %v959 = vlaneseq
    %v960 = vshrl.u32 %v959, 7
    %v961 = vsub.s32 %v958, %v960
    %v962 = vrot.slane %v567, %v961
    %v964 = vunpack.c.l.s4 1966171168
    %v965 = vunpack.c.0.s8 %v964
    %v966 = vlaneseq
    %v967 = vshrl.u32 %v966, 7
    %v968 = vsub.s32 %v965, %v967
    %v969 = vrot.slane %v955, %v968
    %v970 = vcombine.high %v962, %v962
    %v971 = vcombine.high %v969, %v969
    %v973 = vunpack.c.l.s4 1966171168
    %v974 = vunpack.c.0.s8 %v973
    %v975 = vlaneseq
    %v976 = vshrl.u32 %v975, 7
    %v977 = vsub.s32 %v974, %v976
    %v978 = vrot.slane %v962, %v977
    %v980 = vunpack.c.l.s4 1966171168
    %v981 = vunpack.c.0.s8 %v980
    %v982 = vlaneseq
    %v983 = vshrl.u32 %v982, 7
    %v984 = vsub.s32 %v981, %v983
    %v985 = vrot.slane %v969, %v984
    %v987 = vunpack.c.l.s4 1966171168
    %v988 = vunpack.c.0.s8 %v987
    %v989 = vlaneseq
    %v990 = vshrl.u32 %v989, 7
    %v991 = vsub.s32 %v988, %v990
    %v992 = vrot.slane %v970, %v991
    %v994 = vunpack.c.l.s4 1966171168
    %v995 = vunpack.c.0.s8 %v994
    %v996 = vlaneseq
    %v997 = vshrl.u32 %v996, 7
    %v998 = vsub.s32 %v995, %v997
    %v999 = vrot.slane %v971, %v998
    %v1000 = vcombine.high %v978, %v978
    %v1001 = vcombine.high %v985, %v985
    %v1002 = vcombine.high %v992, %v992
    %v1003 = vcombine.high %v999, %v999
    %v1004 = vcombine.high %v572, %v572
    %v1006 = vunpack.c.l.s4 1966171168
    %v1007 = vunpack.c.0.s8 %v1006
    %v1008 = vlaneseq
    %v1009 = vshrl.u32 %v1008, 7
    %v1010 = vsub.s32 %v1007, %v1009
    %v1011 = vrot.slane %v572, %v1010
    %v1013 = vunpack.c.l.s4 1966171168
    %v1014 = vunpack.c.0.s8 %v1013
    %v1015 = vlaneseq
    %v1016 = vshrl.u32 %v1015, 7
    %v1017 = vsub.s32 %v1014, %v1016
    %v1018 = vrot.slane %v1004, %v1017
    %v1019 = vcombine.high %v1011, %v1011
    %v1020 = vcombine.high %v1018, %v1018
    %v1022 = vunpack.c.l.s4 1966171168
    %v1023 = vunpack.c.0.s8 %v1022
    %v1024 = vlaneseq
    %v1025 = vshrl.u32 %v1024, 7
    %v1026 = vsub.s32 %v1023, %v1025
    %v1027 = vrot.slane %v1011, %v1026
    %v1029 = vunpack.c.l.s4 1966171168
    %v1030 = vunpack.c.0.s8 %v1029
    %v1031 = vlaneseq
    %v1032 = vshrl.u32 %v1031, 7
    %v1033 = vsub.s32 %v1030, %v1032
    %v1034 = vrot.slane %v1018, %v1033
    %v1036 = vunpack.c.l.s4 1966171168
    %v1037 = vunpack.c.0.s8 %v1036
    %v1038 = vlaneseq
    %v1039 = vshrl.u32 %v1038, 7
    %v1040 = vsub.s32 %v1037, %v1039
    %v1041 = vrot.slane %v1019, %v1040
    %v1043 = vunpack.c.l.s4 1966171168
    %v1044 = vunpack.c.0.s8 %v1043
    %v1045 = vlaneseq
    %v1046 = vshrl.u32 %v1045, 7
    %v1047 = vsub.s32 %v1044, %v1046
    %v1048 = vrot.slane %v1020, %v1047
    %v1049 = vcombine.high %v1027, %v1027
    %v1050 = vcombine.high %v1034, %v1034
    %v1051 = vcombine.high %v1041, %v1041
    %v1052 = vcombine.high %v1048, %v1048
    %v1053 = vcombine.high %v577, %v577
    %v1055 = vunpack.c.l.s4 1966171168
    %v1056 = vunpack.c.0.s8 %v1055
    %v1057 = vlaneseq
    %v1058 = vshrl.u32 %v1057, 7
    %v1059 = vsub.s32 %v1056, %v1058
    %v1060 = vrot.slane %v577, %v1059
    %v1062 = vunpack.c.l.s4 1966171168
    %v1063 = vunpack.c.0.s8 %v1062
    %v1064 = vlaneseq
    %v1065 = vshrl.u32 %v1064, 7
    %v1066 = vsub.s32 %v1063, %v1065
    %v1067 = vrot.slane %v1053, %v1066
    %v1068 = vcombine.high %v1060, %v1060
    %v1069 = vcombine.high %v1067, %v1067
    %v1071 = vunpack.c.l.s4 1966171168
    %v1072 = vunpack.c.0.s8 %v1071
    %v1073 = vlaneseq
    %v1074 = vshrl.u32 %v1073, 7
    %v1075 = vsub.s32 %v1072, %v1074
    %v1076 = vrot.slane %v1060, %v1075
    %v1078 = vunpack.c.l.s4 1966171168
    %v1079 = vunpack.c.0.s8 %v1078
    %v1080 = vlaneseq
    %v1081 = vshrl.u32 %v1080, 7
    %v1082 = vsub.s32 %v1079, %v1081
    %v1083 = vrot.slane %v1067, %v1082
    %v1085 = vunpack.c.l.s4 1966171168
    %v1086 = vunpack.c.0.s8 %v1085
    %v1087 = vlaneseq
    %v1088 = vshrl.u32 %v1087, 7
    %v1089 = vsub.s32 %v1086, %v1088
    %v1090 = vrot.slane %v1068, %v1089
    %v1092 = vunpack.c.l.s4 1966171168
    %v1093 = vunpack.c.0.s8 %v1092
    %v1094 = vlaneseq
    %v1095 = vshrl.u32 %v1094, 7
    %v1096 = vsub.s32 %v1093, %v1095
    %v1097 = vrot.slane %v1069, %v1096
    %v1098 = vcombine.high %v1076, %v1076
    %v1099 = vcombine.high %v1083, %v1083
    %v1100 = vcombine.high %v1090, %v1090
    %v1101 = vcombine.high %v1097, %v1097
    %v1102 = vlaneseq
    %v1103 = vshrl.u32 %v1102, 7
    %v1104 = vsub.s32 0, %v1103
    %v1105 = vrot.slane %v733, %v1104
    %v1106 = vlaneseq
    %v1107 = vshrl.u32 %v1106, 7
    %v1108 = vsub.s32 0, %v1107
    %v1109 = vrot.slane %v747, %v1108
    %v1110 = vlaneseq
    %v1111 = vshrl.u32 %v1110, 7
    %v1112 = vsub.s32 0, %v1111
    %v1113 = vrot.slane %v755, %v1112
    %v1114 = vlaneseq
    %v1115 = vshrl.u32 %v1114, 7
    %v1116 = vsub.s32 0, %v1115
    %v1117 = vrot.slane %v757, %v1116
    %v1118 = vlaneseq
    %v1119 = vshrl.u32 %v1118, 7
    %v1120 = vsub.s32 0, %v1119
    %v1121 = vrot.slane %v740, %v1120
    %v1122 = vlaneseq
    %v1123 = vshrl.u32 %v1122, 7
    %v1124 = vsub.s32 0, %v1123
    %v1125 = vrot.slane %v754, %v1124
    %v1126 = vlaneseq
    %v1127 = vshrl.u32 %v1126, 7
    %v1128 = vsub.s32 0, %v1127
    %v1129 = vrot.slane %v756, %v1128
    %v1130 = vlaneseq
    %v1131 = vshrl.u32 %v1130, 7
    %v1132 = vsub.s32 0, %v1131
    %v1133 = vrot.slane %v758, %v1132
    %v1134 = vlaneseq
    %v1135 = vshrl.u32 %v1134, 7
    %v1136 = vsub.s32 0, %v1135
    %v1137 = vrot.slane %v782, %v1136
    %v1138 = vlaneseq
    %v1139 = vshrl.u32 %v1138, 7
    %v1140 = vsub.s32 0, %v1139
    %v1141 = vrot.slane %v796, %v1140
    %v1142 = vlaneseq
    %v1143 = vshrl.u32 %v1142, 7
    %v1144 = vsub.s32 0, %v1143
    %v1145 = vrot.slane %v804, %v1144
    %v1146 = vlaneseq
    %v1147 = vshrl.u32 %v1146, 7
    %v1148 = vsub.s32 0, %v1147
    %v1149 = vrot.slane %v806, %v1148
    %v1150 = vlaneseq
    %v1151 = vshrl.u32 %v1150, 7
    %v1152 = vsub.s32 0, %v1151
    %v1153 = vrot.slane %v789, %v1152
    %v1154 = vlaneseq
    %v1155 = vshrl.u32 %v1154, 7
    %v1156 = vsub.s32 0, %v1155
    %v1157 = vrot.slane %v803, %v1156
    %v1158 = vlaneseq
    %v1159 = vshrl.u32 %v1158, 7
    %v1160 = vsub.s32 0, %v1159
    %v1161 = vrot.slane %v805, %v1160
    %v1162 = vlaneseq
    %v1163 = vshrl.u32 %v1162, 7
    %v1164 = vsub.s32 0, %v1163
    %v1165 = vrot.slane %v807, %v1164
    %v1166 = vlaneseq
    %v1167 = vshrl.u32 %v1166, 7
    %v1168 = vsub.s32 0, %v1167
    %v1169 = vrot.slane %v831, %v1168
    %v1170 = vlaneseq
    %v1171 = vshrl.u32 %v1170, 7
    %v1172 = vsub.s32 0, %v1171
    %v1173 = vrot.slane %v845, %v1172
    %v1174 = vlaneseq
    %v1175 = vshrl.u32 %v1174, 7
    %v1176 = vsub.s32 0, %v1175
    %v1177 = vrot.slane %v853, %v1176
    %v1178 = vlaneseq
    %v1179 = vshrl.u32 %v1178, 7
    %v1180 = vsub.s32 0, %v1179
    %v1181 = vrot.slane %v855, %v1180
    %v1182 = vlaneseq
    %v1183 = vshrl.u32 %v1182, 7
    %v1184 = vsub.s32 0, %v1183
    %v1185 = vrot.slane %v838, %v1184
    %v1186 = vlaneseq
    %v1187 = vshrl.u32 %v1186, 7
    %v1188 = vsub.s32 0, %v1187
    %v1189 = vrot.slane %v852, %v1188
    %v1190 = vlaneseq
    %v1191 = vshrl.u32 %v1190, 7
    %v1192 = vsub.s32 0, %v1191
    %v1193 = vrot.slane %v854, %v1192
    %v1194 = vlaneseq
    %v1195 = vshrl.u32 %v1194, 7
    %v1196 = vsub.s32 0, %v1195
    %v1197 = vrot.slane %v856, %v1196
    %v1198 = vlaneseq
    %v1199 = vshrl.u32 %v1198, 7
    %v1200 = vsub.s32 0, %v1199
    %v1201 = vrot.slane %v880, %v1200
    %v1202 = vlaneseq
    %v1203 = vshrl.u32 %v1202, 7
    %v1204 = vsub.s32 0, %v1203
    %v1205 = vrot.slane %v894, %v1204
    %v1206 = vlaneseq
    %v1207 = vshrl.u32 %v1206, 7
    %v1208 = vsub.s32 0, %v1207
    %v1209 = vrot.slane %v902, %v1208
    %v1210 = vlaneseq
    %v1211 = vshrl.u32 %v1210, 7
    %v1212 = vsub.s32 0, %v1211
    %v1213 = vrot.slane %v904, %v1212
    %v1214 = vlaneseq
    %v1215 = vshrl.u32 %v1214, 7
    %v1216 = vsub.s32 0, %v1215
    %v1217 = vrot.slane %v887, %v1216
    %v1218 = vlaneseq
    %v1219 = vshrl.u32 %v1218, 7
    %v1220 = vsub.s32 0, %v1219
    %v1221 = vrot.slane %v901, %v1220
    %v1222 = vlaneseq
    %v1223 = vshrl.u32 %v1222, 7
    %v1224 = vsub.s32 0, %v1223
    %v1225 = vrot.slane %v903, %v1224
    %v1226 = vlaneseq
    %v1227 = vshrl.u32 %v1226, 7
    %v1228 = vsub.s32 0, %v1227
    %v1229 = vrot.slane %v905, %v1228
    %v1230 = vlaneseq
    %v1231 = vshrl.u32 %v1230, 7
    %v1232 = vsub.s32 0, %v1231
    %v1233 = vrot.slane %v929, %v1232
    %v1234 = vlaneseq
    %v1235 = vshrl.u32 %v1234, 7
    %v1236 = vsub.s32 0, %v1235
    %v1237 = vrot.slane %v943, %v1236
    %v1238 = vlaneseq
    %v1239 = vshrl.u32 %v1238, 7
    %v1240 = vsub.s32 0, %v1239
    %v1241 = vrot.slane %v951, %v1240
    %v1242 = vlaneseq
    %v1243 = vshrl.u32 %v1242, 7
    %v1244 = vsub.s32 0, %v1243
    %v1245 = vrot.slane %v953, %v1244
    %v1246 = vlaneseq
    %v1247 = vshrl.u32 %v1246, 7
    %v1248 = vsub.s32 0, %v1247
    %v1249 = vrot.slane %v936, %v1248
    %v1250 = vlaneseq
    %v1251 = vshrl.u32 %v1250, 7
    %v1252 = vsub.s32 0, %v1251
    %v1253 = vrot.slane %v950, %v1252
    %v1254 = vlaneseq
    %v1255 = vshrl.u32 %v1254, 7
    %v1256 = vsub.s32 0, %v1255
    %v1257 = vrot.slane %v952, %v1256
    %v1258 = vlaneseq
    %v1259 = vshrl.u32 %v1258, 7
    %v1260 = vsub.s32 0, %v1259
    %v1261 = vrot.slane %v954, %v1260
    %v1262 = vlaneseq
    %v1263 = vshrl.u32 %v1262, 7
    %v1264 = vsub.s32 0, %v1263
    %v1265 = vrot.slane %v978, %v1264
    %v1266 = vlaneseq
    %v1267 = vshrl.u32 %v1266, 7
    %v1268 = vsub.s32 0, %v1267
    %v1269 = vrot.slane %v992, %v1268
    %v1270 = vlaneseq
    %v1271 = vshrl.u32 %v1270, 7
    %v1272 = vsub.s32 0, %v1271
    %v1273 = vrot.slane %v1000, %v1272
    %v1274 = vlaneseq
    %v1275 = vshrl.u32 %v1274, 7
    %v1276 = vsub.s32 0, %v1275
    %v1277 = vrot.slane %v1002, %v1276
    %v1278 = vlaneseq
    %v1279 = vshrl.u32 %v1278, 7
    %v1280 = vsub.s32 0, %v1279
    %v1281 = vrot.slane %v985, %v1280
    %v1282 = vlaneseq
    %v1283 = vshrl.u32 %v1282, 7
    %v1284 = vsub.s32 0, %v1283
    %v1285 = vrot.slane %v999, %v1284
    %v1286 = vlaneseq
    %v1287 = vshrl.u32 %v1286, 7
    %v1288 = vsub.s32 0, %v1287
    %v1289 = vrot.slane %v1001, %v1288
    %v1290 = vlaneseq
    %v1291 = vshrl.u32 %v1290, 7
    %v1292 = vsub.s32 0, %v1291
    %v1293 = vrot.slane %v1003, %v1292
    %v1294 = vlaneseq
    %v1295 = vshrl.u32 %v1294, 7
    %v1296 = vsub.s32 0, %v1295
    %v1297 = vrot.slane %v1027, %v1296
    %v1298 = vlaneseq
    %v1299 = vshrl.u32 %v1298, 7
    %v1300 = vsub.s32 0, %v1299
    %v1301 = vrot.slane %v1041, %v1300
    %v1302 = vlaneseq
    %v1303 = vshrl.u32 %v1302, 7
    %v1304 = vsub.s32 0, %v1303
    %v1305 = vrot.slane %v1049, %v1304
    %v1306 = vlaneseq
    %v1307 = vshrl.u32 %v1306, 7
    %v1308 = vsub.s32 0, %v1307
    %v1309 = vrot.slane %v1051, %v1308
    %v1310 = vlaneseq
    %v1311 = vshrl.u32 %v1310, 7
    %v1312 = vsub.s32 0, %v1311
    %v1313 = vrot.slane %v1034, %v1312
    %v1314 = vlaneseq
    %v1315 = vshrl.u32 %v1314, 7
    %v1316 = vsub.s32 0, %v1315
    %v1317 = vrot.slane %v1048, %v1316
    %v1318 = vlaneseq
    %v1319 = vshrl.u32 %v1318, 7
    %v1320 = vsub.s32 0, %v1319
    %v1321 = vrot.slane %v1050, %v1320
    %v1322 = vlaneseq
    %v1323 = vshrl.u32 %v1322, 7
    %v1324 = vsub.s32 0, %v1323
    %v1325 = vrot.slane %v1052, %v1324
    %v1326 = vlaneseq
    %v1327 = vshrl.u32 %v1326, 7
    %v1328 = vsub.s32 0, %v1327
    %v1329 = vrot.slane %v1076, %v1328
    %v1330 = vlaneseq
    %v1331 = vshrl.u32 %v1330, 7
    %v1332 = vsub.s32 0, %v1331
    %v1333 = vrot.slane %v1090, %v1332
    %v1334 = vlaneseq
    %v1335 = vshrl.u32 %v1334, 7
    %v1336 = vsub.s32 0, %v1335
    %v1337 = vrot.slane %v1098, %v1336
    %v1338 = vlaneseq
    %v1339 = vshrl.u32 %v1338, 7
    %v1340 = vsub.s32 0, %v1339
    %v1341 = vrot.slane %v1100, %v1340
    %v1342 = vlaneseq
    %v1343 = vshrl.u32 %v1342, 7
    %v1344 = vsub.s32 0, %v1343
    %v1345 = vrot.slane %v1083, %v1344
    %v1346 = vlaneseq
    %v1347 = vshrl.u32 %v1346, 7
    %v1348 = vsub.s32 0, %v1347
    %v1349 = vrot.slane %v1097, %v1348
    %v1350 = vlaneseq
    %v1351 = vshrl.u32 %v1350, 7
    %v1352 = vsub.s32 0, %v1351
    %v1353 = vrot.slane %v1099, %v1352
    %v1354 = vlaneseq
    %v1355 = vshrl.u32 %v1354, 7
    %v1356 = vsub.s32 0, %v1355
    %v1357 = vrot.slane %v1101, %v1356
    %v1422 = vadd.f32 %v1105, %v664
    %v1423 = vadd.f32 %v1109, %v664
    %v1424 = vadd.f32 %v1113, %v664
    %v1425 = vadd.f32 %v1117, %v664
    %v1426 = vadd.f32 %v1121, %v664
    %v1427 = vadd.f32 %v1125, %v664
    %v1428 = vadd.f32 %v1129, %v664
    %v1429 = vadd.f32 %v1133, %v664
    %v1430 = vadd.f32 %v1137, %v669
    %v1431 = vadd.f32 %v1141, %v669
    %v1432 = vadd.f32 %v1145, %v669
    %v1433 = vadd.f32 %v1149, %v669
    %v1434 = vadd.f32 %v1153, %v669
    %v1435 = vadd.f32 %v1157, %v669
    %v1436 = vadd.f32 %v1161, %v669
    %v1437 = vadd.f32 %v1165, %v669
    %v1438 = vadd.f32 %v1169, %v674
    %v1439 = vadd.f32 %v1173, %v674
    %v1440 = vadd.f32 %v1177, %v674
    %v1441 = vadd.f32 %v1181, %v674
    %v1442 = vadd.f32 %v1185, %v674
    %v1443 = vadd.f32 %v1189, %v674
    %v1444 = vadd.f32 %v1193, %v674
    %v1445 = vadd.f32 %v1197, %v674
    %v1446 = vadd.f32 %v1201, %v679
    %v1447 = vadd.f32 %v1205, %v679
    %v1448 = vadd.f32 %v1209, %v679
    %v1449 = vadd.f32 %v1213, %v679
    %v1450 = vadd.f32 %v1217, %v679
    %v1451 = vadd.f32 %v1221, %v679
    %v1452 = vadd.f32 %v1225, %v679
    %v1453 = vadd.f32 %v1229, %v679
    %v1454 = vadd.f32 %v1233, %v684
    %v1455 = vadd.f32 %v1237, %v684
    %v1456 = vadd.f32 %v1241, %v684
    %v1457 = vadd.f32 %v1245, %v684
    %v1458 = vadd.f32 %v1249, %v684
    %v1459 = vadd.f32 %v1253, %v684
    %v1460 = vadd.f32 %v1257, %v684
    %v1461 = vadd.f32 %v1261, %v684
    %v1462 = vadd.f32 %v1265, %v689
    %v1463 = vadd.f32 %v1269, %v689
    %v1464 = vadd.f32 %v1273, %v689
    %v1465 = vadd.f32 %v1277, %v689
    %v1466 = vadd.f32 %v1281, %v689
    %v1467 = vadd.f32 %v1285, %v689
    %v1468 = vadd.f32 %v1289, %v689
    %v1469 = vadd.f32 %v1293, %v689
    %v1470 = vadd.f32 %v1297, %v694
    %v1471 = vadd.f32 %v1301, %v694
    %v1472 = vadd.f32 %v1305, %v694
    %v1473 = vadd.f32 %v1309, %v694
    %v1474 = vadd.f32 %v1313, %v694
    %v1475 = vadd.f32 %v1317, %v694
    %v1476 = vadd.f32 %v1321, %v694
    %v1477 = vadd.f32 %v1325, %v694
    %v1478 = vadd.f32 %v1329, %v699
    %v1479 = vadd.f32 %v1333, %v699
    %v1480 = vadd.f32 %v1337, %v699
    %v1481 = vadd.f32 %v1341, %v699
    %v1482 = vadd.f32 %v1345, %v699
    %v1483 = vadd.f32 %v1349, %v699
    %v1484 = vadd.f32 %v1353, %v699
    %v1485 = vadd.f32 %v1357, %v699
    %v1486 = vld [vmem:[#allocation7 + $0x3] sm:$0x1]
    %v1487 = vlaneseq
    %v1488 = vshrl.u32 %v1487, 7
    %v1489 = vsub.s32 0, %v1488
    %v1490 = vrot.slane %v1486, %v1489
    %v1491 = vadd.f32 %v1422, %v1490
    %v1492 = vadd.f32 %v1423, %v1490
    %v1493 = vadd.f32 %v1424, %v1490
    %v1494 = vadd.f32 %v1425, %v1490
    %v1495 = vadd.f32 %v1426, %v1490
    %v1496 = vadd.f32 %v1427, %v1490
    %v1497 = vadd.f32 %v1428, %v1490
    %v1498 = vadd.f32 %v1429, %v1490
    %v1499 = vadd.f32 %v1430, %v1490
    %v1500 = vadd.f32 %v1431, %v1490
    %v1501 = vadd.f32 %v1432, %v1490
    %v1502 = vadd.f32 %v1433, %v1490
    %v1503 = vadd.f32 %v1434, %v1490
    %v1504 = vadd.f32 %v1435, %v1490
    %v1505 = vadd.f32 %v1436, %v1490
    %v1506 = vadd.f32 %v1437, %v1490
    %v1507 = vadd.f32 %v1438, %v1490
    %v1508 = vadd.f32 %v1439, %v1490
    %v1509 = vadd.f32 %v1440, %v1490
    %v1510 = vadd.f32 %v1441, %v1490
    %v1511 = vadd.f32 %v1442, %v1490
    %v1512 = vadd.f32 %v1443, %v1490
    %v1513 = vadd.f32 %v1444, %v1490
    %v1514 = vadd.f32 %v1445, %v1490
    %v1515 = vadd.f32 %v1446, %v1490
    %v1516 = vadd.f32 %v1447, %v1490
    %v1517 = vadd.f32 %v1448, %v1490
    %v1518 = vadd.f32 %v1449, %v1490
    %v1519 = vadd.f32 %v1450, %v1490
    %v1520 = vadd.f32 %v1451, %v1490
    %v1521 = vadd.f32 %v1452, %v1490
    %v1522 = vadd.f32 %v1453, %v1490
    %v1523 = vadd.f32 %v1454, %v1490
    %v1524 = vadd.f32 %v1455, %v1490
    %v1525 = vadd.f32 %v1456, %v1490
    %v1526 = vadd.f32 %v1457, %v1490
    %v1527 = vadd.f32 %v1458, %v1490
    %v1528 = vadd.f32 %v1459, %v1490
    %v1529 = vadd.f32 %v1460, %v1490
    %v1530 = vadd.f32 %v1461, %v1490
    %v1531 = vadd.f32 %v1462, %v1490
    %v1532 = vadd.f32 %v1463, %v1490
    %v1533 = vadd.f32 %v1464, %v1490
    %v1534 = vadd.f32 %v1465, %v1490
    %v1535 = vadd.f32 %v1466, %v1490
    %v1536 = vadd.f32 %v1467, %v1490
    %v1537 = vadd.f32 %v1468, %v1490
    %v1538 = vadd.f32 %v1469, %v1490
    %v1539 = vadd.f32 %v1470, %v1490
    %v1540 = vadd.f32 %v1471, %v1490
    %v1541 = vadd.f32 %v1472, %v1490
    %v1542 = vadd.f32 %v1473, %v1490
    %v1543 = vadd.f32 %v1474, %v1490
    %v1544 = vadd.f32 %v1475, %v1490
    %v1545 = vadd.f32 %v1476, %v1490
    %v1546 = vadd.f32 %v1477, %v1490
    %v1547 = vadd.f32 %v1478, %v1490
    %v1548 = vadd.f32 %v1479, %v1490
    %v1549 = vadd.f32 %v1480, %v1490
    %v1550 = vadd.f32 %v1481, %v1490
    %v1551 = vadd.f32 %v1482, %v1490
    %v1552 = vadd.f32 %v1483, %v1490
    %v1553 = vadd.f32 %v1484, %v1490
    %v1554 = vadd.f32 %v1485, %v1490
    %v1555 = vmax.f32 %v1491, 0.0
    %v1556 = vmax.f32 %v1492, 0.0
    %v1557 = vmax.f32 %v1493, 0.0
    %v1558 = vmax.f32 %v1494, 0.0
    %v1559 = vmax.f32 %v1495, 0.0
    %v1560 = vmax.f32 %v1496, 0.0
    %v1561 = vmax.f32 %v1497, 0.0
    %v1562 = vmax.f32 %v1498, 0.0
    %v1563 = vmax.f32 %v1499, 0.0
    %v1564 = vmax.f32 %v1500, 0.0
    %v1565 = vmax.f32 %v1501, 0.0
    %v1566 = vmax.f32 %v1502, 0.0
    %v1567 = vmax.f32 %v1503, 0.0
    %v1568 = vmax.f32 %v1504, 0.0
    %v1569 = vmax.f32 %v1505, 0.0
    %v1570 = vmax.f32 %v1506, 0.0
    %v1571 = vmax.f32 %v1507, 0.0
    %v1572 = vmax.f32 %v1508, 0.0
    %v1573 = vmax.f32 %v1509, 0.0
    %v1574 = vmax.f32 %v1510, 0.0
    %v1575 = vmax.f32 %v1511, 0.0
    %v1576 = vmax.f32 %v1512, 0.0
    %v1577 = vmax.f32 %v1513, 0.0
    %v1578 = vmax.f32 %v1514, 0.0
    %v1579 = vmax.f32 %v1515, 0.0
    %v1580 = vmax.f32 %v1516, 0.0
    %v1581 = vmax.f32 %v1517, 0.0
    %v1582 = vmax.f32 %v1518, 0.0
    %v1583 = vmax.f32 %v1519, 0.0
    %v1584 = vmax.f32 %v1520, 0.0
    %v1585 = vmax.f32 %v1521, 0.0
    %v1586 = vmax.f32 %v1522, 0.0
    %v1587 = vmax.f32 %v1523, 0.0
    %v1588 = vmax.f32 %v1524, 0.0
    %v1589 = vmax.f32 %v1525, 0.0
    %v1590 = vmax.f32 %v1526, 0.0
    %v1591 = vmax.f32 %v1527, 0.0
    %v1592 = vmax.f32 %v1528, 0.0
    %v1593 = vmax.f32 %v1529, 0.0
    %v1594 = vmax.f32 %v1530, 0.0
    %v1595 = vmax.f32 %v1531, 0.0
    %v1596 = vmax.f32 %v1532, 0.0
    %v1597 = vmax.f32 %v1533, 0.0
    %v1598 = vmax.f32 %v1534, 0.0
    %v1599 = vmax.f32 %v1535, 0.0
    %v1600 = vmax.f32 %v1536, 0.0
    %v1601 = vmax.f32 %v1537, 0.0
    %v1602 = vmax.f32 %v1538, 0.0
    %v1603 = vmax.f32 %v1539, 0.0
    %v1604 = vmax.f32 %v1540, 0.0
    %v1605 = vmax.f32 %v1541, 0.0
    %v1606 = vmax.f32 %v1542, 0.0
    %v1607 = vmax.f32 %v1543, 0.0
    %v1608 = vmax.f32 %v1544, 0.0
    %v1609 = vmax.f32 %v1545, 0.0
    %v1610 = vmax.f32 %v1546, 0.0
    %v1611 = vmax.f32 %v1547, 0.0
    %v1612 = vmax.f32 %v1548, 0.0
    %v1613 = vmax.f32 %v1549, 0.0
    %v1614 = vmax.f32 %v1550, 0.0
    %v1615 = vmax.f32 %v1551, 0.0
    %v1616 = vmax.f32 %v1552, 0.0
    %v1617 = vmax.f32 %v1553, 0.0
    %v1618 = vmax.f32 %v1554, 0.0
    %s1619 = scalar_lea.vmem [#allocation5], 640
    %v1620 = vld [vmem:[%s1619] sm:$0xff]
    %v1621 = vld [vmem:[%s1619 + $0x8] sm:$0xff]
    %v1622 = vld [vmem:[%s1619 + $0x10] sm:$0xff]
    %v1623 = vld [vmem:[%s1619 + $0x18] sm:$0xff]
    %v1624 = vld [vmem:[%s1619 + $0x20] sm:$0xff]
    %v1625 = vld [vmem:[%s1619 + $0x28] sm:$0xff]
    %v1626 = vld [vmem:[%s1619 + $0x30] sm:$0xff]
    %v1627 = vld [vmem:[%s1619 + $0x38] sm:$0xff]
    %v1628 = vld [vmem:[%s1619 + $0x40] sm:$0xff]
    %v1629 = vld [vmem:[%s1619 + $0x48] sm:$0xff]
    %v1630 = vld [vmem:[%s1619 + $0x50] sm:$0xff]
    %v1631 = vld [vmem:[%s1619 + $0x58] sm:$0xff]
    %v1632 = vld [vmem:[%s1619 + $0x60] sm:$0xff]
    %v1633 = vld [vmem:[%s1619 + $0x68] sm:$0xff]
    %v1634 = vld [vmem:[%s1619 + $0x70] sm:$0xff]
    %v1635 = vld [vmem:[%s1619 + $0x78] sm:$0xff]
    %v1636 = vld [vmem:[#allocation7 + $0x4] sm:$0x1]
    %v1637 = vlaneseq
    %v1638 = vshrl.u32 %v1637, 7
    %v1639 = vsub.s32 0, %v1638
    %v1640 = vrot.slane %v1636, %v1639
    %1641 = vmatprep.subr.mxu0 0.0
    %1642 = vmatpush1.msra.mxu0 %v1620
    %1643 = vmatprep.subr.mxu0 0.0
    %1644 = vmatpush1.msra.mxu0 %v1621
    %1645 = vmatprep.subr.mxu0 0.0
    %1646 = vmatpush1.msra.mxu0 %v1622
    %1647 = vmatprep.subr.mxu0 0.0
    %1648 = vmatpush1.msra.mxu0 %v1623
    %1649 = vmatprep.subr.mxu0 0.0
    %1650 = vmatpush1.msra.mxu0 %v1624
    %1651 = vmatprep.subr.mxu0 0.0
    %1652 = vmatpush1.msra.mxu0 %v1625
    %1653 = vmatprep.subr.mxu0 0.0
    %1654 = vmatpush1.msra.mxu0 %v1626
    %1655 = vmatprep.subr.mxu0 0.0
    %1656 = vmatpush1.msra.mxu0 %v1627
    %1657 = vmatprep.subr.mxu0 0.0
    %1658 = vmatpush1.msra.mxu0 %v1628
    %1659 = vmatprep.subr.mxu0 0.0
    %1660 = vmatpush1.msra.mxu0 %v1629
    %1661 = vmatprep.subr.mxu0 0.0
    %1662 = vmatpush1.msra.mxu0 %v1630
    %1663 = vmatprep.subr.mxu0 0.0
    %1664 = vmatpush1.msra.mxu0 %v1631
    %1665 = vmatprep.subr.mxu0 0.0
    %1666 = vmatpush1.msra.mxu0 %v1632
    %1667 = vmatprep.subr.mxu0 0.0
    %1668 = vmatpush1.msra.mxu0 %v1633
    %1669 = vmatprep.subr.mxu0 0.0
    %1670 = vmatpush1.msra.mxu0 %v1634
    %1671 = vmatprep.subr.mxu0 0.0
    %1672 = vmatpush1.msra.mxu0 %v1635
    %1673 = vmatprep.subr.mxu0 0.0
    %1674 = vmatpush1.msra.mxu0 0.0
    %1675 = vmatprep.subr.mxu0 0.0
    %1676 = vmatpush1.msra.mxu0 0.0
    %1677 = vmatprep.subr.mxu0 0.0
    %1678 = vmatpush1.msra.mxu0 0.0
    %1679 = vmatprep.subr.mxu0 0.0
    %1680 = vmatpush1.msra.mxu0 0.0
    %1681 = vmatprep.subr.mxu0 0.0
    %1682 = vmatpush1.msra.mxu0 0.0
    %1683 = vmatprep.subr.mxu0 0.0
    %1684 = vmatpush1.msra.mxu0 0.0
    %1685 = vmatprep.subr.mxu0 0.0
    %1686 = vmatpush1.msra.mxu0 0.0
    %1687 = vmatprep.subr.mxu0 0.0
    %1688 = vmatpush1.msra.mxu0 0.0
    %1689 = vmatprep.subr.mxu0 0.0
    %1690 = vmatpush1.msra.mxu0 0.0
    %1691 = vmatprep.subr.mxu0 0.0
    %1692 = vmatpush1.msra.mxu0 0.0
    %1693 = vmatprep.subr.mxu0 0.0
    %1694 = vmatpush1.msra.mxu0 0.0
    %1695 = vmatprep.subr.mxu0 0.0
    %1696 = vmatpush1.msra.mxu0 0.0
    %1697 = vmatprep.subr.mxu0 0.0
    %1698 = vmatpush1.msra.mxu0 0.0
    %1699 = vmatprep.subr.mxu0 0.0
    %1700 = vmatpush1.msra.mxu0 0.0
    %1701 = vmatprep.subr.mxu0 0.0
    %1702 = vmatpush1.msra.mxu0 0.0
    %1703 = vmatprep.subr.mxu0 0.0
    %1704 = vmatpush1.msra.mxu0 0.0
    %1705 = vmatprep.mubr.f32.mxu0 0.0
    %1706 = vmatmul.mubr.f32.gmra.mrb[0].mxu0 %v1555
    %v1707 = vpop.f32.mrb[0].mxu0
    %v1708 = vadd.f32 %v1640, %v1707
    %v1709 = vpop.f32.mrb[0].mxu0
    %1710 = vmatprep.mubr.f32.mxu0 0.0
    %1711 = vmatmul.mubr.f32.gmra.mrb[0].mxu0 %v1556
    %v1712 = vpop.f32.mrb[0].mxu0
    %v1713 = vadd.f32 %v1640, %v1712
    %v1714 = vpop.f32.mrb[0].mxu0
    %1715 = vmatprep.mubr.f32.mxu0 0.0
    %1716 = vmatmul.mubr.f32.gmra.mrb[0].mxu0 %v1557
    %v1717 = vpop.f32.mrb[0].mxu0
    %v1718 = vadd.f32 %v1640, %v1717
    %v1719 = vpop.f32.mrb[0].mxu0
    %1720 = vmatprep.mubr.f32.mxu0 0.0
    %1721 = vmatmul.mubr.f32.gmra.mrb[0].mxu0 %v1558
    %v1722 = vpop.f32.mrb[0].mxu0
    %v1723 = vadd.f32 %v1640, %v1722
    %v1724 = vpop.f32.mrb[0].mxu0
    %1725 = vmatprep.mubr.f32.mxu0 0.0
    %1726 = vmatmul.mubr.f32.gmra.mrb[0].mxu0 %v1559
    %v1727 = vpop.f32.mrb[0].mxu0
    %v1728 = vadd.f32 %v1640, %v1727
    %v1729 = vpop.f32.mrb[0].mxu0
    %1730 = vmatprep.mubr.f32.mxu0 0.0
    %1731 = vmatmul.mubr.f32.gmra.mrb[0].mxu0 %v1560
    %v1732 = vpop.f32.mrb[0].mxu0
    %v1733 = vadd.f32 %v1640, %v1732
    %v1734 = vpop.f32.mrb[0].mxu0
    %1735 = vmatprep.mubr.f32.mxu0 0.0
    %1736 = vmatmul.mubr.f32.gmra.mrb[0].mxu0 %v1561
    %v1737 = vpop.f32.mrb[0].mxu0
    %v1738 = vadd.f32 %v1640, %v1737
    %v1739 = vpop.f32.mrb[0].mxu0
    %1740 = vmatprep.mubr.f32.mxu0 0.0
    %1741 = vmatmul.mubr.f32.gmra.mrb[0].mxu0 %v1562
    %v1742 = vpop.f32.mrb[0].mxu0
    %v1743 = vadd.f32 %v1640, %v1742
    %v1744 = vpop.f32.mrb[0].mxu0
    %1745 = vmatprep.mubr.f32.mxu0 0.0
    %1746 = vmatmul.mubr.f32.gmra.mrb[0].mxu0 %v1563
    %v1747 = vpop.f32.mrb[0].mxu0
    %v1748 = vadd.f32 %v1640, %v1747
    %v1749 = vpop.f32.mrb[0].mxu0
    %1750 = vmatprep.mubr.f32.mxu0 0.0
    %1751 = vmatmul.mubr.f32.gmra.mrb[0].mxu0 %v1564
    %v1752 = vpop.f32.mrb[0].mxu0
    %v1753 = vadd.f32 %v1640, %v1752
    %v1754 = vpop.f32.mrb[0].mxu0
    %1755 = vmatprep.mubr.f32.mxu0 0.0
    %1756 = vmatmul.mubr.f32.gmra.mrb[0].mxu0 %v1565
    %v1757 = vpop.f32.mrb[0].mxu0
    %v1758 = vadd.f32 %v1640, %v1757
    %v1759 = vpop.f32.mrb[0].mxu0
    %1760 = vmatprep.mubr.f32.mxu0 0.0
    %1761 = vmatmul.mubr.f32.gmra.mrb[0].mxu0 %v1566
    %v1762 = vpop.f32.mrb[0].mxu0
    %v1763 = vadd.f32 %v1640, %v1762
    %v1764 = vpop.f32.mrb[0].mxu0
    %1765 = vmatprep.mubr.f32.mxu0 0.0
    %1766 = vmatmul.mubr.f32.gmra.mrb[0].mxu0 %v1567
    %v1767 = vpop.f32.mrb[0].mxu0
    %v1768 = vadd.f32 %v1640, %v1767
    %v1769 = vpop.f32.mrb[0].mxu0
    %1770 = vmatprep.mubr.f32.mxu0 0.0
    %1771 = vmatmul.mubr.f32.gmra.mrb[0].mxu0 %v1568
    %v1772 = vpop.f32.mrb[0].mxu0
    %v1773 = vadd.f32 %v1640, %v1772
    %v1774 = vpop.f32.mrb[0].mxu0
    %1775 = vmatprep.mubr.f32.mxu0 0.0
    %1776 = vmatmul.mubr.f32.gmra.mrb[0].mxu0 %v1569
    %v1777 = vpop.f32.mrb[0].mxu0
    %v1778 = vadd.f32 %v1640, %v1777
    %v1779 = vpop.f32.mrb[0].mxu0
    %1780 = vmatprep.mubr.f32.mxu0 0.0
    %1781 = vmatmul.mubr.f32.gmra.mrb[0].mxu0 %v1570
    %v1782 = vpop.f32.mrb[0].mxu0
    %v1783 = vadd.f32 %v1640, %v1782
    %v1784 = vpop.f32.mrb[0].mxu0
    %1785 = vmatprep.mubr.f32.mxu0 0.0
    %1786 = vmatmul.mubr.f32.gmra.mrb[0].mxu0 %v1571
    %v1787 = vpop.f32.mrb[0].mxu0
    %v1788 = vadd.f32 %v1640, %v1787
    %v1789 = vpop.f32.mrb[0].mxu0
    %1790 = vmatprep.mubr.f32.mxu0 0.0
    %1791 = vmatmul.mubr.f32.gmra.mrb[0].mxu0 %v1572
    %v1792 = vpop.f32.mrb[0].mxu0
    %v1793 = vadd.f32 %v1640, %v1792
    %v1794 = vpop.f32.mrb[0].mxu0
    %1795 = vmatprep.mubr.f32.mxu0 0.0
    %1796 = vmatmul.mubr.f32.gmra.mrb[0].mxu0 %v1573
    %v1797 = vpop.f32.mrb[0].mxu0
    %v1798 = vadd.f32 %v1640, %v1797
    %v1799 = vpop.f32.mrb[0].mxu0
    %1800 = vmatprep.mubr.f32.mxu0 0.0
    %1801 = vmatmul.mubr.f32.gmra.mrb[0].mxu0 %v1574
    %v1802 = vpop.f32.mrb[0].mxu0
    %v1803 = vadd.f32 %v1640, %v1802
    %v1804 = vpop.f32.mrb[0].mxu0
    %1805 = vmatprep.mubr.f32.mxu0 0.0
    %1806 = vmatmul.mubr.f32.gmra.mrb[0].mxu0 %v1575
    %v1807 = vpop.f32.mrb[0].mxu0
    %v1808 = vadd.f32 %v1640, %v1807
    %v1809 = vpop.f32.mrb[0].mxu0
    %1810 = vmatprep.mubr.f32.mxu0 0.0
    %1811 = vmatmul.mubr.f32.gmra.mrb[0].mxu0 %v1576
    %v1812 = vpop.f32.mrb[0].mxu0
    %v1813 = vadd.f32 %v1640, %v1812
    %v1814 = vpop.f32.mrb[0].mxu0
    %1815 = vmatprep.mubr.f32.mxu0 0.0
    %1816 = vmatmul.mubr.f32.gmra.mrb[0].mxu0 %v1577
    %v1817 = vpop.f32.mrb[0].mxu0
    %v1818 = vadd.f32 %v1640, %v1817
    %v1819 = vpop.f32.mrb[0].mxu0
    %1820 = vmatprep.mubr.f32.mxu0 0.0
    %1821 = vmatmul.mubr.f32.gmra.mrb[0].mxu0 %v1578
    %v1822 = vpop.f32.mrb[0].mxu0
    %v1823 = vadd.f32 %v1640, %v1822
    %v1824 = vpop.f32.mrb[0].mxu0
    %1825 = vmatprep.mubr.f32.mxu0 0.0
    %1826 = vmatmul.mubr.f32.gmra.mrb[0].mxu0 %v1579
    %v1827 = vpop.f32.mrb[0].mxu0
    %v1828 = vadd.f32 %v1640, %v1827
    %v1829 = vpop.f32.mrb[0].mxu0
    %1830 = vmatprep.mubr.f32.mxu0 0.0
    %1831 = vmatmul.mubr.f32.gmra.mrb[0].mxu0 %v1580
    %v1832 = vpop.f32.mrb[0].mxu0
    %v1833 = vadd.f32 %v1640, %v1832
    %v1834 = vpop.f32.mrb[0].mxu0
    %1835 = vmatprep.mubr.f32.mxu0 0.0
    %1836 = vmatmul.mubr.f32.gmra.mrb[0].mxu0 %v1581
    %v1837 = vpop.f32.mrb[0].mxu0
    %v1838 = vadd.f32 %v1640, %v1837
    %v1839 = vpop.f32.mrb[0].mxu0
    %1840 = vmatprep.mubr.f32.mxu0 0.0
    %1841 = vmatmul.mubr.f32.gmra.mrb[0].mxu0 %v1582
    %v1842 = vpop.f32.mrb[0].mxu0
    %v1843 = vadd.f32 %v1640, %v1842
    %v1844 = vpop.f32.mrb[0].mxu0
    %1845 = vmatprep.mubr.f32.mxu0 0.0
    %1846 = vmatmul.mubr.f32.gmra.mrb[0].mxu0 %v1583
    %v1847 = vpop.f32.mrb[0].mxu0
    %v1848 = vadd.f32 %v1640, %v1847
    %v1849 = vpop.f32.mrb[0].mxu0
    %1850 = vmatprep.mubr.f32.mxu0 0.0
    %1851 = vmatmul.mubr.f32.gmra.mrb[0].mxu0 %v1584
    %v1852 = vpop.f32.mrb[0].mxu0
    %v1853 = vadd.f32 %v1640, %v1852
    %v1854 = vpop.f32.mrb[0].mxu0
    %1855 = vmatprep.mubr.f32.mxu0 0.0
    %1856 = vmatmul.mubr.f32.gmra.mrb[0].mxu0 %v1585
    %v1857 = vpop.f32.mrb[0].mxu0
    %v1858 = vadd.f32 %v1640, %v1857
    %v1859 = vpop.f32.mrb[0].mxu0
    %1860 = vmatprep.mubr.f32.mxu0 0.0
    %1861 = vmatmul.mubr.f32.gmra.mrb[0].mxu0 %v1586
    %v1862 = vpop.f32.mrb[0].mxu0
    %v1863 = vadd.f32 %v1640, %v1862
    %v1864 = vpop.f32.mrb[0].mxu0
    %1865 = vmatprep.mubr.f32.mxu0 0.0
    %1866 = vmatmul.mubr.f32.gmra.mrb[0].mxu0 %v1587
    %v1867 = vpop.f32.mrb[0].mxu0
    %v1868 = vadd.f32 %v1640, %v1867
    %v1869 = vpop.f32.mrb[0].mxu0
    %1870 = vmatprep.mubr.f32.mxu0 0.0
    %1871 = vmatmul.mubr.f32.gmra.mrb[0].mxu0 %v1588
    %v1872 = vpop.f32.mrb[0].mxu0
    %v1873 = vadd.f32 %v1640, %v1872
    %v1874 = vpop.f32.mrb[0].mxu0
    %1875 = vmatprep.mubr.f32.mxu0 0.0
    %1876 = vmatmul.mubr.f32.gmra.mrb[0].mxu0 %v1589
    %v1877 = vpop.f32.mrb[0].mxu0
    %v1878 = vadd.f32 %v1640, %v1877
    %v1879 = vpop.f32.mrb[0].mxu0
    %1880 = vmatprep.mubr.f32.mxu0 0.0
    %1881 = vmatmul.mubr.f32.gmra.mrb[0].mxu0 %v1590
    %v1882 = vpop.f32.mrb[0].mxu0
    %v1883 = vadd.f32 %v1640, %v1882
    %v1884 = vpop.f32.mrb[0].mxu0
    %1885 = vmatprep.mubr.f32.mxu0 0.0
    %1886 = vmatmul.mubr.f32.gmra.mrb[0].mxu0 %v1591
    %v1887 = vpop.f32.mrb[0].mxu0
    %v1888 = vadd.f32 %v1640, %v1887
    %v1889 = vpop.f32.mrb[0].mxu0
    %1890 = vmatprep.mubr.f32.mxu0 0.0
    %1891 = vmatmul.mubr.f32.gmra.mrb[0].mxu0 %v1592
    %v1892 = vpop.f32.mrb[0].mxu0
    %v1893 = vadd.f32 %v1640, %v1892
    %v1894 = vpop.f32.mrb[0].mxu0
    %1895 = vmatprep.mubr.f32.mxu0 0.0
    %1896 = vmatmul.mubr.f32.gmra.mrb[0].mxu0 %v1593
    %v1897 = vpop.f32.mrb[0].mxu0
    %v1898 = vadd.f32 %v1640, %v1897
    %v1899 = vpop.f32.mrb[0].mxu0
    %1900 = vmatprep.mubr.f32.mxu0 0.0
    %1901 = vmatmul.mubr.f32.gmra.mrb[0].mxu0 %v1594
    %v1902 = vpop.f32.mrb[0].mxu0
    %v1903 = vadd.f32 %v1640, %v1902
    %v1904 = vpop.f32.mrb[0].mxu0
    %1905 = vmatprep.mubr.f32.mxu0 0.0
    %1906 = vmatmul.mubr.f32.gmra.mrb[0].mxu0 %v1595
    %v1907 = vpop.f32.mrb[0].mxu0
    %v1908 = vadd.f32 %v1640, %v1907
    %v1909 = vpop.f32.mrb[0].mxu0
    %1910 = vmatprep.mubr.f32.mxu0 0.0
    %1911 = vmatmul.mubr.f32.gmra.mrb[0].mxu0 %v1596
    %v1912 = vpop.f32.mrb[0].mxu0
    %v1913 = vadd.f32 %v1640, %v1912
    %v1914 = vpop.f32.mrb[0].mxu0
    %1915 = vmatprep.mubr.f32.mxu0 0.0
    %1916 = vmatmul.mubr.f32.gmra.mrb[0].mxu0 %v1597
    %v1917 = vpop.f32.mrb[0].mxu0
    %v1918 = vadd.f32 %v1640, %v1917
    %v1919 = vpop.f32.mrb[0].mxu0
    %1920 = vmatprep.mubr.f32.mxu0 0.0
    %1921 = vmatmul.mubr.f32.gmra.mrb[0].mxu0 %v1598
    %v1922 = vpop.f32.mrb[0].mxu0
    %v1923 = vadd.f32 %v1640, %v1922
    %v1924 = vpop.f32.mrb[0].mxu0
    %1925 = vmatprep.mubr.f32.mxu0 0.0
    %1926 = vmatmul.mubr.f32.gmra.mrb[0].mxu0 %v1599
    %v1927 = vpop.f32.mrb[0].mxu0
    %v1928 = vadd.f32 %v1640, %v1927
    %v1929 = vpop.f32.mrb[0].mxu0
    %1930 = vmatprep.mubr.f32.mxu0 0.0
    %1931 = vmatmul.mubr.f32.gmra.mrb[0].mxu0 %v1600
    %v1932 = vpop.f32.mrb[0].mxu0
    %v1933 = vadd.f32 %v1640, %v1932
    %v1934 = vpop.f32.mrb[0].mxu0
    %1935 = vmatprep.mubr.f32.mxu0 0.0
    %1936 = vmatmul.mubr.f32.gmra.mrb[0].mxu0 %v1601
    %v1937 = vpop.f32.mrb[0].mxu0
    %v1938 = vadd.f32 %v1640, %v1937
    %v1939 = vpop.f32.mrb[0].mxu0
    %1940 = vmatprep.mubr.f32.mxu0 0.0
    %1941 = vmatmul.mubr.f32.gmra.mrb[0].mxu0 %v1602
    %v1942 = vpop.f32.mrb[0].mxu0
    %v1943 = vadd.f32 %v1640, %v1942
    %v1944 = vpop.f32.mrb[0].mxu0
    %1945 = vmatprep.mubr.f32.mxu0 0.0
    %1946 = vmatmul.mubr.f32.gmra.mrb[0].mxu0 %v1603
    %v1947 = vpop.f32.mrb[0].mxu0
    %v1948 = vadd.f32 %v1640, %v1947
    %v1949 = vpop.f32.mrb[0].mxu0
    %1950 = vmatprep.mubr.f32.mxu0 0.0
    %1951 = vmatmul.mubr.f32.gmra.mrb[0].mxu0 %v1604
    %v1952 = vpop.f32.mrb[0].mxu0
    %v1953 = vadd.f32 %v1640, %v1952
    %v1954 = vpop.f32.mrb[0].mxu0
    %1955 = vmatprep.mubr.f32.mxu0 0.0
    %1956 = vmatmul.mubr.f32.gmra.mrb[0].mxu0 %v1605
    %v1957 = vpop.f32.mrb[0].mxu0
    %v1958 = vadd.f32 %v1640, %v1957
    %v1959 = vpop.f32.mrb[0].mxu0
    %1960 = vmatprep.mubr.f32.mxu0 0.0
    %1961 = vmatmul.mubr.f32.gmra.mrb[0].mxu0 %v1606
    %v1962 = vpop.f32.mrb[0].mxu0
    %v1963 = vadd.f32 %v1640, %v1962
    %v1964 = vpop.f32.mrb[0].mxu0
    %1965 = vmatprep.mubr.f32.mxu0 0.0
    %1966 = vmatmul.mubr.f32.gmra.mrb[0].mxu0 %v1607
    %v1967 = vpop.f32.mrb[0].mxu0
    %v1968 = vadd.f32 %v1640, %v1967
    %v1969 = vpop.f32.mrb[0].mxu0
    %1970 = vmatprep.mubr.f32.mxu0 0.0
    %1971 = vmatmul.mubr.f32.gmra.mrb[0].mxu0 %v1608
    %v1972 = vpop.f32.mrb[0].mxu0
    %v1973 = vadd.f32 %v1640, %v1972
    %v1974 = vpop.f32.mrb[0].mxu0
    %1975 = vmatprep.mubr.f32.mxu0 0.0
    %1976 = vmatmul.mubr.f32.gmra.mrb[0].mxu0 %v1609
    %v1977 = vpop.f32.mrb[0].mxu0
    %v1978 = vadd.f32 %v1640, %v1977
    %v1979 = vpop.f32.mrb[0].mxu0
    %1980 = vmatprep.mubr.f32.mxu0 0.0
    %1981 = vmatmul.mubr.f32.gmra.mrb[0].mxu0 %v1610
    %v1982 = vpop.f32.mrb[0].mxu0
    %v1983 = vadd.f32 %v1640, %v1982
    %v1984 = vpop.f32.mrb[0].mxu0
    %1985 = vmatprep.mubr.f32.mxu0 0.0
    %1986 = vmatmul.mubr.f32.gmra.mrb[0].mxu0 %v1611
    %v1987 = vpop.f32.mrb[0].mxu0
    %v1988 = vadd.f32 %v1640, %v1987
    %v1989 = vpop.f32.mrb[0].mxu0
    %1990 = vmatprep.mubr.f32.mxu0 0.0
    %1991 = vmatmul.mubr.f32.gmra.mrb[0].mxu0 %v1612
    %v1992 = vpop.f32.mrb[0].mxu0
    %v1993 = vadd.f32 %v1640, %v1992
    %v1994 = vpop.f32.mrb[0].mxu0
    %1995 = vmatprep.mubr.f32.mxu0 0.0
    %1996 = vmatmul.mubr.f32.gmra.mrb[0].mxu0 %v1613
    %v1997 = vpop.f32.mrb[0].mxu0
    %v1998 = vadd.f32 %v1640, %v1997
    %v1999 = vpop.f32.mrb[0].mxu0
    %2000 = vmatprep.mubr.f32.mxu0 0.0
    %2001 = vmatmul.mubr.f32.gmra.mrb[0].mxu0 %v1614
    %v2002 = vpop.f32.mrb[0].mxu0
    %v2003 = vadd.f32 %v1640, %v2002
    %v2004 = vpop.f32.mrb[0].mxu0
    %2005 = vmatprep.mubr.f32.mxu0 0.0
    %2006 = vmatmul.mubr.f32.gmra.mrb[0].mxu0 %v1615
    %v2007 = vpop.f32.mrb[0].mxu0
    %v2008 = vadd.f32 %v1640, %v2007
    %v2009 = vpop.f32.mrb[0].mxu0
    %2010 = vmatprep.mubr.f32.mxu0 0.0
    %2011 = vmatmul.mubr.f32.gmra.mrb[0].mxu0 %v1616
    %v2012 = vpop.f32.mrb[0].mxu0
    %v2013 = vadd.f32 %v1640, %v2012
    %v2014 = vpop.f32.mrb[0].mxu0
    %2015 = vmatprep.mubr.f32.mxu0 0.0
    %2016 = vmatmul.mubr.f32.gmra.mrb[0].mxu0 %v1617
    %v2017 = vpop.f32.mrb[0].mxu0
    %v2018 = vadd.f32 %v1640, %v2017
    %v2019 = vpop.f32.mrb[0].mxu0
    %2020 = vmatprep.mubr.f32.mxu0 0.0
    %2021 = vmatmul.mubr.f32.gmra.mrb[0].mxu0 %v1618
    %v2022 = vpop.f32.mrb[0].mxu0
    %v2023 = vadd.f32 %v1640, %v2022
    %v2024 = vpop.f32.mrb[0].mxu0
    %2025 = vdwg.mxu0
    %v2026 = vrot.slane %v1708, 4
    %v2027 = vadd.f32 %v1708, %v2026
    %v2028 = vrot.slane %v2027, 2
    %v2029 = vadd.f32 %v2027, %v2028
    %v2030 = vrot.slane %v2029, 1
    %v2031 = vadd.f32 %v2029, %v2030
    %v2032 = vrot.slane %v1713, 4
    %v2033 = vadd.f32 %v1713, %v2032
    %v2034 = vrot.slane %v2033, 2
    %v2035 = vadd.f32 %v2033, %v2034
    %v2036 = vrot.slane %v2035, 1
    %v2037 = vadd.f32 %v2035, %v2036
    %v2038 = vrot.slane %v1718, 4
    %v2039 = vadd.f32 %v1718, %v2038
    %v2040 = vrot.slane %v2039, 2
    %v2041 = vadd.f32 %v2039, %v2040
    %v2042 = vrot.slane %v2041, 1
    %v2043 = vadd.f32 %v2041, %v2042
    %v2044 = vrot.slane %v1723, 4
    %v2045 = vadd.f32 %v1723, %v2044
    %v2046 = vrot.slane %v2045, 2
    %v2047 = vadd.f32 %v2045, %v2046
    %v2048 = vrot.slane %v2047, 1
    %v2049 = vadd.f32 %v2047, %v2048
    %v2050 = vrot.slane %v1728, 4
    %v2051 = vadd.f32 %v1728, %v2050
    %v2052 = vrot.slane %v2051, 2
    %v2053 = vadd.f32 %v2051, %v2052
    %v2054 = vrot.slane %v2053, 1
    %v2055 = vadd.f32 %v2053, %v2054
    %v2056 = vrot.slane %v1733, 4
    %v2057 = vadd.f32 %v1733, %v2056
    %v2058 = vrot.slane %v2057, 2
    %v2059 = vadd.f32 %v2057, %v2058
    %v2060 = vrot.slane %v2059, 1
    %v2061 = vadd.f32 %v2059, %v2060
    %v2062 = vrot.slane %v1738, 4
    %v2063 = vadd.f32 %v1738, %v2062
    %v2064 = vrot.slane %v2063, 2
    %v2065 = vadd.f32 %v2063, %v2064
    %v2066 = vrot.slane %v2065, 1
    %v2067 = vadd.f32 %v2065, %v2066
    %v2068 = vrot.slane %v1743, 4
    %v2069 = vadd.f32 %v1743, %v2068
    %v2070 = vrot.slane %v2069, 2
    %v2071 = vadd.f32 %v2069, %v2070
    %v2072 = vrot.slane %v2071, 1
    %v2073 = vadd.f32 %v2071, %v2072
    %v2074 = vrot.slane %v1748, 4
    %v2075 = vadd.f32 %v1748, %v2074
    %v2076 = vrot.slane %v2075, 2
    %v2077 = vadd.f32 %v2075, %v2076
    %v2078 = vrot.slane %v2077, 1
    %v2079 = vadd.f32 %v2077, %v2078
    %v2080 = vrot.slane %v1753, 4
    %v2081 = vadd.f32 %v1753, %v2080
    %v2082 = vrot.slane %v2081, 2
    %v2083 = vadd.f32 %v2081, %v2082
    %v2084 = vrot.slane %v2083, 1
    %v2085 = vadd.f32 %v2083, %v2084
    %v2086 = vrot.slane %v1758, 4
    %v2087 = vadd.f32 %v1758, %v2086
    %v2088 = vrot.slane %v2087, 2
    %v2089 = vadd.f32 %v2087, %v2088
    %v2090 = vrot.slane %v2089, 1
    %v2091 = vadd.f32 %v2089, %v2090
    %v2092 = vrot.slane %v1763, 4
    %v2093 = vadd.f32 %v1763, %v2092
    %v2094 = vrot.slane %v2093, 2
    %v2095 = vadd.f32 %v2093, %v2094
    %v2096 = vrot.slane %v2095, 1
    %v2097 = vadd.f32 %v2095, %v2096
    %v2098 = vrot.slane %v1768, 4
    %v2099 = vadd.f32 %v1768, %v2098
    %v2100 = vrot.slane %v2099, 2
    %v2101 = vadd.f32 %v2099, %v2100
    %v2102 = vrot.slane %v2101, 1
    %v2103 = vadd.f32 %v2101, %v2102
    %v2104 = vrot.slane %v1773, 4
    %v2105 = vadd.f32 %v1773, %v2104
    %v2106 = vrot.slane %v2105, 2
    %v2107 = vadd.f32 %v2105, %v2106
    %v2108 = vrot.slane %v2107, 1
    %v2109 = vadd.f32 %v2107, %v2108
    %v2110 = vrot.slane %v1778, 4
    %v2111 = vadd.f32 %v1778, %v2110
    %v2112 = vrot.slane %v2111, 2
    %v2113 = vadd.f32 %v2111, %v2112
    %v2114 = vrot.slane %v2113, 1
    %v2115 = vadd.f32 %v2113, %v2114
    %v2116 = vrot.slane %v1783, 4
    %v2117 = vadd.f32 %v1783, %v2116
    %v2118 = vrot.slane %v2117, 2
    %v2119 = vadd.f32 %v2117, %v2118
    %v2120 = vrot.slane %v2119, 1
    %v2121 = vadd.f32 %v2119, %v2120
    %v2122 = vrot.slane %v1788, 4
    %v2123 = vadd.f32 %v1788, %v2122
    %v2124 = vrot.slane %v2123, 2
    %v2125 = vadd.f32 %v2123, %v2124
    %v2126 = vrot.slane %v2125, 1
    %v2127 = vadd.f32 %v2125, %v2126
    %v2128 = vrot.slane %v1793, 4
    %v2129 = vadd.f32 %v1793, %v2128
    %v2130 = vrot.slane %v2129, 2
    %v2131 = vadd.f32 %v2129, %v2130
    %v2132 = vrot.slane %v2131, 1
    %v2133 = vadd.f32 %v2131, %v2132
    %v2134 = vrot.slane %v1798, 4
    %v2135 = vadd.f32 %v1798, %v2134
    %v2136 = vrot.slane %v2135, 2
    %v2137 = vadd.f32 %v2135, %v2136
    %v2138 = vrot.slane %v2137, 1
    %v2139 = vadd.f32 %v2137, %v2138
    %v2140 = vrot.slane %v1803, 4
    %v2141 = vadd.f32 %v1803, %v2140
    %v2142 = vrot.slane %v2141, 2
    %v2143 = vadd.f32 %v2141, %v2142
    %v2144 = vrot.slane %v2143, 1
    %v2145 = vadd.f32 %v2143, %v2144
    %v2146 = vrot.slane %v1808, 4
    %v2147 = vadd.f32 %v1808, %v2146
    %v2148 = vrot.slane %v2147, 2
    %v2149 = vadd.f32 %v2147, %v2148
    %v2150 = vrot.slane %v2149, 1
    %v2151 = vadd.f32 %v2149, %v2150
    %v2152 = vrot.slane %v1813, 4
    %v2153 = vadd.f32 %v1813, %v2152
    %v2154 = vrot.slane %v2153, 2
    %v2155 = vadd.f32 %v2153, %v2154
    %v2156 = vrot.slane %v2155, 1
    %v2157 = vadd.f32 %v2155, %v2156
    %v2158 = vrot.slane %v1818, 4
    %v2159 = vadd.f32 %v1818, %v2158
    %v2160 = vrot.slane %v2159, 2
    %v2161 = vadd.f32 %v2159, %v2160
    %v2162 = vrot.slane %v2161, 1
    %v2163 = vadd.f32 %v2161, %v2162
    %v2164 = vrot.slane %v1823, 4
    %v2165 = vadd.f32 %v1823, %v2164
    %v2166 = vrot.slane %v2165, 2
    %v2167 = vadd.f32 %v2165, %v2166
    %v2168 = vrot.slane %v2167, 1
    %v2169 = vadd.f32 %v2167, %v2168
    %v2170 = vrot.slane %v1828, 4
    %v2171 = vadd.f32 %v1828, %v2170
    %v2172 = vrot.slane %v2171, 2
    %v2173 = vadd.f32 %v2171, %v2172
    %v2174 = vrot.slane %v2173, 1
    %v2175 = vadd.f32 %v2173, %v2174
    %v2176 = vrot.slane %v1833, 4
    %v2177 = vadd.f32 %v1833, %v2176
    %v2178 = vrot.slane %v2177, 2
    %v2179 = vadd.f32 %v2177, %v2178
    %v2180 = vrot.slane %v2179, 1
    %v2181 = vadd.f32 %v2179, %v2180
    %v2182 = vrot.slane %v1838, 4
    %v2183 = vadd.f32 %v1838, %v2182
    %v2184 = vrot.slane %v2183, 2
    %v2185 = vadd.f32 %v2183, %v2184
    %v2186 = vrot.slane %v2185, 1
    %v2187 = vadd.f32 %v2185, %v2186
    %v2188 = vrot.slane %v1843, 4
    %v2189 = vadd.f32 %v1843, %v2188
    %v2190 = vrot.slane %v2189, 2
    %v2191 = vadd.f32 %v2189, %v2190
    %v2192 = vrot.slane %v2191, 1
    %v2193 = vadd.f32 %v2191, %v2192
    %v2194 = vrot.slane %v1848, 4
    %v2195 = vadd.f32 %v1848, %v2194
    %v2196 = vrot.slane %v2195, 2
    %v2197 = vadd.f32 %v2195, %v2196
    %v2198 = vrot.slane %v2197, 1
    %v2199 = vadd.f32 %v2197, %v2198
    %v2200 = vrot.slane %v1853, 4
    %v2201 = vadd.f32 %v1853, %v2200
    %v2202 = vrot.slane %v2201, 2
    %v2203 = vadd.f32 %v2201, %v2202
    %v2204 = vrot.slane %v2203, 1
    %v2205 = vadd.f32 %v2203, %v2204
    %v2206 = vrot.slane %v1858, 4
    %v2207 = vadd.f32 %v1858, %v2206
    %v2208 = vrot.slane %v2207, 2
    %v2209 = vadd.f32 %v2207, %v2208
    %v2210 = vrot.slane %v2209, 1
    %v2211 = vadd.f32 %v2209, %v2210
    %v2212 = vrot.slane %v1863, 4
    %v2213 = vadd.f32 %v1863, %v2212
    %v2214 = vrot.slane %v2213, 2
    %v2215 = vadd.f32 %v2213, %v2214
    %v2216 = vrot.slane %v2215, 1
    %v2217 = vadd.f32 %v2215, %v2216
    %v2218 = vrot.slane %v1868, 4
    %v2219 = vadd.f32 %v1868, %v2218
    %v2220 = vrot.slane %v2219, 2
    %v2221 = vadd.f32 %v2219, %v2220
    %v2222 = vrot.slane %v2221, 1
    %v2223 = vadd.f32 %v2221, %v2222
    %v2224 = vrot.slane %v1873, 4
    %v2225 = vadd.f32 %v1873, %v2224
    %v2226 = vrot.slane %v2225, 2
    %v2227 = vadd.f32 %v2225, %v2226
    %v2228 = vrot.slane %v2227, 1
    %v2229 = vadd.f32 %v2227, %v2228
    %v2230 = vrot.slane %v1878, 4
    %v2231 = vadd.f32 %v1878, %v2230
    %v2232 = vrot.slane %v2231, 2
    %v2233 = vadd.f32 %v2231, %v2232
    %v2234 = vrot.slane %v2233, 1
    %v2235 = vadd.f32 %v2233, %v2234
    %v2236 = vrot.slane %v1883, 4
    %v2237 = vadd.f32 %v1883, %v2236
    %v2238 = vrot.slane %v2237, 2
    %v2239 = vadd.f32 %v2237, %v2238
    %v2240 = vrot.slane %v2239, 1
    %v2241 = vadd.f32 %v2239, %v2240
    %v2242 = vrot.slane %v1888, 4
    %v2243 = vadd.f32 %v1888, %v2242
    %v2244 = vrot.slane %v2243, 2
    %v2245 = vadd.f32 %v2243, %v2244
    %v2246 = vrot.slane %v2245, 1
    %v2247 = vadd.f32 %v2245, %v2246
    %v2248 = vrot.slane %v1893, 4
    %v2249 = vadd.f32 %v1893, %v2248
    %v2250 = vrot.slane %v2249, 2
    %v2251 = vadd.f32 %v2249, %v2250
    %v2252 = vrot.slane %v2251, 1
    %v2253 = vadd.f32 %v2251, %v2252
    %v2254 = vrot.slane %v1898, 4
    %v2255 = vadd.f32 %v1898, %v2254
    %v2256 = vrot.slane %v2255, 2
    %v2257 = vadd.f32 %v2255, %v2256
    %v2258 = vrot.slane %v2257, 1
    %v2259 = vadd.f32 %v2257, %v2258
    %v2260 = vrot.slane %v1903, 4
    %v2261 = vadd.f32 %v1903, %v2260
    %v2262 = vrot.slane %v2261, 2
    %v2263 = vadd.f32 %v2261, %v2262
    %v2264 = vrot.slane %v2263, 1
    %v2265 = vadd.f32 %v2263, %v2264
    %v2266 = vrot.slane %v1908, 4
    %v2267 = vadd.f32 %v1908, %v2266
    %v2268 = vrot.slane %v2267, 2
    %v2269 = vadd.f32 %v2267, %v2268
    %v2270 = vrot.slane %v2269, 1
    %v2271 = vadd.f32 %v2269, %v2270
    %v2272 = vrot.slane %v1913, 4
    %v2273 = vadd.f32 %v1913, %v2272
    %v2274 = vrot.slane %v2273, 2
    %v2275 = vadd.f32 %v2273, %v2274
    %v2276 = vrot.slane %v2275, 1
    %v2277 = vadd.f32 %v2275, %v2276
    %v2278 = vrot.slane %v1918, 4
    %v2279 = vadd.f32 %v1918, %v2278
    %v2280 = vrot.slane %v2279, 2
    %v2281 = vadd.f32 %v2279, %v2280
    %v2282 = vrot.slane %v2281, 1
    %v2283 = vadd.f32 %v2281, %v2282
    %v2284 = vrot.slane %v1923, 4
    %v2285 = vadd.f32 %v1923, %v2284
    %v2286 = vrot.slane %v2285, 2
    %v2287 = vadd.f32 %v2285, %v2286
    %v2288 = vrot.slane %v2287, 1
    %v2289 = vadd.f32 %v2287, %v2288
    %v2290 = vrot.slane %v1928, 4
    %v2291 = vadd.f32 %v1928, %v2290
    %v2292 = vrot.slane %v2291, 2
    %v2293 = vadd.f32 %v2291, %v2292
    %v2294 = vrot.slane %v2293, 1
    %v2295 = vadd.f32 %v2293, %v2294
    %v2296 = vrot.slane %v1933, 4
    %v2297 = vadd.f32 %v1933, %v2296
    %v2298 = vrot.slane %v2297, 2
    %v2299 = vadd.f32 %v2297, %v2298
    %v2300 = vrot.slane %v2299, 1
    %v2301 = vadd.f32 %v2299, %v2300
    %v2302 = vrot.slane %v1938, 4
    %v2303 = vadd.f32 %v1938, %v2302
    %v2304 = vrot.slane %v2303, 2
    %v2305 = vadd.f32 %v2303, %v2304
    %v2306 = vrot.slane %v2305, 1
    %v2307 = vadd.f32 %v2305, %v2306
    %v2308 = vrot.slane %v1943, 4
    %v2309 = vadd.f32 %v1943, %v2308
    %v2310 = vrot.slane %v2309, 2
    %v2311 = vadd.f32 %v2309, %v2310
    %v2312 = vrot.slane %v2311, 1
    %v2313 = vadd.f32 %v2311, %v2312
    %v2314 = vrot.slane %v1948, 4
    %v2315 = vadd.f32 %v1948, %v2314
    %v2316 = vrot.slane %v2315, 2
    %v2317 = vadd.f32 %v2315, %v2316
    %v2318 = vrot.slane %v2317, 1
    %v2319 = vadd.f32 %v2317, %v2318
    %v2320 = vrot.slane %v1953, 4
    %v2321 = vadd.f32 %v1953, %v2320
    %v2322 = vrot.slane %v2321, 2
    %v2323 = vadd.f32 %v2321, %v2322
    %v2324 = vrot.slane %v2323, 1
    %v2325 = vadd.f32 %v2323, %v2324
    %v2326 = vrot.slane %v1958, 4
    %v2327 = vadd.f32 %v1958, %v2326
    %v2328 = vrot.slane %v2327, 2
    %v2329 = vadd.f32 %v2327, %v2328
    %v2330 = vrot.slane %v2329, 1
    %v2331 = vadd.f32 %v2329, %v2330
    %v2332 = vrot.slane %v1963, 4
    %v2333 = vadd.f32 %v1963, %v2332
    %v2334 = vrot.slane %v2333, 2
    %v2335 = vadd.f32 %v2333, %v2334
    %v2336 = vrot.slane %v2335, 1
    %v2337 = vadd.f32 %v2335, %v2336
    %v2338 = vrot.slane %v1968, 4
    %v2339 = vadd.f32 %v1968, %v2338
    %v2340 = vrot.slane %v2339, 2
    %v2341 = vadd.f32 %v2339, %v2340
    %v2342 = vrot.slane %v2341, 1
    %v2343 = vadd.f32 %v2341, %v2342
    %v2344 = vrot.slane %v1973, 4
    %v2345 = vadd.f32 %v1973, %v2344
    %v2346 = vrot.slane %v2345, 2
    %v2347 = vadd.f32 %v2345, %v2346
    %v2348 = vrot.slane %v2347, 1
    %v2349 = vadd.f32 %v2347, %v2348
    %v2350 = vrot.slane %v1978, 4
    %v2351 = vadd.f32 %v1978, %v2350
    %v2352 = vrot.slane %v2351, 2
    %v2353 = vadd.f32 %v2351, %v2352
    %v2354 = vrot.slane %v2353, 1
    %v2355 = vadd.f32 %v2353, %v2354
    %v2356 = vrot.slane %v1983, 4
    %v2357 = vadd.f32 %v1983, %v2356
    %v2358 = vrot.slane %v2357, 2
    %v2359 = vadd.f32 %v2357, %v2358
    %v2360 = vrot.slane %v2359, 1
    %v2361 = vadd.f32 %v2359, %v2360
    %v2362 = vrot.slane %v1988, 4
    %v2363 = vadd.f32 %v1988, %v2362
    %v2364 = vrot.slane %v2363, 2
    %v2365 = vadd.f32 %v2363, %v2364
    %v2366 = vrot.slane %v2365, 1
    %v2367 = vadd.f32 %v2365, %v2366
    %v2368 = vrot.slane %v1993, 4
    %v2369 = vadd.f32 %v1993, %v2368
    %v2370 = vrot.slane %v2369, 2
    %v2371 = vadd.f32 %v2369, %v2370
    %v2372 = vrot.slane %v2371, 1
    %v2373 = vadd.f32 %v2371, %v2372
    %v2374 = vrot.slane %v1998, 4
    %v2375 = vadd.f32 %v1998, %v2374
    %v2376 = vrot.slane %v2375, 2
    %v2377 = vadd.f32 %v2375, %v2376
    %v2378 = vrot.slane %v2377, 1
    %v2379 = vadd.f32 %v2377, %v2378
    %v2380 = vrot.slane %v2003, 4
    %v2381 = vadd.f32 %v2003, %v2380
    %v2382 = vrot.slane %v2381, 2
    %v2383 = vadd.f32 %v2381, %v2382
    %v2384 = vrot.slane %v2383, 1
    %v2385 = vadd.f32 %v2383, %v2384
    %v2386 = vrot.slane %v2008, 4
    %v2387 = vadd.f32 %v2008, %v2386
    %v2388 = vrot.slane %v2387, 2
    %v2389 = vadd.f32 %v2387, %v2388
    %v2390 = vrot.slane %v2389, 1
    %v2391 = vadd.f32 %v2389, %v2390
    %v2392 = vrot.slane %v2013, 4
    %v2393 = vadd.f32 %v2013, %v2392
    %v2394 = vrot.slane %v2393, 2
    %v2395 = vadd.f32 %v2393, %v2394
    %v2396 = vrot.slane %v2395, 1
    %v2397 = vadd.f32 %v2395, %v2396
    %v2398 = vrot.slane %v2018, 4
    %v2399 = vadd.f32 %v2018, %v2398
    %v2400 = vrot.slane %v2399, 2
    %v2401 = vadd.f32 %v2399, %v2400
    %v2402 = vrot.slane %v2401, 1
    %v2403 = vadd.f32 %v2401, %v2402
    %v2404 = vrot.slane %v2023, 4
    %v2405 = vadd.f32 %v2023, %v2404
    %v2406 = vrot.slane %v2405, 2
    %v2407 = vadd.f32 %v2405, %v2406
    %v2408 = vrot.slane %v2407, 1
    %v2409 = vadd.f32 %v2407, %v2408
    %s2410 = scalar_lea.vmem [#allocation5], 768
    %v2411 = vld [vmem:[%s2410] sm:$0xff]
    %v2412 = vld [vmem:[%s2410 + $0x8] sm:$0xff]
    %v2413 = vld [vmem:[%s2410 + $0x10] sm:$0xff]
    %v2414 = vld [vmem:[%s2410 + $0x18] sm:$0xff]
    %v2415 = vld [vmem:[%s2410 + $0x20] sm:$0xff]
    %v2416 = vld [vmem:[%s2410 + $0x28] sm:$0xff]
    %v2417 = vld [vmem:[%s2410 + $0x30] sm:$0xff]
    %v2418 = vld [vmem:[%s2410 + $0x38] sm:$0xff]
    %v2419 = vld [vmem:[%s2410 + $0x40] sm:$0xff]
    %v2420 = vld [vmem:[%s2410 + $0x48] sm:$0xff]
    %v2421 = vld [vmem:[%s2410 + $0x50] sm:$0xff]
    %v2422 = vld [vmem:[%s2410 + $0x58] sm:$0xff]
    %v2423 = vld [vmem:[%s2410 + $0x60] sm:$0xff]
    %v2424 = vld [vmem:[%s2410 + $0x68] sm:$0xff]
    %v2425 = vld [vmem:[%s2410 + $0x70] sm:$0xff]
    %v2426 = vld [vmem:[%s2410 + $0x78] sm:$0xff]
    %v2427 = vld [vmem:[#allocation7 + $0x5] sm:$0x1]
    %v2428 = vlaneseq
    %v2429 = vshrl.u32 %v2428, 7
    %v2430 = vsub.s32 0, %v2429
    %v2431 = vrot.slane %v2427, %v2430
    %vm2496 = vcmask 1041409
    %v2497 = vsel %vm2496, %v2037, %v2031
    %vm2498 = vcmask 1042434
    %v2499 = vsel %vm2498, %v2043, %v2497
    %vm2500 = vcmask 1043459
    %v2501 = vsel %vm2500, %v2049, %v2499
    %vm2502 = vcmask 1044484
    %v2503 = vsel %vm2502, %v2055, %v2501
    %vm2504 = vcmask 1045509
    %v2505 = vsel %vm2504, %v2061, %v2503
    %vm2506 = vcmask 1046534
    %v2507 = vsel %vm2506, %v2067, %v2505
    %vm2508 = vcmask 1047559
    %v2509 = vsel %vm2508, %v2073, %v2507
    %v2510 = vsel %vm2496, %v2085, %v2079
    %v2511 = vsel %vm2498, %v2091, %v2510
    %v2512 = vsel %vm2500, %v2097, %v2511
    %v2513 = vsel %vm2502, %v2103, %v2512
    %v2514 = vsel %vm2504, %v2109, %v2513
    %v2515 = vsel %vm2506, %v2115, %v2514
    %v2516 = vsel %vm2508, %v2121, %v2515
    %v2517 = vsel %vm2496, %v2133, %v2127
    %v2518 = vsel %vm2498, %v2139, %v2517
    %v2519 = vsel %vm2500, %v2145, %v2518
    %v2520 = vsel %vm2502, %v2151, %v2519
    %v2521 = vsel %vm2504, %v2157, %v2520
    %v2522 = vsel %vm2506, %v2163, %v2521
    %v2523 = vsel %vm2508, %v2169, %v2522
    %v2524 = vsel %vm2496, %v2181, %v2175
    %v2525 = vsel %vm2498, %v2187, %v2524
    %v2526 = vsel %vm2500, %v2193, %v2525
    %v2527 = vsel %vm2502, %v2199, %v2526
    %v2528 = vsel %vm2504, %v2205, %v2527
    %v2529 = vsel %vm2506, %v2211, %v2528
    %v2530 = vsel %vm2508, %v2217, %v2529
    %v2531 = vsel %vm2496, %v2229, %v2223
    %v2532 = vsel %vm2498, %v2235, %v2531
    %v2533 = vsel %vm2500, %v2241, %v2532
    %v2534 = vsel %vm2502, %v2247, %v2533
    %v2535 = vsel %vm2504, %v2253, %v2534
    %v2536 = vsel %vm2506, %v2259, %v2535
    %v2537 = vsel %vm2508, %v2265, %v2536
    %v2538 = vsel %vm2496, %v2277, %v2271
    %v2539 = vsel %vm2498, %v2283, %v2538
    %v2540 = vsel %vm2500, %v2289, %v2539
    %v2541 = vsel %vm2502, %v2295, %v2540
    %v2542 = vsel %vm2504, %v2301, %v2541
    %v2543 = vsel %vm2506, %v2307, %v2542
    %v2544 = vsel %vm2508, %v2313, %v2543
    %v2545 = vsel %vm2496, %v2325, %v2319
    %v2546 = vsel %vm2498, %v2331, %v2545
    %v2547 = vsel %vm2500, %v2337, %v2546
    %v2548 = vsel %vm2502, %v2343, %v2547
    %v2549 = vsel %vm2504, %v2349, %v2548
    %v2550 = vsel %vm2506, %v2355, %v2549
    %v2551 = vsel %vm2508, %v2361, %v2550
    %v2552 = vsel %vm2496, %v2373, %v2367
    %v2553 = vsel %vm2498, %v2379, %v2552
    %v2554 = vsel %vm2500, %v2385, %v2553
    %v2555 = vsel %vm2502, %v2391, %v2554
    %v2556 = vsel %vm2504, %v2397, %v2555
    %v2557 = vsel %vm2506, %v2403, %v2556
    %v2558 = vsel %vm2508, %v2409, %v2557
    %2567 = vmatprep.subr.mxu0 0.0
    %2568 = vmatpush1.msra.mxu0 %v2411
    %2569 = vmatprep.subr.mxu0 0.0
    %2570 = vmatpush1.msra.mxu0 %v2412
    %2571 = vmatprep.subr.mxu0 0.0
    %2572 = vmatpush1.msra.mxu0 %v2413
    %2573 = vmatprep.subr.mxu0 0.0
    %2574 = vmatpush1.msra.mxu0 %v2414
    %2575 = vmatprep.subr.mxu0 0.0
    %2576 = vmatpush1.msra.mxu0 %v2415
    %2577 = vmatprep.subr.mxu0 0.0
    %2578 = vmatpush1.msra.mxu0 %v2416
    %2579 = vmatprep.subr.mxu0 0.0
    %2580 = vmatpush1.msra.mxu0 %v2417
    %2581 = vmatprep.subr.mxu0 0.0
    %2582 = vmatpush1.msra.mxu0 %v2418
    %2583 = vmatprep.subr.mxu0 0.0
    %2584 = vmatpush1.msra.mxu0 %v2419
    %2585 = vmatprep.subr.mxu0 0.0
    %2586 = vmatpush1.msra.mxu0 %v2420
    %2587 = vmatprep.subr.mxu0 0.0
    %2588 = vmatpush1.msra.mxu0 %v2421
    %2589 = vmatprep.subr.mxu0 0.0
    %2590 = vmatpush1.msra.mxu0 %v2422
    %2591 = vmatprep.subr.mxu0 0.0
    %2592 = vmatpush1.msra.mxu0 %v2423
    %2593 = vmatprep.subr.mxu0 0.0
    %2594 = vmatpush1.msra.mxu0 %v2424
    %2595 = vmatprep.subr.mxu0 0.0
    %2596 = vmatpush1.msra.mxu0 %v2425
    %2597 = vmatprep.subr.mxu0 0.0
    %2598 = vmatpush1.msra.mxu0 %v2426
    %2599 = vmatprep.subr.mxu0 0.0
    %2600 = vmatpush1.msra.mxu0 0.0
    %2601 = vmatprep.subr.mxu0 0.0
    %2602 = vmatpush1.msra.mxu0 0.0
    %2603 = vmatprep.subr.mxu0 0.0
    %2604 = vmatpush1.msra.mxu0 0.0
    %2605 = vmatprep.subr.mxu0 0.0
    %2606 = vmatpush1.msra.mxu0 0.0
    %2607 = vmatprep.subr.mxu0 0.0
    %2608 = vmatpush1.msra.mxu0 0.0
    %2609 = vmatprep.subr.mxu0 0.0
    %2610 = vmatpush1.msra.mxu0 0.0
    %2611 = vmatprep.subr.mxu0 0.0
    %2612 = vmatpush1.msra.mxu0 0.0
    %2613 = vmatprep.subr.mxu0 0.0
    %2614 = vmatpush1.msra.mxu0 0.0
    %2615 = vmatprep.subr.mxu0 0.0
    %2616 = vmatpush1.msra.mxu0 0.0
    %2617 = vmatprep.subr.mxu0 0.0
    %2618 = vmatpush1.msra.mxu0 0.0
    %2619 = vmatprep.subr.mxu0 0.0
    %2620 = vmatpush1.msra.mxu0 0.0
    %2621 = vmatprep.subr.mxu0 0.0
    %2622 = vmatpush1.msra.mxu0 0.0
    %2623 = vmatprep.subr.mxu0 0.0
    %2624 = vmatpush1.msra.mxu0 0.0
    %2625 = vmatprep.subr.mxu0 0.0
    %2626 = vmatpush1.msra.mxu0 0.0
    %2627 = vmatprep.subr.mxu0 0.0
    %2628 = vmatpush1.msra.mxu0 0.0
    %2629 = vmatprep.subr.mxu0 0.0
    %2630 = vmatpush1.msra.mxu0 0.0
    %2631 = vmatprep.mubr.f32.mxu0 0.0
    %2632 = vmatmul.mubr.f32.gmra.mrb[0].mxu0 %v2509
    %v2633 = vpop.f32.mrb[0].mxu0
    %v2634 = vadd.f32 %v2431, %v2633
    %v2635 = vpop.f32.mrb[0].mxu0
    %2636 = vmatprep.mubr.f32.mxu0 0.0
    %2637 = vmatmul.mubr.f32.gmra.mrb[0].mxu0 %v2516
    %v2638 = vpop.f32.mrb[0].mxu0
    %v2639 = vadd.f32 %v2431, %v2638
    %v2640 = vpop.f32.mrb[0].mxu0
    %2641 = vmatprep.mubr.f32.mxu0 0.0
    %2642 = vmatmul.mubr.f32.gmra.mrb[0].mxu0 %v2523
    %v2643 = vpop.f32.mrb[0].mxu0
    %v2644 = vadd.f32 %v2431, %v2643
    %v2645 = vpop.f32.mrb[0].mxu0
    %2646 = vmatprep.mubr.f32.mxu0 0.0
    %2647 = vmatmul.mubr.f32.gmra.mrb[0].mxu0 %v2530
    %v2648 = vpop.f32.mrb[0].mxu0
    %v2649 = vadd.f32 %v2431, %v2648
    %v2650 = vpop.f32.mrb[0].mxu0
    %2651 = vmatprep.mubr.f32.mxu0 0.0
    %2652 = vmatmul.mubr.f32.gmra.mrb[0].mxu0 %v2537
    %v2653 = vpop.f32.mrb[0].mxu0
    %v2654 = vadd.f32 %v2431, %v2653
    %v2655 = vpop.f32.mrb[0].mxu0
    %2656 = vmatprep.mubr.f32.mxu0 0.0
    %2657 = vmatmul.mubr.f32.gmra.mrb[0].mxu0 %v2544
    %v2658 = vpop.f32.mrb[0].mxu0
    %v2659 = vadd.f32 %v2431, %v2658
    %v2660 = vpop.f32.mrb[0].mxu0
    %2661 = vmatprep.mubr.f32.mxu0 0.0
    %2662 = vmatmul.mubr.f32.gmra.mrb[0].mxu0 %v2551
    %v2663 = vpop.f32.mrb[0].mxu0
    %v2664 = vadd.f32 %v2431, %v2663
    %v2665 = vpop.f32.mrb[0].mxu0
    %2666 = vmatprep.mubr.f32.mxu0 0.0
    %2667 = vmatmul.mubr.f32.gmra.mrb[0].mxu0 %v2558
    %v2668 = vpop.f32.mrb[0].mxu0
    %v2669 = vadd.f32 %v2431, %v2668
    %v2670 = vpop.f32.mrb[0].mxu0
    %2671 = vdwg.mxu0
    %v2672 = vmax.f32 %v2634, 0.0
    %v2673 = vmax.f32 %v2639, 0.0
    %v2674 = vmax.f32 %v2644, 0.0
    %v2675 = vmax.f32 %v2649, 0.0
    %v2676 = vmax.f32 %v2654, 0.0
    %v2677 = vmax.f32 %v2659, 0.0
    %v2678 = vmax.f32 %v2664, 0.0
    %v2679 = vmax.f32 %v2669, 0.0
    %s2680 = scalar_lea.vmem [#allocation5], 896
    %v2681 = vld [vmem:[%s2680] sm:$0xff]
    %v2682 = vld [vmem:[%s2680 + $0x8] sm:$0xff]
    %v2683 = vld [vmem:[%s2680 + $0x10] sm:$0xff]
    %v2684 = vld [vmem:[%s2680 + $0x18] sm:$0xff]
    %v2685 = vld [vmem:[%s2680 + $0x20] sm:$0xff]
    %v2686 = vld [vmem:[%s2680 + $0x28] sm:$0xff]
    %v2687 = vld [vmem:[%s2680 + $0x30] sm:$0xff]
    %v2688 = vld [vmem:[%s2680 + $0x38] sm:$0xff]
    %v2689 = vld [vmem:[%s2680 + $0x40] sm:$0xff]
    %v2690 = vld [vmem:[%s2680 + $0x48] sm:$0xff]
    %v2691 = vld [vmem:[%s2680 + $0x50] sm:$0xff]
    %v2692 = vld [vmem:[%s2680 + $0x58] sm:$0xff]
    %v2693 = vld [vmem:[%s2680 + $0x60] sm:$0xff]
    %v2694 = vld [vmem:[%s2680 + $0x68] sm:$0xff]
    %v2695 = vld [vmem:[%s2680 + $0x70] sm:$0xff]
    %v2696 = vld [vmem:[%s2680 + $0x78] sm:$0xff]
    %v2697 = vld [vmem:[#allocation7 + $0x6] sm:$0x1]
    %v2698 = vlaneseq
    %v2699 = vshrl.u32 %v2698, 7
    %v2700 = vsub.s32 0, %v2699
    %v2701 = vrot.slane %v2697, %v2700
    %2702 = vmatprep.subr.mxu0 0.0
    %2703 = vmatpush1.msra.mxu0 %v2681
    %2704 = vmatprep.subr.mxu0 0.0
    %2705 = vmatpush1.msra.mxu0 %v2682
    %2706 = vmatprep.subr.mxu0 0.0
    %2707 = vmatpush1.msra.mxu0 %v2683
    %2708 = vmatprep.subr.mxu0 0.0
    %2709 = vmatpush1.msra.mxu0 %v2684
    %2710 = vmatprep.subr.mxu0 0.0
    %2711 = vmatpush1.msra.mxu0 %v2685
    %2712 = vmatprep.subr.mxu0 0.0
    %2713 = vmatpush1.msra.mxu0 %v2686
    %2714 = vmatprep.subr.mxu0 0.0
    %2715 = vmatpush1.msra.mxu0 %v2687
    %2716 = vmatprep.subr.mxu0 0.0
    %2717 = vmatpush1.msra.mxu0 %v2688
    %2718 = vmatprep.subr.mxu0 0.0
    %2719 = vmatpush1.msra.mxu0 %v2689
    %2720 = vmatprep.subr.mxu0 0.0
    %2721 = vmatpush1.msra.mxu0 %v2690
    %2722 = vmatprep.subr.mxu0 0.0
    %2723 = vmatpush1.msra.mxu0 %v2691
    %2724 = vmatprep.subr.mxu0 0.0
    %2725 = vmatpush1.msra.mxu0 %v2692
    %2726 = vmatprep.subr.mxu0 0.0
    %2727 = vmatpush1.msra.mxu0 %v2693
    %2728 = vmatprep.subr.mxu0 0.0
    %2729 = vmatpush1.msra.mxu0 %v2694
    %2730 = vmatprep.subr.mxu0 0.0
    %2731 = vmatpush1.msra.mxu0 %v2695
    %2732 = vmatprep.subr.mxu0 0.0
    %2733 = vmatpush1.msra.mxu0 %v2696
    %2734 = vmatprep.subr.mxu0 0.0
    %2735 = vmatpush1.msra.mxu0 0.0
    %2736 = vmatprep.subr.mxu0 0.0
    %2737 = vmatpush1.msra.mxu0 0.0
    %2738 = vmatprep.subr.mxu0 0.0
    %2739 = vmatpush1.msra.mxu0 0.0
    %2740 = vmatprep.subr.mxu0 0.0
    %2741 = vmatpush1.msra.mxu0 0.0
    %2742 = vmatprep.subr.mxu0 0.0
    %2743 = vmatpush1.msra.mxu0 0.0
    %2744 = vmatprep.subr.mxu0 0.0
    %2745 = vmatpush1.msra.mxu0 0.0
    %2746 = vmatprep.subr.mxu0 0.0
    %2747 = vmatpush1.msra.mxu0 0.0
    %2748 = vmatprep.subr.mxu0 0.0
    %2749 = vmatpush1.msra.mxu0 0.0
    %2750 = vmatprep.subr.mxu0 0.0
    %2751 = vmatpush1.msra.mxu0 0.0
    %2752 = vmatprep.subr.mxu0 0.0
    %2753 = vmatpush1.msra.mxu0 0.0
    %2754 = vmatprep.subr.mxu0 0.0
    %2755 = vmatpush1.msra.mxu0 0.0
    %2756 = vmatprep.subr.mxu0 0.0
    %2757 = vmatpush1.msra.mxu0 0.0
    %2758 = vmatprep.subr.mxu0 0.0
    %2759 = vmatpush1.msra.mxu0 0.0
    %2760 = vmatprep.subr.mxu0 0.0
    %2761 = vmatpush1.msra.mxu0 0.0
    %2762 = vmatprep.subr.mxu0 0.0
    %2763 = vmatpush1.msra.mxu0 0.0
    %2764 = vmatprep.subr.mxu0 0.0
    %2765 = vmatpush1.msra.mxu0 0.0
    %2766 = vmatprep.mubr.f32.mxu0 0.0
    %2767 = vmatmul.mubr.f32.gmra.mrb[0].mxu0 %v2672
    %v2768 = vpop.f32.mrb[0].mxu0
    %v2769 = vadd.f32 %v2701, %v2768
    %v2770 = vpop.f32.mrb[0].mxu0
    %2771 = vmatprep.mubr.f32.mxu0 0.0
    %2772 = vmatmul.mubr.f32.gmra.mrb[0].mxu0 %v2673
    %v2773 = vpop.f32.mrb[0].mxu0
    %v2774 = vadd.f32 %v2701, %v2773
    %v2775 = vpop.f32.mrb[0].mxu0
    %2776 = vmatprep.mubr.f32.mxu0 0.0
    %2777 = vmatmul.mubr.f32.gmra.mrb[0].mxu0 %v2674
    %v2778 = vpop.f32.mrb[0].mxu0
    %v2779 = vadd.f32 %v2701, %v2778
    %v2780 = vpop.f32.mrb[0].mxu0
    %2781 = vmatprep.mubr.f32.mxu0 0.0
    %2782 = vmatmul.mubr.f32.gmra.mrb[0].mxu0 %v2675
    %v2783 = vpop.f32.mrb[0].mxu0
    %v2784 = vadd.f32 %v2701, %v2783
    %v2785 = vpop.f32.mrb[0].mxu0
    %2786 = vmatprep.mubr.f32.mxu0 0.0
    %2787 = vmatmul.mubr.f32.gmra.mrb[0].mxu0 %v2676
    %v2788 = vpop.f32.mrb[0].mxu0
    %v2789 = vadd.f32 %v2701, %v2788
    %v2790 = vpop.f32.mrb[0].mxu0
    %2791 = vmatprep.mubr.f32.mxu0 0.0
    %2792 = vmatmul.mubr.f32.gmra.mrb[0].mxu0 %v2677
    %v2793 = vpop.f32.mrb[0].mxu0
    %v2794 = vadd.f32 %v2701, %v2793
    %v2795 = vpop.f32.mrb[0].mxu0
    %2796 = vmatprep.mubr.f32.mxu0 0.0
    %2797 = vmatmul.mubr.f32.gmra.mrb[0].mxu0 %v2678
    %v2798 = vpop.f32.mrb[0].mxu0
    %v2799 = vadd.f32 %v2701, %v2798
    %v2800 = vpop.f32.mrb[0].mxu0
    %2801 = vmatprep.mubr.f32.mxu0 0.0
    %2802 = vmatmul.mubr.f32.gmra.mrb[0].mxu0 %v2679
    %v2803 = vpop.f32.mrb[0].mxu0
    %v2804 = vadd.f32 %v2701, %v2803
    %v2805 = vpop.f32.mrb[0].mxu0
    %2806 = vdwg.mxu0
    %2807 = vmatprep.subr.mxu0 0.0
    %2808 = vmatpush1.msra.mxu0 %v459
    %2809 = vmatprep.subr.mxu0 0.0
    %2810 = vmatpush1.msra.mxu0 %v460
    %2811 = vmatprep.subr.mxu0 0.0
    %2812 = vmatpush1.msra.mxu0 %v461
    %2813 = vmatprep.subr.mxu0 0.0
    %2814 = vmatpush1.msra.mxu0 %v462
    %2815 = vmatprep.subr.mxu0 0.0
    %2816 = vmatpush1.msra.mxu0 %v463
    %2817 = vmatprep.subr.mxu0 0.0
    %2818 = vmatpush1.msra.mxu0 %v464
    %2819 = vmatprep.subr.mxu0 0.0
    %2820 = vmatpush1.msra.mxu0 %v465
    %2821 = vmatprep.subr.mxu0 0.0
    %2822 = vmatpush1.msra.mxu0 %v466
    %2823 = vmatprep.subr.mxu0 0.0
    %2824 = vmatpush1.msra.mxu0 %v467
    %2825 = vmatprep.subr.mxu0 0.0
    %2826 = vmatpush1.msra.mxu0 %v468
    %2827 = vmatprep.subr.mxu0 0.0
    %2828 = vmatpush1.msra.mxu0 %v469
    %2829 = vmatprep.subr.mxu0 0.0
    %2830 = vmatpush1.msra.mxu0 %v470
    %2831 = vmatprep.subr.mxu0 0.0
    %2832 = vmatpush1.msra.mxu0 %v471
    %2833 = vmatprep.subr.mxu0 0.0
    %2834 = vmatpush1.msra.mxu0 %v472
    %2835 = vmatprep.subr.mxu0 0.0
    %2836 = vmatpush1.msra.mxu0 %v473
    %2837 = vmatprep.subr.mxu0 0.0
    %2838 = vmatpush1.msra.mxu0 %v474
    %2839 = vmatprep.subr.mxu0 0.0
    %2840 = vmatpush1.msra.mxu0 0.0
    %2841 = vmatprep.subr.mxu0 0.0
    %2842 = vmatpush1.msra.mxu0 0.0
    %2843 = vmatprep.subr.mxu0 0.0
    %2844 = vmatpush1.msra.mxu0 0.0
    %2845 = vmatprep.subr.mxu0 0.0
    %2846 = vmatpush1.msra.mxu0 0.0
    %2847 = vmatprep.subr.mxu0 0.0
    %2848 = vmatpush1.msra.mxu0 0.0
    %2849 = vmatprep.subr.mxu0 0.0
    %2850 = vmatpush1.msra.mxu0 0.0
    %2851 = vmatprep.subr.mxu0 0.0
    %2852 = vmatpush1.msra.mxu0 0.0
    %2853 = vmatprep.subr.mxu0 0.0
    %2854 = vmatpush1.msra.mxu0 0.0
    %2855 = vmatprep.subr.mxu0 0.0
    %2856 = vmatpush1.msra.mxu0 0.0
    %2857 = vmatprep.subr.mxu0 0.0
    %2858 = vmatpush1.msra.mxu0 0.0
    %2859 = vmatprep.subr.mxu0 0.0
    %2860 = vmatpush1.msra.mxu0 0.0
    %2861 = vmatprep.subr.mxu0 0.0
    %2862 = vmatpush1.msra.mxu0 0.0
    %2863 = vmatprep.subr.mxu0 0.0
    %2864 = vmatpush1.msra.mxu0 0.0
    %2865 = vmatprep.subr.mxu0 0.0
    %2866 = vmatpush1.msra.mxu0 0.0
    %2867 = vmatprep.subr.mxu0 0.0
    %2868 = vmatpush1.msra.mxu0 0.0
    %2869 = vmatprep.subr.mxu0 0.0
    %2870 = vmatpush1.msra.mxu0 0.0
    %2871 = vmatprep.mubr.f32.mxu0 0.0
    %2872 = vmatmul.mubr.f32.gmra.mrb[0].mxu0 %v2769
    %v2873 = vpop.f32.mrb[0].mxu0
    %v2874 = vadd.f32 0.0, %v2873
    %v2875 = vpop.f32.mrb[0].mxu0
    %2876 = vmatprep.mubr.f32.mxu0 0.0
    %2877 = vmatmul.mubr.f32.gmra.mrb[0].mxu0 %v2774
    %v2878 = vpop.f32.mrb[0].mxu0
    %v2879 = vadd.f32 0.0, %v2878
    %v2880 = vpop.f32.mrb[0].mxu0
    %2881 = vmatprep.mubr.f32.mxu0 0.0
    %2882 = vmatmul.mubr.f32.gmra.mrb[0].mxu0 %v2779
    %v2883 = vpop.f32.mrb[0].mxu0
    %v2884 = vadd.f32 0.0, %v2883
    %v2885 = vpop.f32.mrb[0].mxu0
    %2886 = vmatprep.mubr.f32.mxu0 0.0
    %2887 = vmatmul.mubr.f32.gmra.mrb[0].mxu0 %v2784
    %v2888 = vpop.f32.mrb[0].mxu0
    %v2889 = vadd.f32 0.0, %v2888
    %v2890 = vpop.f32.mrb[0].mxu0
    %2891 = vmatprep.mubr.f32.mxu0 0.0
    %2892 = vmatmul.mubr.f32.gmra.mrb[0].mxu0 %v2789
    %v2893 = vpop.f32.mrb[0].mxu0
    %v2894 = vadd.f32 0.0, %v2893
    %v2895 = vpop.f32.mrb[0].mxu0
    %2896 = vmatprep.mubr.f32.mxu0 0.0
    %2897 = vmatmul.mubr.f32.gmra.mrb[0].mxu0 %v2794
    %v2898 = vpop.f32.mrb[0].mxu0
    %v2899 = vadd.f32 0.0, %v2898
    %v2900 = vpop.f32.mrb[0].mxu0
    %2901 = vmatprep.mubr.f32.mxu0 0.0
    %2902 = vmatmul.mubr.f32.gmra.mrb[0].mxu0 %v2799
    %v2903 = vpop.f32.mrb[0].mxu0
    %v2904 = vadd.f32 0.0, %v2903
    %v2905 = vpop.f32.mrb[0].mxu0
    %2906 = vmatprep.mubr.f32.mxu0 0.0
    %2907 = vmatmul.mubr.f32.gmra.mrb[0].mxu0 %v2804
    %v2908 = vpop.f32.mrb[0].mxu0
    %v2909 = vadd.f32 0.0, %v2908
    %v2910 = vpop.f32.mrb[0].mxu0
    %2911 = vdwg.mxu0
    %2912 = vmatprep.subr.mxu0 0.0
    %2913 = vmatpush1.msra.mxu0 %v581
    %2914 = vmatprep.subr.mxu0 0.0
    %2915 = vmatpush1.msra.mxu0 %v582
    %2916 = vmatprep.subr.mxu0 0.0
    %2917 = vmatpush1.msra.mxu0 %v583
    %2918 = vmatprep.subr.mxu0 0.0
    %2919 = vmatpush1.msra.mxu0 %v584
    %2920 = vmatprep.subr.mxu0 0.0
    %2921 = vmatpush1.msra.mxu0 %v585
    %2922 = vmatprep.subr.mxu0 0.0
    %2923 = vmatpush1.msra.mxu0 %v586
    %2924 = vmatprep.subr.mxu0 0.0
    %2925 = vmatpush1.msra.mxu0 %v587
    %2926 = vmatprep.subr.mxu0 0.0
    %2927 = vmatpush1.msra.mxu0 %v588
    %2928 = vmatprep.subr.mxu0 0.0
    %2929 = vmatpush1.msra.mxu0 %v589
    %2930 = vmatprep.subr.mxu0 0.0
    %2931 = vmatpush1.msra.mxu0 %v590
    %2932 = vmatprep.subr.mxu0 0.0
    %2933 = vmatpush1.msra.mxu0 %v591
    %2934 = vmatprep.subr.mxu0 0.0
    %2935 = vmatpush1.msra.mxu0 %v592
    %2936 = vmatprep.subr.mxu0 0.0
    %2937 = vmatpush1.msra.mxu0 %v593
    %2938 = vmatprep.subr.mxu0 0.0
    %2939 = vmatpush1.msra.mxu0 %v594
    %2940 = vmatprep.subr.mxu0 0.0
    %2941 = vmatpush1.msra.mxu0 %v595
    %2942 = vmatprep.subr.mxu0 0.0
    %2943 = vmatpush1.msra.mxu0 %v596
    %2944 = vmatprep.subr.mxu0 0.0
    %2945 = vmatpush1.msra.mxu0 0.0
    %2946 = vmatprep.subr.mxu0 0.0
    %2947 = vmatpush1.msra.mxu0 0.0
    %2948 = vmatprep.subr.mxu0 0.0
    %2949 = vmatpush1.msra.mxu0 0.0
    %2950 = vmatprep.subr.mxu0 0.0
    %2951 = vmatpush1.msra.mxu0 0.0
    %2952 = vmatprep.subr.mxu0 0.0
    %2953 = vmatpush1.msra.mxu0 0.0
    %2954 = vmatprep.subr.mxu0 0.0
    %2955 = vmatpush1.msra.mxu0 0.0
    %2956 = vmatprep.subr.mxu0 0.0
    %2957 = vmatpush1.msra.mxu0 0.0
    %2958 = vmatprep.subr.mxu0 0.0
    %2959 = vmatpush1.msra.mxu0 0.0
    %2960 = vmatprep.subr.mxu0 0.0
    %2961 = vmatpush1.msra.mxu0 0.0
    %2962 = vmatprep.subr.mxu0 0.0
    %2963 = vmatpush1.msra.mxu0 0.0
    %2964 = vmatprep.subr.mxu0 0.0
    %2965 = vmatpush1.msra.mxu0 0.0
    %2966 = vmatprep.subr.mxu0 0.0
    %2967 = vmatpush1.msra.mxu0 0.0
    %2968 = vmatprep.subr.mxu0 0.0
    %2969 = vmatpush1.msra.mxu0 0.0
    %2970 = vmatprep.subr.mxu0 0.0
    %2971 = vmatpush1.msra.mxu0 0.0
    %2972 = vmatprep.subr.mxu0 0.0
    %2973 = vmatpush1.msra.mxu0 0.0
    %2974 = vmatprep.subr.mxu0 0.0
    %2975 = vmatpush1.msra.mxu0 0.0
    %2976 = vmatprep.mubr.f32.mxu0 0.0
    %2977 = vmatmul.mubr.f32.gmra.mrb[0].mxu0 %v2769
    %v2978 = vpop.f32.mrb[0].mxu0
    %v2979 = vadd.f32 0.0, %v2978
    %v2980 = vpop.f32.mrb[0].mxu0
    %2981 = vmatprep.mubr.f32.mxu0 0.0
    %2982 = vmatmul.mubr.f32.gmra.mrb[0].mxu0 %v2774
    %v2983 = vpop.f32.mrb[0].mxu0
    %v2984 = vadd.f32 0.0, %v2983
    %v2985 = vpop.f32.mrb[0].mxu0
    %2986 = vmatprep.mubr.f32.mxu0 0.0
    %2987 = vmatmul.mubr.f32.gmra.mrb[0].mxu0 %v2779
    %v2988 = vpop.f32.mrb[0].mxu0
    %v2989 = vadd.f32 0.0, %v2988
    %v2990 = vpop.f32.mrb[0].mxu0
    %2991 = vmatprep.mubr.f32.mxu0 0.0
    %2992 = vmatmul.mubr.f32.gmra.mrb[0].mxu0 %v2784
    %v2993 = vpop.f32.mrb[0].mxu0
    %v2994 = vadd.f32 0.0, %v2993
    %v2995 = vpop.f32.mrb[0].mxu0
    %2996 = vmatprep.mubr.f32.mxu0 0.0
    %2997 = vmatmul.mubr.f32.gmra.mrb[0].mxu0 %v2789
    %v2998 = vpop.f32.mrb[0].mxu0
    %v2999 = vadd.f32 0.0, %v2998
    %v3000 = vpop.f32.mrb[0].mxu0
    %3001 = vmatprep.mubr.f32.mxu0 0.0
    %3002 = vmatmul.mubr.f32.gmra.mrb[0].mxu0 %v2794
    %v3003 = vpop.f32.mrb[0].mxu0
    %v3004 = vadd.f32 0.0, %v3003
    %v3005 = vpop.f32.mrb[0].mxu0
    %3006 = vmatprep.mubr.f32.mxu0 0.0
    %3007 = vmatmul.mubr.f32.gmra.mrb[0].mxu0 %v2799
    %v3008 = vpop.f32.mrb[0].mxu0
    %v3009 = vadd.f32 0.0, %v3008
    %v3010 = vpop.f32.mrb[0].mxu0
    %3011 = vmatprep.mubr.f32.mxu0 0.0
    %3012 = vmatmul.mubr.f32.gmra.mrb[0].mxu0 %v2804
    %v3013 = vpop.f32.mrb[0].mxu0
    %v3014 = vadd.f32 0.0, %v3013
    %v3015 = vpop.f32.mrb[0].mxu0
    %3016 = vdwg.mxu0
    %v3025 = vcombine.high %v2874, %v2874
    %v3027 = vunpack.c.l.s4 1966171168
    %v3028 = vunpack.c.0.s8 %v3027
    %v3029 = vlaneseq
    %v3030 = vshrl.u32 %v3029, 7
    %v3031 = vsub.s32 %v3028, %v3030
    %v3032 = vrot.slane %v2874, %v3031
    %v3034 = vunpack.c.l.s4 1966171168
    %v3035 = vunpack.c.0.s8 %v3034
    %v3036 = vlaneseq
    %v3037 = vshrl.u32 %v3036, 7
    %v3038 = vsub.s32 %v3035, %v3037
    %v3039 = vrot.slane %v3025, %v3038
    %v3040 = vcombine.high %v3032, %v3032
    %v3041 = vcombine.high %v3039, %v3039
    %v3043 = vunpack.c.l.s4 1966171168
    %v3044 = vunpack.c.0.s8 %v3043
    %v3045 = vlaneseq
    %v3046 = vshrl.u32 %v3045, 7
    %v3047 = vsub.s32 %v3044, %v3046
    %v3048 = vrot.slane %v3032, %v3047
    %v3050 = vunpack.c.l.s4 1966171168
    %v3051 = vunpack.c.0.s8 %v3050
    %v3052 = vlaneseq
    %v3053 = vshrl.u32 %v3052, 7
    %v3054 = vsub.s32 %v3051, %v3053
    %v3055 = vrot.slane %v3039, %v3054
    %v3057 = vunpack.c.l.s4 1966171168
    %v3058 = vunpack.c.0.s8 %v3057
    %v3059 = vlaneseq
    %v3060 = vshrl.u32 %v3059, 7
    %v3061 = vsub.s32 %v3058, %v3060
    %v3062 = vrot.slane %v3040, %v3061
    %v3064 = vunpack.c.l.s4 1966171168
    %v3065 = vunpack.c.0.s8 %v3064
    %v3066 = vlaneseq
    %v3067 = vshrl.u32 %v3066, 7
    %v3068 = vsub.s32 %v3065, %v3067
    %v3069 = vrot.slane %v3041, %v3068
    %v3070 = vcombine.high %v3048, %v3048
    %v3071 = vcombine.high %v3055, %v3055
    %v3072 = vcombine.high %v3062, %v3062
    %v3073 = vcombine.high %v3069, %v3069
    %v3074 = vcombine.high %v2879, %v2879
    %v3076 = vunpack.c.l.s4 1966171168
    %v3077 = vunpack.c.0.s8 %v3076
    %v3078 = vlaneseq
    %v3079 = vshrl.u32 %v3078, 7
    %v3080 = vsub.s32 %v3077, %v3079
    %v3081 = vrot.slane %v2879, %v3080
    %v3083 = vunpack.c.l.s4 1966171168
    %v3084 = vunpack.c.0.s8 %v3083
    %v3085 = vlaneseq
    %v3086 = vshrl.u32 %v3085, 7
    %v3087 = vsub.s32 %v3084, %v3086
    %v3088 = vrot.slane %v3074, %v3087
    %v3089 = vcombine.high %v3081, %v3081
    %v3090 = vcombine.high %v3088, %v3088
    %v3092 = vunpack.c.l.s4 1966171168
    %v3093 = vunpack.c.0.s8 %v3092
    %v3094 = vlaneseq
    %v3095 = vshrl.u32 %v3094, 7
    %v3096 = vsub.s32 %v3093, %v3095
    %v3097 = vrot.slane %v3081, %v3096
    %v3099 = vunpack.c.l.s4 1966171168
    %v3100 = vunpack.c.0.s8 %v3099
    %v3101 = vlaneseq
    %v3102 = vshrl.u32 %v3101, 7
    %v3103 = vsub.s32 %v3100, %v3102
    %v3104 = vrot.slane %v3088, %v3103
    %v3106 = vunpack.c.l.s4 1966171168
    %v3107 = vunpack.c.0.s8 %v3106
    %v3108 = vlaneseq
    %v3109 = vshrl.u32 %v3108, 7
    %v3110 = vsub.s32 %v3107, %v3109
    %v3111 = vrot.slane %v3089, %v3110
    %v3113 = vunpack.c.l.s4 1966171168
    %v3114 = vunpack.c.0.s8 %v3113
    %v3115 = vlaneseq
    %v3116 = vshrl.u32 %v3115, 7
    %v3117 = vsub.s32 %v3114, %v3116
    %v3118 = vrot.slane %v3090, %v3117
    %v3119 = vcombine.high %v3097, %v3097
    %v3120 = vcombine.high %v3104, %v3104
    %v3121 = vcombine.high %v3111, %v3111
    %v3122 = vcombine.high %v3118, %v3118
    %v3123 = vcombine.high %v2884, %v2884
    %v3125 = vunpack.c.l.s4 1966171168
    %v3126 = vunpack.c.0.s8 %v3125
    %v3127 = vlaneseq
    %v3128 = vshrl.u32 %v3127, 7
    %v3129 = vsub.s32 %v3126, %v3128
    %v3130 = vrot.slane %v2884, %v3129
    %v3132 = vunpack.c.l.s4 1966171168
    %v3133 = vunpack.c.0.s8 %v3132
    %v3134 = vlaneseq
    %v3135 = vshrl.u32 %v3134, 7
    %v3136 = vsub.s32 %v3133, %v3135
    %v3137 = vrot.slane %v3123, %v3136
    %v3138 = vcombine.high %v3130, %v3130
    %v3139 = vcombine.high %v3137, %v3137
    %v3141 = vunpack.c.l.s4 1966171168
    %v3142 = vunpack.c.0.s8 %v3141
    %v3143 = vlaneseq
    %v3144 = vshrl.u32 %v3143, 7
    %v3145 = vsub.s32 %v3142, %v3144
    %v3146 = vrot.slane %v3130, %v3145
    %v3148 = vunpack.c.l.s4 1966171168
    %v3149 = vunpack.c.0.s8 %v3148
    %v3150 = vlaneseq
    %v3151 = vshrl.u32 %v3150, 7
    %v3152 = vsub.s32 %v3149, %v3151
    %v3153 = vrot.slane %v3137, %v3152
    %v3155 = vunpack.c.l.s4 1966171168
    %v3156 = vunpack.c.0.s8 %v3155
    %v3157 = vlaneseq
    %v3158 = vshrl.u32 %v3157, 7
    %v3159 = vsub.s32 %v3156, %v3158
    %v3160 = vrot.slane %v3138, %v3159
    %v3162 = vunpack.c.l.s4 1966171168
    %v3163 = vunpack.c.0.s8 %v3162
    %v3164 = vlaneseq
    %v3165 = vshrl.u32 %v3164, 7
    %v3166 = vsub.s32 %v3163, %v3165
    %v3167 = vrot.slane %v3139, %v3166
    %v3168 = vcombine.high %v3146, %v3146
    %v3169 = vcombine.high %v3153, %v3153
    %v3170 = vcombine.high %v3160, %v3160
    %v3171 = vcombine.high %v3167, %v3167
    %v3172 = vcombine.high %v2889, %v2889
    %v3174 = vunpack.c.l.s4 1966171168
    %v3175 = vunpack.c.0.s8 %v3174
    %v3176 = vlaneseq
    %v3177 = vshrl.u32 %v3176, 7
    %v3178 = vsub.s32 %v3175, %v3177
    %v3179 = vrot.slane %v2889, %v3178
    %v3181 = vunpack.c.l.s4 1966171168
    %v3182 = vunpack.c.0.s8 %v3181
    %v3183 = vlaneseq
    %v3184 = vshrl.u32 %v3183, 7
    %v3185 = vsub.s32 %v3182, %v3184
    %v3186 = vrot.slane %v3172, %v3185
    %v3187 = vcombine.high %v3179, %v3179
    %v3188 = vcombine.high %v3186, %v3186
    %v3190 = vunpack.c.l.s4 1966171168
    %v3191 = vunpack.c.0.s8 %v3190
    %v3192 = vlaneseq
    %v3193 = vshrl.u32 %v3192, 7
    %v3194 = vsub.s32 %v3191, %v3193
    %v3195 = vrot.slane %v3179, %v3194
    %v3197 = vunpack.c.l.s4 1966171168
    %v3198 = vunpack.c.0.s8 %v3197
    %v3199 = vlaneseq
    %v3200 = vshrl.u32 %v3199, 7
    %v3201 = vsub.s32 %v3198, %v3200
    %v3202 = vrot.slane %v3186, %v3201
    %v3204 = vunpack.c.l.s4 1966171168
    %v3205 = vunpack.c.0.s8 %v3204
    %v3206 = vlaneseq
    %v3207 = vshrl.u32 %v3206, 7
    %v3208 = vsub.s32 %v3205, %v3207
    %v3209 = vrot.slane %v3187, %v3208
    %v3211 = vunpack.c.l.s4 1966171168
    %v3212 = vunpack.c.0.s8 %v3211
    %v3213 = vlaneseq
    %v3214 = vshrl.u32 %v3213, 7
    %v3215 = vsub.s32 %v3212, %v3214
    %v3216 = vrot.slane %v3188, %v3215
    %v3217 = vcombine.high %v3195, %v3195
    %v3218 = vcombine.high %v3202, %v3202
    %v3219 = vcombine.high %v3209, %v3209
    %v3220 = vcombine.high %v3216, %v3216
    %v3221 = vcombine.high %v2894, %v2894
    %v3223 = vunpack.c.l.s4 1966171168
    %v3224 = vunpack.c.0.s8 %v3223
    %v3225 = vlaneseq
    %v3226 = vshrl.u32 %v3225, 7
    %v3227 = vsub.s32 %v3224, %v3226
    %v3228 = vrot.slane %v2894, %v3227
    %v3230 = vunpack.c.l.s4 1966171168
    %v3231 = vunpack.c.0.s8 %v3230
    %v3232 = vlaneseq
    %v3233 = vshrl.u32 %v3232, 7
    %v3234 = vsub.s32 %v3231, %v3233
    %v3235 = vrot.slane %v3221, %v3234
    %v3236 = vcombine.high %v3228, %v3228
    %v3237 = vcombine.high %v3235, %v3235
    %v3239 = vunpack.c.l.s4 1966171168
    %v3240 = vunpack.c.0.s8 %v3239
    %v3241 = vlaneseq
    %v3242 = vshrl.u32 %v3241, 7
    %v3243 = vsub.s32 %v3240, %v3242
    %v3244 = vrot.slane %v3228, %v3243
    %v3246 = vunpack.c.l.s4 1966171168
    %v3247 = vunpack.c.0.s8 %v3246
    %v3248 = vlaneseq
    %v3249 = vshrl.u32 %v3248, 7
    %v3250 = vsub.s32 %v3247, %v3249
    %v3251 = vrot.slane %v3235, %v3250
    %v3253 = vunpack.c.l.s4 1966171168
    %v3254 = vunpack.c.0.s8 %v3253
    %v3255 = vlaneseq
    %v3256 = vshrl.u32 %v3255, 7
    %v3257 = vsub.s32 %v3254, %v3256
    %v3258 = vrot.slane %v3236, %v3257
    %v3260 = vunpack.c.l.s4 1966171168
    %v3261 = vunpack.c.0.s8 %v3260
    %v3262 = vlaneseq
    %v3263 = vshrl.u32 %v3262, 7
    %v3264 = vsub.s32 %v3261, %v3263
    %v3265 = vrot.slane %v3237, %v3264
    %v3266 = vcombine.high %v3244, %v3244
    %v3267 = vcombine.high %v3251, %v3251
    %v3268 = vcombine.high %v3258, %v3258
    %v3269 = vcombine.high %v3265, %v3265
    %v3270 = vcombine.high %v2899, %v2899
    %v3272 = vunpack.c.l.s4 1966171168
    %v3273 = vunpack.c.0.s8 %v3272
    %v3274 = vlaneseq
    %v3275 = vshrl.u32 %v3274, 7
    %v3276 = vsub.s32 %v3273, %v3275
    %v3277 = vrot.slane %v2899, %v3276
    %v3279 = vunpack.c.l.s4 1966171168
    %v3280 = vunpack.c.0.s8 %v3279
    %v3281 = vlaneseq
    %v3282 = vshrl.u32 %v3281, 7
    %v3283 = vsub.s32 %v3280, %v3282
    %v3284 = vrot.slane %v3270, %v3283
    %v3285 = vcombine.high %v3277, %v3277
    %v3286 = vcombine.high %v3284, %v3284
    %v3288 = vunpack.c.l.s4 1966171168
    %v3289 = vunpack.c.0.s8 %v3288
    %v3290 = vlaneseq
    %v3291 = vshrl.u32 %v3290, 7
    %v3292 = vsub.s32 %v3289, %v3291
    %v3293 = vrot.slane %v3277, %v3292
    %v3295 = vunpack.c.l.s4 1966171168
    %v3296 = vunpack.c.0.s8 %v3295
    %v3297 = vlaneseq
    %v3298 = vshrl.u32 %v3297, 7
    %v3299 = vsub.s32 %v3296, %v3298
    %v3300 = vrot.slane %v3284, %v3299
    %v3302 = vunpack.c.l.s4 1966171168
    %v3303 = vunpack.c.0.s8 %v3302
    %v3304 = vlaneseq
    %v3305 = vshrl.u32 %v3304, 7
    %v3306 = vsub.s32 %v3303, %v3305
    %v3307 = vrot.slane %v3285, %v3306
    %v3309 = vunpack.c.l.s4 1966171168
    %v3310 = vunpack.c.0.s8 %v3309
    %v3311 = vlaneseq
    %v3312 = vshrl.u32 %v3311, 7
    %v3313 = vsub.s32 %v3310, %v3312
    %v3314 = vrot.slane %v3286, %v3313
    %v3315 = vcombine.high %v3293, %v3293
    %v3316 = vcombine.high %v3300, %v3300
    %v3317 = vcombine.high %v3307, %v3307
    %v3318 = vcombine.high %v3314, %v3314
    %v3319 = vcombine.high %v2904, %v2904
    %v3321 = vunpack.c.l.s4 1966171168
    %v3322 = vunpack.c.0.s8 %v3321
    %v3323 = vlaneseq
    %v3324 = vshrl.u32 %v3323, 7
    %v3325 = vsub.s32 %v3322, %v3324
    %v3326 = vrot.slane %v2904, %v3325
    %v3328 = vunpack.c.l.s4 1966171168
    %v3329 = vunpack.c.0.s8 %v3328
    %v3330 = vlaneseq
    %v3331 = vshrl.u32 %v3330, 7
    %v3332 = vsub.s32 %v3329, %v3331
    %v3333 = vrot.slane %v3319, %v3332
    %v3334 = vcombine.high %v3326, %v3326
    %v3335 = vcombine.high %v3333, %v3333
    %v3337 = vunpack.c.l.s4 1966171168
    %v3338 = vunpack.c.0.s8 %v3337
    %v3339 = vlaneseq
    %v3340 = vshrl.u32 %v3339, 7
    %v3341 = vsub.s32 %v3338, %v3340
    %v3342 = vrot.slane %v3326, %v3341
    %v3344 = vunpack.c.l.s4 1966171168
    %v3345 = vunpack.c.0.s8 %v3344
    %v3346 = vlaneseq
    %v3347 = vshrl.u32 %v3346, 7
    %v3348 = vsub.s32 %v3345, %v3347
    %v3349 = vrot.slane %v3333, %v3348
    %v3351 = vunpack.c.l.s4 1966171168
    %v3352 = vunpack.c.0.s8 %v3351
    %v3353 = vlaneseq
    %v3354 = vshrl.u32 %v3353, 7
    %v3355 = vsub.s32 %v3352, %v3354
    %v3356 = vrot.slane %v3334, %v3355
    %v3358 = vunpack.c.l.s4 1966171168
    %v3359 = vunpack.c.0.s8 %v3358
    %v3360 = vlaneseq
    %v3361 = vshrl.u32 %v3360, 7
    %v3362 = vsub.s32 %v3359, %v3361
    %v3363 = vrot.slane %v3335, %v3362
    %v3364 = vcombine.high %v3342, %v3342
    %v3365 = vcombine.high %v3349, %v3349
    %v3366 = vcombine.high %v3356, %v3356
    %v3367 = vcombine.high %v3363, %v3363
    %v3368 = vcombine.high %v2909, %v2909
    %v3370 = vunpack.c.l.s4 1966171168
    %v3371 = vunpack.c.0.s8 %v3370
    %v3372 = vlaneseq
    %v3373 = vshrl.u32 %v3372, 7
    %v3374 = vsub.s32 %v3371, %v3373
    %v3375 = vrot.slane %v2909, %v3374
    %v3377 = vunpack.c.l.s4 1966171168
    %v3378 = vunpack.c.0.s8 %v3377
    %v3379 = vlaneseq
    %v3380 = vshrl.u32 %v3379, 7
    %v3381 = vsub.s32 %v3378, %v3380
    %v3382 = vrot.slane %v3368, %v3381
    %v3383 = vcombine.high %v3375, %v3375
    %v3384 = vcombine.high %v3382, %v3382
    %v3386 = vunpack.c.l.s4 1966171168
    %v3387 = vunpack.c.0.s8 %v3386
    %v3388 = vlaneseq
    %v3389 = vshrl.u32 %v3388, 7
    %v3390 = vsub.s32 %v3387, %v3389
    %v3391 = vrot.slane %v3375, %v3390
    %v3393 = vunpack.c.l.s4 1966171168
    %v3394 = vunpack.c.0.s8 %v3393
    %v3395 = vlaneseq
    %v3396 = vshrl.u32 %v3395, 7
    %v3397 = vsub.s32 %v3394, %v3396
    %v3398 = vrot.slane %v3382, %v3397
    %v3400 = vunpack.c.l.s4 1966171168
    %v3401 = vunpack.c.0.s8 %v3400
    %v3402 = vlaneseq
    %v3403 = vshrl.u32 %v3402, 7
    %v3404 = vsub.s32 %v3401, %v3403
    %v3405 = vrot.slane %v3383, %v3404
    %v3407 = vunpack.c.l.s4 1966171168
    %v3408 = vunpack.c.0.s8 %v3407
    %v3409 = vlaneseq
    %v3410 = vshrl.u32 %v3409, 7
    %v3411 = vsub.s32 %v3408, %v3410
    %v3412 = vrot.slane %v3384, %v3411
    %v3413 = vcombine.high %v3391, %v3391
    %v3414 = vcombine.high %v3398, %v3398
    %v3415 = vcombine.high %v3405, %v3405
    %v3416 = vcombine.high %v3412, %v3412
    %v3417 = vlaneseq
    %v3418 = vshrl.u32 %v3417, 7
    %v3419 = vsub.s32 0, %v3418
    %v3420 = vrot.slane %v3048, %v3419
    %v3421 = vlaneseq
    %v3422 = vshrl.u32 %v3421, 7
    %v3423 = vsub.s32 0, %v3422
    %v3424 = vrot.slane %v3062, %v3423
    %v3425 = vlaneseq
    %v3426 = vshrl.u32 %v3425, 7
    %v3427 = vsub.s32 0, %v3426
    %v3428 = vrot.slane %v3070, %v3427
    %v3429 = vlaneseq
    %v3430 = vshrl.u32 %v3429, 7
    %v3431 = vsub.s32 0, %v3430
    %v3432 = vrot.slane %v3072, %v3431
    %v3433 = vlaneseq
    %v3434 = vshrl.u32 %v3433, 7
    %v3435 = vsub.s32 0, %v3434
    %v3436 = vrot.slane %v3055, %v3435
    %v3437 = vlaneseq
    %v3438 = vshrl.u32 %v3437, 7
    %v3439 = vsub.s32 0, %v3438
    %v3440 = vrot.slane %v3069, %v3439
    %v3441 = vlaneseq
    %v3442 = vshrl.u32 %v3441, 7
    %v3443 = vsub.s32 0, %v3442
    %v3444 = vrot.slane %v3071, %v3443
    %v3445 = vlaneseq
    %v3446 = vshrl.u32 %v3445, 7
    %v3447 = vsub.s32 0, %v3446
    %v3448 = vrot.slane %v3073, %v3447
    %v3449 = vlaneseq
    %v3450 = vshrl.u32 %v3449, 7
    %v3451 = vsub.s32 0, %v3450
    %v3452 = vrot.slane %v3097, %v3451
    %v3453 = vlaneseq
    %v3454 = vshrl.u32 %v3453, 7
    %v3455 = vsub.s32 0, %v3454
    %v3456 = vrot.slane %v3111, %v3455
    %v3457 = vlaneseq
    %v3458 = vshrl.u32 %v3457, 7
    %v3459 = vsub.s32 0, %v3458
    %v3460 = vrot.slane %v3119, %v3459
    %v3461 = vlaneseq
    %v3462 = vshrl.u32 %v3461, 7
    %v3463 = vsub.s32 0, %v3462
    %v3464 = vrot.slane %v3121, %v3463
    %v3465 = vlaneseq
    %v3466 = vshrl.u32 %v3465, 7
    %v3467 = vsub.s32 0, %v3466
    %v3468 = vrot.slane %v3104, %v3467
    %v3469 = vlaneseq
    %v3470 = vshrl.u32 %v3469, 7
    %v3471 = vsub.s32 0, %v3470
    %v3472 = vrot.slane %v3118, %v3471
    %v3473 = vlaneseq
    %v3474 = vshrl.u32 %v3473, 7
    %v3475 = vsub.s32 0, %v3474
    %v3476 = vrot.slane %v3120, %v3475
    %v3477 = vlaneseq
    %v3478 = vshrl.u32 %v3477, 7
    %v3479 = vsub.s32 0, %v3478
    %v3480 = vrot.slane %v3122, %v3479
    %v3481 = vlaneseq
    %v3482 = vshrl.u32 %v3481, 7
    %v3483 = vsub.s32 0, %v3482
    %v3484 = vrot.slane %v3146, %v3483
    %v3485 = vlaneseq
    %v3486 = vshrl.u32 %v3485, 7
    %v3487 = vsub.s32 0, %v3486
    %v3488 = vrot.slane %v3160, %v3487
    %v3489 = vlaneseq
    %v3490 = vshrl.u32 %v3489, 7
    %v3491 = vsub.s32 0, %v3490
    %v3492 = vrot.slane %v3168, %v3491
    %v3493 = vlaneseq
    %v3494 = vshrl.u32 %v3493, 7
    %v3495 = vsub.s32 0, %v3494
    %v3496 = vrot.slane %v3170, %v3495
    %v3497 = vlaneseq
    %v3498 = vshrl.u32 %v3497, 7
    %v3499 = vsub.s32 0, %v3498
    %v3500 = vrot.slane %v3153, %v3499
    %v3501 = vlaneseq
    %v3502 = vshrl.u32 %v3501, 7
    %v3503 = vsub.s32 0, %v3502
    %v3504 = vrot.slane %v3167, %v3503
    %v3505 = vlaneseq
    %v3506 = vshrl.u32 %v3505, 7
    %v3507 = vsub.s32 0, %v3506
    %v3508 = vrot.slane %v3169, %v3507
    %v3509 = vlaneseq
    %v3510 = vshrl.u32 %v3509, 7
    %v3511 = vsub.s32 0, %v3510
    %v3512 = vrot.slane %v3171, %v3511
    %v3513 = vlaneseq
    %v3514 = vshrl.u32 %v3513, 7
    %v3515 = vsub.s32 0, %v3514
    %v3516 = vrot.slane %v3195, %v3515
    %v3517 = vlaneseq
    %v3518 = vshrl.u32 %v3517, 7
    %v3519 = vsub.s32 0, %v3518
    %v3520 = vrot.slane %v3209, %v3519
    %v3521 = vlaneseq
    %v3522 = vshrl.u32 %v3521, 7
    %v3523 = vsub.s32 0, %v3522
    %v3524 = vrot.slane %v3217, %v3523
    %v3525 = vlaneseq
    %v3526 = vshrl.u32 %v3525, 7
    %v3527 = vsub.s32 0, %v3526
    %v3528 = vrot.slane %v3219, %v3527
    %v3529 = vlaneseq
    %v3530 = vshrl.u32 %v3529, 7
    %v3531 = vsub.s32 0, %v3530
    %v3532 = vrot.slane %v3202, %v3531
    %v3533 = vlaneseq
    %v3534 = vshrl.u32 %v3533, 7
    %v3535 = vsub.s32 0, %v3534
    %v3536 = vrot.slane %v3216, %v3535
    %v3537 = vlaneseq
    %v3538 = vshrl.u32 %v3537, 7
    %v3539 = vsub.s32 0, %v3538
    %v3540 = vrot.slane %v3218, %v3539
    %v3541 = vlaneseq
    %v3542 = vshrl.u32 %v3541, 7
    %v3543 = vsub.s32 0, %v3542
    %v3544 = vrot.slane %v3220, %v3543
    %v3545 = vlaneseq
    %v3546 = vshrl.u32 %v3545, 7
    %v3547 = vsub.s32 0, %v3546
    %v3548 = vrot.slane %v3244, %v3547
    %v3549 = vlaneseq
    %v3550 = vshrl.u32 %v3549, 7
    %v3551 = vsub.s32 0, %v3550
    %v3552 = vrot.slane %v3258, %v3551
    %v3553 = vlaneseq
    %v3554 = vshrl.u32 %v3553, 7
    %v3555 = vsub.s32 0, %v3554
    %v3556 = vrot.slane %v3266, %v3555
    %v3557 = vlaneseq
    %v3558 = vshrl.u32 %v3557, 7
    %v3559 = vsub.s32 0, %v3558
    %v3560 = vrot.slane %v3268, %v3559
    %v3561 = vlaneseq
    %v3562 = vshrl.u32 %v3561, 7
    %v3563 = vsub.s32 0, %v3562
    %v3564 = vrot.slane %v3251, %v3563
    %v3565 = vlaneseq
    %v3566 = vshrl.u32 %v3565, 7
    %v3567 = vsub.s32 0, %v3566
    %v3568 = vrot.slane %v3265, %v3567
    %v3569 = vlaneseq
    %v3570 = vshrl.u32 %v3569, 7
    %v3571 = vsub.s32 0, %v3570
    %v3572 = vrot.slane %v3267, %v3571
    %v3573 = vlaneseq
    %v3574 = vshrl.u32 %v3573, 7
    %v3575 = vsub.s32 0, %v3574
    %v3576 = vrot.slane %v3269, %v3575
    %v3577 = vlaneseq
    %v3578 = vshrl.u32 %v3577, 7
    %v3579 = vsub.s32 0, %v3578
    %v3580 = vrot.slane %v3293, %v3579
    %v3581 = vlaneseq
    %v3582 = vshrl.u32 %v3581, 7
    %v3583 = vsub.s32 0, %v3582
    %v3584 = vrot.slane %v3307, %v3583
    %v3585 = vlaneseq
    %v3586 = vshrl.u32 %v3585, 7
    %v3587 = vsub.s32 0, %v3586
    %v3588 = vrot.slane %v3315, %v3587
    %v3589 = vlaneseq
    %v3590 = vshrl.u32 %v3589, 7
    %v3591 = vsub.s32 0, %v3590
    %v3592 = vrot.slane %v3317, %v3591
    %v3593 = vlaneseq
    %v3594 = vshrl.u32 %v3593, 7
    %v3595 = vsub.s32 0, %v3594
    %v3596 = vrot.slane %v3300, %v3595
    %v3597 = vlaneseq
    %v3598 = vshrl.u32 %v3597, 7
    %v3599 = vsub.s32 0, %v3598
    %v3600 = vrot.slane %v3314, %v3599
    %v3601 = vlaneseq
    %v3602 = vshrl.u32 %v3601, 7
    %v3603 = vsub.s32 0, %v3602
    %v3604 = vrot.slane %v3316, %v3603
    %v3605 = vlaneseq
    %v3606 = vshrl.u32 %v3605, 7
    %v3607 = vsub.s32 0, %v3606
    %v3608 = vrot.slane %v3318, %v3607
    %v3609 = vlaneseq
    %v3610 = vshrl.u32 %v3609, 7
    %v3611 = vsub.s32 0, %v3610
    %v3612 = vrot.slane %v3342, %v3611
    %v3613 = vlaneseq
    %v3614 = vshrl.u32 %v3613, 7
    %v3615 = vsub.s32 0, %v3614
    %v3616 = vrot.slane %v3356, %v3615
    %v3617 = vlaneseq
    %v3618 = vshrl.u32 %v3617, 7
    %v3619 = vsub.s32 0, %v3618
    %v3620 = vrot.slane %v3364, %v3619
    %v3621 = vlaneseq
    %v3622 = vshrl.u32 %v3621, 7
    %v3623 = vsub.s32 0, %v3622
    %v3624 = vrot.slane %v3366, %v3623
    %v3625 = vlaneseq
    %v3626 = vshrl.u32 %v3625, 7
    %v3627 = vsub.s32 0, %v3626
    %v3628 = vrot.slane %v3349, %v3627
    %v3629 = vlaneseq
    %v3630 = vshrl.u32 %v3629, 7
    %v3631 = vsub.s32 0, %v3630
    %v3632 = vrot.slane %v3363, %v3631
    %v3633 = vlaneseq
    %v3634 = vshrl.u32 %v3633, 7
    %v3635 = vsub.s32 0, %v3634
    %v3636 = vrot.slane %v3365, %v3635
    %v3637 = vlaneseq
    %v3638 = vshrl.u32 %v3637, 7
    %v3639 = vsub.s32 0, %v3638
    %v3640 = vrot.slane %v3367, %v3639
    %v3641 = vlaneseq
    %v3642 = vshrl.u32 %v3641, 7
    %v3643 = vsub.s32 0, %v3642
    %v3644 = vrot.slane %v3391, %v3643
    %v3645 = vlaneseq
    %v3646 = vshrl.u32 %v3645, 7
    %v3647 = vsub.s32 0, %v3646
    %v3648 = vrot.slane %v3405, %v3647
    %v3649 = vlaneseq
    %v3650 = vshrl.u32 %v3649, 7
    %v3651 = vsub.s32 0, %v3650
    %v3652 = vrot.slane %v3413, %v3651
    %v3653 = vlaneseq
    %v3654 = vshrl.u32 %v3653, 7
    %v3655 = vsub.s32 0, %v3654
    %v3656 = vrot.slane %v3415, %v3655
    %v3657 = vlaneseq
    %v3658 = vshrl.u32 %v3657, 7
    %v3659 = vsub.s32 0, %v3658
    %v3660 = vrot.slane %v3398, %v3659
    %v3661 = vlaneseq
    %v3662 = vshrl.u32 %v3661, 7
    %v3663 = vsub.s32 0, %v3662
    %v3664 = vrot.slane %v3412, %v3663
    %v3665 = vlaneseq
    %v3666 = vshrl.u32 %v3665, 7
    %v3667 = vsub.s32 0, %v3666
    %v3668 = vrot.slane %v3414, %v3667
    %v3669 = vlaneseq
    %v3670 = vshrl.u32 %v3669, 7
    %v3671 = vsub.s32 0, %v3670
    %v3672 = vrot.slane %v3416, %v3671
    %v3737 = vadd.f32 %v3420, %v2979
    %v3738 = vadd.f32 %v3424, %v2979
    %v3739 = vadd.f32 %v3428, %v2979
    %v3740 = vadd.f32 %v3432, %v2979
    %v3741 = vadd.f32 %v3436, %v2979
    %v3742 = vadd.f32 %v3440, %v2979
    %v3743 = vadd.f32 %v3444, %v2979
    %v3744 = vadd.f32 %v3448, %v2979
    %v3745 = vadd.f32 %v3452, %v2984
    %v3746 = vadd.f32 %v3456, %v2984
    %v3747 = vadd.f32 %v3460, %v2984
    %v3748 = vadd.f32 %v3464, %v2984
    %v3749 = vadd.f32 %v3468, %v2984
    %v3750 = vadd.f32 %v3472, %v2984
    %v3751 = vadd.f32 %v3476, %v2984
    %v3752 = vadd.f32 %v3480, %v2984
    %v3753 = vadd.f32 %v3484, %v2989
    %v3754 = vadd.f32 %v3488, %v2989
    %v3755 = vadd.f32 %v3492, %v2989
    %v3756 = vadd.f32 %v3496, %v2989
    %v3757 = vadd.f32 %v3500, %v2989
    %v3758 = vadd.f32 %v3504, %v2989
    %v3759 = vadd.f32 %v3508, %v2989
    %v3760 = vadd.f32 %v3512, %v2989
    %v3761 = vadd.f32 %v3516, %v2994
    %v3762 = vadd.f32 %v3520, %v2994
    %v3763 = vadd.f32 %v3524, %v2994
    %v3764 = vadd.f32 %v3528, %v2994
    %v3765 = vadd.f32 %v3532, %v2994
    %v3766 = vadd.f32 %v3536, %v2994
    %v3767 = vadd.f32 %v3540, %v2994
    %v3768 = vadd.f32 %v3544, %v2994
    %v3769 = vadd.f32 %v3548, %v2999
    %v3770 = vadd.f32 %v3552, %v2999
    %v3771 = vadd.f32 %v3556, %v2999
    %v3772 = vadd.f32 %v3560, %v2999
    %v3773 = vadd.f32 %v3564, %v2999
    %v3774 = vadd.f32 %v3568, %v2999
    %v3775 = vadd.f32 %v3572, %v2999
    %v3776 = vadd.f32 %v3576, %v2999
    %v3777 = vadd.f32 %v3580, %v3004
    %v3778 = vadd.f32 %v3584, %v3004
    %v3779 = vadd.f32 %v3588, %v3004
    %v3780 = vadd.f32 %v3592, %v3004
    %v3781 = vadd.f32 %v3596, %v3004
    %v3782 = vadd.f32 %v3600, %v3004
    %v3783 = vadd.f32 %v3604, %v3004
    %v3784 = vadd.f32 %v3608, %v3004
    %v3785 = vadd.f32 %v3612, %v3009
    %v3786 = vadd.f32 %v3616, %v3009
    %v3787 = vadd.f32 %v3620, %v3009
    %v3788 = vadd.f32 %v3624, %v3009
    %v3789 = vadd.f32 %v3628, %v3009
    %v3790 = vadd.f32 %v3632, %v3009
    %v3791 = vadd.f32 %v3636, %v3009
    %v3792 = vadd.f32 %v3640, %v3009
    %v3793 = vadd.f32 %v3644, %v3014
    %v3794 = vadd.f32 %v3648, %v3014
    %v3795 = vadd.f32 %v3652, %v3014
    %v3796 = vadd.f32 %v3656, %v3014
    %v3797 = vadd.f32 %v3660, %v3014
    %v3798 = vadd.f32 %v3664, %v3014
    %v3799 = vadd.f32 %v3668, %v3014
    %v3800 = vadd.f32 %v3672, %v3014
    %v3801 = vadd.f32 %v3737, %v1490
    %v3802 = vadd.f32 %v3738, %v1490
    %v3803 = vadd.f32 %v3739, %v1490
    %v3804 = vadd.f32 %v3740, %v1490
    %v3805 = vadd.f32 %v3741, %v1490
    %v3806 = vadd.f32 %v3742, %v1490
    %v3807 = vadd.f32 %v3743, %v1490
    %v3808 = vadd.f32 %v3744, %v1490
    %v3809 = vadd.f32 %v3745, %v1490
    %v3810 = vadd.f32 %v3746, %v1490
    %v3811 = vadd.f32 %v3747, %v1490
    %v3812 = vadd.f32 %v3748, %v1490
    %v3813 = vadd.f32 %v3749, %v1490
    %v3814 = vadd.f32 %v3750, %v1490
    %v3815 = vadd.f32 %v3751, %v1490
    %v3816 = vadd.f32 %v3752, %v1490
    %v3817 = vadd.f32 %v3753, %v1490
    %v3818 = vadd.f32 %v3754, %v1490
    %v3819 = vadd.f32 %v3755, %v1490
    %v3820 = vadd.f32 %v3756, %v1490
    %v3821 = vadd.f32 %v3757, %v1490
    %v3822 = vadd.f32 %v3758, %v1490
    %v3823 = vadd.f32 %v3759, %v1490
    %v3824 = vadd.f32 %v3760, %v1490
    %v3825 = vadd.f32 %v3761, %v1490
    %v3826 = vadd.f32 %v3762, %v1490
    %v3827 = vadd.f32 %v3763, %v1490
    %v3828 = vadd.f32 %v3764, %v1490
    %v3829 = vadd.f32 %v3765, %v1490
    %v3830 = vadd.f32 %v3766, %v1490
    %v3831 = vadd.f32 %v3767, %v1490
    %v3832 = vadd.f32 %v3768, %v1490
    %v3833 = vadd.f32 %v3769, %v1490
    %v3834 = vadd.f32 %v3770, %v1490
    %v3835 = vadd.f32 %v3771, %v1490
    %v3836 = vadd.f32 %v3772, %v1490
    %v3837 = vadd.f32 %v3773, %v1490
    %v3838 = vadd.f32 %v3774, %v1490
    %v3839 = vadd.f32 %v3775, %v1490
    %v3840 = vadd.f32 %v3776, %v1490
    %v3841 = vadd.f32 %v3777, %v1490
    %v3842 = vadd.f32 %v3778, %v1490
    %v3843 = vadd.f32 %v3779, %v1490
    %v3844 = vadd.f32 %v3780, %v1490
    %v3845 = vadd.f32 %v3781, %v1490
    %v3846 = vadd.f32 %v3782, %v1490
    %v3847 = vadd.f32 %v3783, %v1490
    %v3848 = vadd.f32 %v3784, %v1490
    %v3849 = vadd.f32 %v3785, %v1490
    %v3850 = vadd.f32 %v3786, %v1490
    %v3851 = vadd.f32 %v3787, %v1490
    %v3852 = vadd.f32 %v3788, %v1490
    %v3853 = vadd.f32 %v3789, %v1490
    %v3854 = vadd.f32 %v3790, %v1490
    %v3855 = vadd.f32 %v3791, %v1490
    %v3856 = vadd.f32 %v3792, %v1490
    %v3857 = vadd.f32 %v3793, %v1490
    %v3858 = vadd.f32 %v3794, %v1490
    %v3859 = vadd.f32 %v3795, %v1490
    %v3860 = vadd.f32 %v3796, %v1490
    %v3861 = vadd.f32 %v3797, %v1490
    %v3862 = vadd.f32 %v3798, %v1490
    %v3863 = vadd.f32 %v3799, %v1490
    %v3864 = vadd.f32 %v3800, %v1490
    %v3865 = vmax.f32 %v3801, 0.0
    %v3866 = vmax.f32 %v3802, 0.0
    %v3867 = vmax.f32 %v3803, 0.0
    %v3868 = vmax.f32 %v3804, 0.0
    %v3869 = vmax.f32 %v3805, 0.0
    %v3870 = vmax.f32 %v3806, 0.0
    %v3871 = vmax.f32 %v3807, 0.0
    %v3872 = vmax.f32 %v3808, 0.0
    %v3873 = vmax.f32 %v3809, 0.0
    %v3874 = vmax.f32 %v3810, 0.0
    %v3875 = vmax.f32 %v3811, 0.0
    %v3876 = vmax.f32 %v3812, 0.0
    %v3877 = vmax.f32 %v3813, 0.0
    %v3878 = vmax.f32 %v3814, 0.0
    %v3879 = vmax.f32 %v3815, 0.0
    %v3880 = vmax.f32 %v3816, 0.0
    %v3881 = vmax.f32 %v3817, 0.0
    %v3882 = vmax.f32 %v3818, 0.0
    %v3883 = vmax.f32 %v3819, 0.0
    %v3884 = vmax.f32 %v3820, 0.0
    %v3885 = vmax.f32 %v3821, 0.0
    %v3886 = vmax.f32 %v3822, 0.0
    %v3887 = vmax.f32 %v3823, 0.0
    %v3888 = vmax.f32 %v3824, 0.0
    %v3889 = vmax.f32 %v3825, 0.0
    %v3890 = vmax.f32 %v3826, 0.0
    %v3891 = vmax.f32 %v3827, 0.0
    %v3892 = vmax.f32 %v3828, 0.0
    %v3893 = vmax.f32 %v3829, 0.0
    %v3894 = vmax.f32 %v3830, 0.0
    %v3895 = vmax.f32 %v3831, 0.0
    %v3896 = vmax.f32 %v3832, 0.0
    %v3897 = vmax.f32 %v3833, 0.0
    %v3898 = vmax.f32 %v3834, 0.0
    %v3899 = vmax.f32 %v3835, 0.0
    %v3900 = vmax.f32 %v3836, 0.0
    %v3901 = vmax.f32 %v3837, 0.0
    %v3902 = vmax.f32 %v3838, 0.0
    %v3903 = vmax.f32 %v3839, 0.0
    %v3904 = vmax.f32 %v3840, 0.0
    %v3905 = vmax.f32 %v3841, 0.0
    %v3906 = vmax.f32 %v3842, 0.0
    %v3907 = vmax.f32 %v3843, 0.0
    %v3908 = vmax.f32 %v3844, 0.0
    %v3909 = vmax.f32 %v3845, 0.0
    %v3910 = vmax.f32 %v3846, 0.0
    %v3911 = vmax.f32 %v3847, 0.0
    %v3912 = vmax.f32 %v3848, 0.0
    %v3913 = vmax.f32 %v3849, 0.0
    %v3914 = vmax.f32 %v3850, 0.0
    %v3915 = vmax.f32 %v3851, 0.0
    %v3916 = vmax.f32 %v3852, 0.0
    %v3917 = vmax.f32 %v3853, 0.0
    %v3918 = vmax.f32 %v3854, 0.0
    %v3919 = vmax.f32 %v3855, 0.0
    %v3920 = vmax.f32 %v3856, 0.0
    %v3921 = vmax.f32 %v3857, 0.0
    %v3922 = vmax.f32 %v3858, 0.0
    %v3923 = vmax.f32 %v3859, 0.0
    %v3924 = vmax.f32 %v3860, 0.0
    %v3925 = vmax.f32 %v3861, 0.0
    %v3926 = vmax.f32 %v3862, 0.0
    %v3927 = vmax.f32 %v3863, 0.0
    %v3928 = vmax.f32 %v3864, 0.0
    %3929 = vmatprep.subr.mxu0 0.0
    %3930 = vmatpush1.msra.mxu0 %v1620
    %3931 = vmatprep.subr.mxu0 0.0
    %3932 = vmatpush1.msra.mxu0 %v1621
    %3933 = vmatprep.subr.mxu0 0.0
    %3934 = vmatpush1.msra.mxu0 %v1622
    %3935 = vmatprep.subr.mxu0 0.0
    %3936 = vmatpush1.msra.mxu0 %v1623
    %3937 = vmatprep.subr.mxu0 0.0
    %3938 = vmatpush1.msra.mxu0 %v1624
    %3939 = vmatprep.subr.mxu0 0.0
    %3940 = vmatpush1.msra.mxu0 %v1625
    %3941 = vmatprep.subr.mxu0 0.0
    %3942 = vmatpush1.msra.mxu0 %v1626
    %3943 = vmatprep.subr.mxu0 0.0
    %3944 = vmatpush1.msra.mxu0 %v1627
    %3945 = vmatprep.subr.mxu0 0.0
    %3946 = vmatpush1.msra.mxu0 %v1628
    %3947 = vmatprep.subr.mxu0 0.0
    %3948 = vmatpush1.msra.mxu0 %v1629
    %3949 = vmatprep.subr.mxu0 0.0
    %3950 = vmatpush1.msra.mxu0 %v1630
    %3951 = vmatprep.subr.mxu0 0.0
    %3952 = vmatpush1.msra.mxu0 %v1631
    %3953 = vmatprep.subr.mxu0 0.0
    %3954 = vmatpush1.msra.mxu0 %v1632
    %3955 = vmatprep.subr.mxu0 0.0
    %3956 = vmatpush1.msra.mxu0 %v1633
    %3957 = vmatprep.subr.mxu0 0.0
    %3958 = vmatpush1.msra.mxu0 %v1634
    %3959 = vmatprep.subr.mxu0 0.0
    %3960 = vmatpush1.msra.mxu0 %v1635
    %3961 = vmatprep.subr.mxu0 0.0
    %3962 = vmatpush1.msra.mxu0 0.0
    %3963 = vmatprep.subr.mxu0 0.0
    %3964 = vmatpush1.msra.mxu0 0.0
    %3965 = vmatprep.subr.mxu0 0.0
    %3966 = vmatpush1.msra.mxu0 0.0
    %3967 = vmatprep.subr.mxu0 0.0
    %3968 = vmatpush1.msra.mxu0 0.0
    %3969 = vmatprep.subr.mxu0 0.0
    %3970 = vmatpush1.msra.mxu0 0.0
    %3971 = vmatprep.subr.mxu0 0.0
    %3972 = vmatpush1.msra.mxu0 0.0
    %3973 = vmatprep.subr.mxu0 0.0
    %3974 = vmatpush1.msra.mxu0 0.0
    %3975 = vmatprep.subr.mxu0 0.0
    %3976 = vmatpush1.msra.mxu0 0.0
    %3977 = vmatprep.subr.mxu0 0.0
    %3978 = vmatpush1.msra.mxu0 0.0
    %3979 = vmatprep.subr.mxu0 0.0
    %3980 = vmatpush1.msra.mxu0 0.0
    %3981 = vmatprep.subr.mxu0 0.0
    %3982 = vmatpush1.msra.mxu0 0.0
    %3983 = vmatprep.subr.mxu0 0.0
    %3984 = vmatpush1.msra.mxu0 0.0
    %3985 = vmatprep.subr.mxu0 0.0
    %3986 = vmatpush1.msra.mxu0 0.0
    %3987 = vmatprep.subr.mxu0 0.0
    %3988 = vmatpush1.msra.mxu0 0.0
    %3989 = vmatprep.subr.mxu0 0.0
    %3990 = vmatpush1.msra.mxu0 0.0
    %3991 = vmatprep.subr.mxu0 0.0
    %3992 = vmatpush1.msra.mxu0 0.0
    %3993 = vmatprep.mubr.f32.mxu0 0.0
    %3994 = vmatmul.mubr.f32.gmra.mrb[0].mxu0 %v3865
    %v3995 = vpop.f32.mrb[0].mxu0
    %v3996 = vadd.f32 %v1640, %v3995
    %v3997 = vpop.f32.mrb[0].mxu0
    %3998 = vmatprep.mubr.f32.mxu0 0.0
    %3999 = vmatmul.mubr.f32.gmra.mrb[0].mxu0 %v3866
    %v4000 = vpop.f32.mrb[0].mxu0
    %v4001 = vadd.f32 %v1640, %v4000
    %v4002 = vpop.f32.mrb[0].mxu0
    %4003 = vmatprep.mubr.f32.mxu0 0.0
    %4004 = vmatmul.mubr.f32.gmra.mrb[0].mxu0 %v3867
    %v4005 = vpop.f32.mrb[0].mxu0
    %v4006 = vadd.f32 %v1640, %v4005
    %v4007 = vpop.f32.mrb[0].mxu0
    %4008 = vmatprep.mubr.f32.mxu0 0.0
    %4009 = vmatmul.mubr.f32.gmra.mrb[0].mxu0 %v3868
    %v4010 = vpop.f32.mrb[0].mxu0
    %v4011 = vadd.f32 %v1640, %v4010
    %v4012 = vpop.f32.mrb[0].mxu0
    %4013 = vmatprep.mubr.f32.mxu0 0.0
    %4014 = vmatmul.mubr.f32.gmra.mrb[0].mxu0 %v3869
    %v4015 = vpop.f32.mrb[0].mxu0
    %v4016 = vadd.f32 %v1640, %v4015
    %v4017 = vpop.f32.mrb[0].mxu0
    %4018 = vmatprep.mubr.f32.mxu0 0.0
    %4019 = vmatmul.mubr.f32.gmra.mrb[0].mxu0 %v3870
    %v4020 = vpop.f32.mrb[0].mxu0
    %v4021 = vadd.f32 %v1640, %v4020
    %v4022 = vpop.f32.mrb[0].mxu0
    %4023 = vmatprep.mubr.f32.mxu0 0.0
    %4024 = vmatmul.mubr.f32.gmra.mrb[0].mxu0 %v3871
    %v4025 = vpop.f32.mrb[0].mxu0
    %v4026 = vadd.f32 %v1640, %v4025
    %v4027 = vpop.f32.mrb[0].mxu0
    %4028 = vmatprep.mubr.f32.mxu0 0.0
    %4029 = vmatmul.mubr.f32.gmra.mrb[0].mxu0 %v3872
    %v4030 = vpop.f32.mrb[0].mxu0
    %v4031 = vadd.f32 %v1640, %v4030
    %v4032 = vpop.f32.mrb[0].mxu0
    %4033 = vmatprep.mubr.f32.mxu0 0.0
    %4034 = vmatmul.mubr.f32.gmra.mrb[0].mxu0 %v3873
    %v4035 = vpop.f32.mrb[0].mxu0
    %v4036 = vadd.f32 %v1640, %v4035
    %v4037 = vpop.f32.mrb[0].mxu0
    %4038 = vmatprep.mubr.f32.mxu0 0.0
    %4039 = vmatmul.mubr.f32.gmra.mrb[0].mxu0 %v3874
    %v4040 = vpop.f32.mrb[0].mxu0
    %v4041 = vadd.f32 %v1640, %v4040
    %v4042 = vpop.f32.mrb[0].mxu0
    %4043 = vmatprep.mubr.f32.mxu0 0.0
    %4044 = vmatmul.mubr.f32.gmra.mrb[0].mxu0 %v3875
    %v4045 = vpop.f32.mrb[0].mxu0
    %v4046 = vadd.f32 %v1640, %v4045
    %v4047 = vpop.f32.mrb[0].mxu0
    %4048 = vmatprep.mubr.f32.mxu0 0.0
    %4049 = vmatmul.mubr.f32.gmra.mrb[0].mxu0 %v3876
    %v4050 = vpop.f32.mrb[0].mxu0
    %v4051 = vadd.f32 %v1640, %v4050
    %v4052 = vpop.f32.mrb[0].mxu0
    %4053 = vmatprep.mubr.f32.mxu0 0.0
    %4054 = vmatmul.mubr.f32.gmra.mrb[0].mxu0 %v3877
    %v4055 = vpop.f32.mrb[0].mxu0
    %v4056 = vadd.f32 %v1640, %v4055
    %v4057 = vpop.f32.mrb[0].mxu0
    %4058 = vmatprep.mubr.f32.mxu0 0.0
    %4059 = vmatmul.mubr.f32.gmra.mrb[0].mxu0 %v3878
    %v4060 = vpop.f32.mrb[0].mxu0
    %v4061 = vadd.f32 %v1640, %v4060
    %v4062 = vpop.f32.mrb[0].mxu0
    %4063 = vmatprep.mubr.f32.mxu0 0.0
    %4064 = vmatmul.mubr.f32.gmra.mrb[0].mxu0 %v3879
    %v4065 = vpop.f32.mrb[0].mxu0
    %v4066 = vadd.f32 %v1640, %v4065
    %v4067 = vpop.f32.mrb[0].mxu0
    %4068 = vmatprep.mubr.f32.mxu0 0.0
    %4069 = vmatmul.mubr.f32.gmra.mrb[0].mxu0 %v3880
    %v4070 = vpop.f32.mrb[0].mxu0
    %v4071 = vadd.f32 %v1640, %v4070
    %v4072 = vpop.f32.mrb[0].mxu0
    %4073 = vmatprep.mubr.f32.mxu0 0.0
    %4074 = vmatmul.mubr.f32.gmra.mrb[0].mxu0 %v3881
    %v4075 = vpop.f32.mrb[0].mxu0
    %v4076 = vadd.f32 %v1640, %v4075
    %v4077 = vpop.f32.mrb[0].mxu0
    %4078 = vmatprep.mubr.f32.mxu0 0.0
    %4079 = vmatmul.mubr.f32.gmra.mrb[0].mxu0 %v3882
    %v4080 = vpop.f32.mrb[0].mxu0
    %v4081 = vadd.f32 %v1640, %v4080
    %v4082 = vpop.f32.mrb[0].mxu0
    %4083 = vmatprep.mubr.f32.mxu0 0.0
    %4084 = vmatmul.mubr.f32.gmra.mrb[0].mxu0 %v3883
    %v4085 = vpop.f32.mrb[0].mxu0
    %v4086 = vadd.f32 %v1640, %v4085
    %v4087 = vpop.f32.mrb[0].mxu0
    %4088 = vmatprep.mubr.f32.mxu0 0.0
    %4089 = vmatmul.mubr.f32.gmra.mrb[0].mxu0 %v3884
    %v4090 = vpop.f32.mrb[0].mxu0
    %v4091 = vadd.f32 %v1640, %v4090
    %v4092 = vpop.f32.mrb[0].mxu0
    %4093 = vmatprep.mubr.f32.mxu0 0.0
    %4094 = vmatmul.mubr.f32.gmra.mrb[0].mxu0 %v3885
    %v4095 = vpop.f32.mrb[0].mxu0
    %v4096 = vadd.f32 %v1640, %v4095
    %v4097 = vpop.f32.mrb[0].mxu0
    %4098 = vmatprep.mubr.f32.mxu0 0.0
    %4099 = vmatmul.mubr.f32.gmra.mrb[0].mxu0 %v3886
    %v4100 = vpop.f32.mrb[0].mxu0
    %v4101 = vadd.f32 %v1640, %v4100
    %v4102 = vpop.f32.mrb[0].mxu0
    %4103 = vmatprep.mubr.f32.mxu0 0.0
    %4104 = vmatmul.mubr.f32.gmra.mrb[0].mxu0 %v3887
    %v4105 = vpop.f32.mrb[0].mxu0
    %v4106 = vadd.f32 %v1640, %v4105
    %v4107 = vpop.f32.mrb[0].mxu0
    %4108 = vmatprep.mubr.f32.mxu0 0.0
    %4109 = vmatmul.mubr.f32.gmra.mrb[0].mxu0 %v3888
    %v4110 = vpop.f32.mrb[0].mxu0
    %v4111 = vadd.f32 %v1640, %v4110
    %v4112 = vpop.f32.mrb[0].mxu0
    %4113 = vmatprep.mubr.f32.mxu0 0.0
    %4114 = vmatmul.mubr.f32.gmra.mrb[0].mxu0 %v3889
    %v4115 = vpop.f32.mrb[0].mxu0
    %v4116 = vadd.f32 %v1640, %v4115
    %v4117 = vpop.f32.mrb[0].mxu0
    %4118 = vmatprep.mubr.f32.mxu0 0.0
    %4119 = vmatmul.mubr.f32.gmra.mrb[0].mxu0 %v3890
    %v4120 = vpop.f32.mrb[0].mxu0
    %v4121 = vadd.f32 %v1640, %v4120
    %v4122 = vpop.f32.mrb[0].mxu0
    %4123 = vmatprep.mubr.f32.mxu0 0.0
    %4124 = vmatmul.mubr.f32.gmra.mrb[0].mxu0 %v3891
    %v4125 = vpop.f32.mrb[0].mxu0
    %v4126 = vadd.f32 %v1640, %v4125
    %v4127 = vpop.f32.mrb[0].mxu0
    %4128 = vmatprep.mubr.f32.mxu0 0.0
    %4129 = vmatmul.mubr.f32.gmra.mrb[0].mxu0 %v3892
    %v4130 = vpop.f32.mrb[0].mxu0
    %v4131 = vadd.f32 %v1640, %v4130
    %v4132 = vpop.f32.mrb[0].mxu0
    %4133 = vmatprep.mubr.f32.mxu0 0.0
    %4134 = vmatmul.mubr.f32.gmra.mrb[0].mxu0 %v3893
    %v4135 = vpop.f32.mrb[0].mxu0
    %v4136 = vadd.f32 %v1640, %v4135
    %v4137 = vpop.f32.mrb[0].mxu0
    %4138 = vmatprep.mubr.f32.mxu0 0.0
    %4139 = vmatmul.mubr.f32.gmra.mrb[0].mxu0 %v3894
    %v4140 = vpop.f32.mrb[0].mxu0
    %v4141 = vadd.f32 %v1640, %v4140
    %v4142 = vpop.f32.mrb[0].mxu0
    %4143 = vmatprep.mubr.f32.mxu0 0.0
    %4144 = vmatmul.mubr.f32.gmra.mrb[0].mxu0 %v3895
    %v4145 = vpop.f32.mrb[0].mxu0
    %v4146 = vadd.f32 %v1640, %v4145
    %v4147 = vpop.f32.mrb[0].mxu0
    %4148 = vmatprep.mubr.f32.mxu0 0.0
    %4149 = vmatmul.mubr.f32.gmra.mrb[0].mxu0 %v3896
    %v4150 = vpop.f32.mrb[0].mxu0
    %v4151 = vadd.f32 %v1640, %v4150
    %v4152 = vpop.f32.mrb[0].mxu0
    %4153 = vmatprep.mubr.f32.mxu0 0.0
    %4154 = vmatmul.mubr.f32.gmra.mrb[0].mxu0 %v3897
    %v4155 = vpop.f32.mrb[0].mxu0
    %v4156 = vadd.f32 %v1640, %v4155
    %v4157 = vpop.f32.mrb[0].mxu0
    %4158 = vmatprep.mubr.f32.mxu0 0.0
    %4159 = vmatmul.mubr.f32.gmra.mrb[0].mxu0 %v3898
    %v4160 = vpop.f32.mrb[0].mxu0
    %v4161 = vadd.f32 %v1640, %v4160
    %v4162 = vpop.f32.mrb[0].mxu0
    %4163 = vmatprep.mubr.f32.mxu0 0.0
    %4164 = vmatmul.mubr.f32.gmra.mrb[0].mxu0 %v3899
    %v4165 = vpop.f32.mrb[0].mxu0
    %v4166 = vadd.f32 %v1640, %v4165
    %v4167 = vpop.f32.mrb[0].mxu0
    %4168 = vmatprep.mubr.f32.mxu0 0.0
    %4169 = vmatmul.mubr.f32.gmra.mrb[0].mxu0 %v3900
    %v4170 = vpop.f32.mrb[0].mxu0
    %v4171 = vadd.f32 %v1640, %v4170
    %v4172 = vpop.f32.mrb[0].mxu0
    %4173 = vmatprep.mubr.f32.mxu0 0.0
    %4174 = vmatmul.mubr.f32.gmra.mrb[0].mxu0 %v3901
    %v4175 = vpop.f32.mrb[0].mxu0
    %v4176 = vadd.f32 %v1640, %v4175
    %v4177 = vpop.f32.mrb[0].mxu0
    %4178 = vmatprep.mubr.f32.mxu0 0.0
    %4179 = vmatmul.mubr.f32.gmra.mrb[0].mxu0 %v3902
    %v4180 = vpop.f32.mrb[0].mxu0
    %v4181 = vadd.f32 %v1640, %v4180
    %v4182 = vpop.f32.mrb[0].mxu0
    %4183 = vmatprep.mubr.f32.mxu0 0.0
    %4184 = vmatmul.mubr.f32.gmra.mrb[0].mxu0 %v3903
    %v4185 = vpop.f32.mrb[0].mxu0
    %v4186 = vadd.f32 %v1640, %v4185
    %v4187 = vpop.f32.mrb[0].mxu0
    %4188 = vmatprep.mubr.f32.mxu0 0.0
    %4189 = vmatmul.mubr.f32.gmra.mrb[0].mxu0 %v3904
    %v4190 = vpop.f32.mrb[0].mxu0
    %v4191 = vadd.f32 %v1640, %v4190
    %v4192 = vpop.f32.mrb[0].mxu0
    %4193 = vmatprep.mubr.f32.mxu0 0.0
    %4194 = vmatmul.mubr.f32.gmra.mrb[0].mxu0 %v3905
    %v4195 = vpop.f32.mrb[0].mxu0
    %v4196 = vadd.f32 %v1640, %v4195
    %v4197 = vpop.f32.mrb[0].mxu0
    %4198 = vmatprep.mubr.f32.mxu0 0.0
    %4199 = vmatmul.mubr.f32.gmra.mrb[0].mxu0 %v3906
    %v4200 = vpop.f32.mrb[0].mxu0
    %v4201 = vadd.f32 %v1640, %v4200
    %v4202 = vpop.f32.mrb[0].mxu0
    %4203 = vmatprep.mubr.f32.mxu0 0.0
    %4204 = vmatmul.mubr.f32.gmra.mrb[0].mxu0 %v3907
    %v4205 = vpop.f32.mrb[0].mxu0
    %v4206 = vadd.f32 %v1640, %v4205
    %v4207 = vpop.f32.mrb[0].mxu0
    %4208 = vmatprep.mubr.f32.mxu0 0.0
    %4209 = vmatmul.mubr.f32.gmra.mrb[0].mxu0 %v3908
    %v4210 = vpop.f32.mrb[0].mxu0
    %v4211 = vadd.f32 %v1640, %v4210
    %v4212 = vpop.f32.mrb[0].mxu0
    %4213 = vmatprep.mubr.f32.mxu0 0.0
    %4214 = vmatmul.mubr.f32.gmra.mrb[0].mxu0 %v3909
    %v4215 = vpop.f32.mrb[0].mxu0
    %v4216 = vadd.f32 %v1640, %v4215
    %v4217 = vpop.f32.mrb[0].mxu0
    %4218 = vmatprep.mubr.f32.mxu0 0.0
    %4219 = vmatmul.mubr.f32.gmra.mrb[0].mxu0 %v3910
    %v4220 = vpop.f32.mrb[0].mxu0
    %v4221 = vadd.f32 %v1640, %v4220
    %v4222 = vpop.f32.mrb[0].mxu0
    %4223 = vmatprep.mubr.f32.mxu0 0.0
    %4224 = vmatmul.mubr.f32.gmra.mrb[0].mxu0 %v3911
    %v4225 = vpop.f32.mrb[0].mxu0
    %v4226 = vadd.f32 %v1640, %v4225
    %v4227 = vpop.f32.mrb[0].mxu0
    %4228 = vmatprep.mubr.f32.mxu0 0.0
    %4229 = vmatmul.mubr.f32.gmra.mrb[0].mxu0 %v3912
    %v4230 = vpop.f32.mrb[0].mxu0
    %v4231 = vadd.f32 %v1640, %v4230
    %v4232 = vpop.f32.mrb[0].mxu0
    %4233 = vmatprep.mubr.f32.mxu0 0.0
    %4234 = vmatmul.mubr.f32.gmra.mrb[0].mxu0 %v3913
    %v4235 = vpop.f32.mrb[0].mxu0
    %v4236 = vadd.f32 %v1640, %v4235
    %v4237 = vpop.f32.mrb[0].mxu0
    %4238 = vmatprep.mubr.f32.mxu0 0.0
    %4239 = vmatmul.mubr.f32.gmra.mrb[0].mxu0 %v3914
    %v4240 = vpop.f32.mrb[0].mxu0
    %v4241 = vadd.f32 %v1640, %v4240
    %v4242 = vpop.f32.mrb[0].mxu0
    %4243 = vmatprep.mubr.f32.mxu0 0.0
    %4244 = vmatmul.mubr.f32.gmra.mrb[0].mxu0 %v3915
    %v4245 = vpop.f32.mrb[0].mxu0
    %v4246 = vadd.f32 %v1640, %v4245
    %v4247 = vpop.f32.mrb[0].mxu0
    %4248 = vmatprep.mubr.f32.mxu0 0.0
    %4249 = vmatmul.mubr.f32.gmra.mrb[0].mxu0 %v3916
    %v4250 = vpop.f32.mrb[0].mxu0
    %v4251 = vadd.f32 %v1640, %v4250
    %v4252 = vpop.f32.mrb[0].mxu0
    %4253 = vmatprep.mubr.f32.mxu0 0.0
    %4254 = vmatmul.mubr.f32.gmra.mrb[0].mxu0 %v3917
    %v4255 = vpop.f32.mrb[0].mxu0
    %v4256 = vadd.f32 %v1640, %v4255
    %v4257 = vpop.f32.mrb[0].mxu0
    %4258 = vmatprep.mubr.f32.mxu0 0.0
    %4259 = vmatmul.mubr.f32.gmra.mrb[0].mxu0 %v3918
    %v4260 = vpop.f32.mrb[0].mxu0
    %v4261 = vadd.f32 %v1640, %v4260
    %v4262 = vpop.f32.mrb[0].mxu0
    %4263 = vmatprep.mubr.f32.mxu0 0.0
    %4264 = vmatmul.mubr.f32.gmra.mrb[0].mxu0 %v3919
    %v4265 = vpop.f32.mrb[0].mxu0
    %v4266 = vadd.f32 %v1640, %v4265
    %v4267 = vpop.f32.mrb[0].mxu0
    %4268 = vmatprep.mubr.f32.mxu0 0.0
    %4269 = vmatmul.mubr.f32.gmra.mrb[0].mxu0 %v3920
    %v4270 = vpop.f32.mrb[0].mxu0
    %v4271 = vadd.f32 %v1640, %v4270
    %v4272 = vpop.f32.mrb[0].mxu0
    %4273 = vmatprep.mubr.f32.mxu0 0.0
    %4274 = vmatmul.mubr.f32.gmra.mrb[0].mxu0 %v3921
    %v4275 = vpop.f32.mrb[0].mxu0
    %v4276 = vadd.f32 %v1640, %v4275
    %v4277 = vpop.f32.mrb[0].mxu0
    %4278 = vmatprep.mubr.f32.mxu0 0.0
    %4279 = vmatmul.mubr.f32.gmra.mrb[0].mxu0 %v3922
    %v4280 = vpop.f32.mrb[0].mxu0
    %v4281 = vadd.f32 %v1640, %v4280
    %v4282 = vpop.f32.mrb[0].mxu0
    %4283 = vmatprep.mubr.f32.mxu0 0.0
    %4284 = vmatmul.mubr.f32.gmra.mrb[0].mxu0 %v3923
    %v4285 = vpop.f32.mrb[0].mxu0
    %v4286 = vadd.f32 %v1640, %v4285
    %v4287 = vpop.f32.mrb[0].mxu0
    %4288 = vmatprep.mubr.f32.mxu0 0.0
    %4289 = vmatmul.mubr.f32.gmra.mrb[0].mxu0 %v3924
    %v4290 = vpop.f32.mrb[0].mxu0
    %v4291 = vadd.f32 %v1640, %v4290
    %v4292 = vpop.f32.mrb[0].mxu0
    %4293 = vmatprep.mubr.f32.mxu0 0.0
    %4294 = vmatmul.mubr.f32.gmra.mrb[0].mxu0 %v3925
    %v4295 = vpop.f32.mrb[0].mxu0
    %v4296 = vadd.f32 %v1640, %v4295
    %v4297 = vpop.f32.mrb[0].mxu0
    %4298 = vmatprep.mubr.f32.mxu0 0.0
    %4299 = vmatmul.mubr.f32.gmra.mrb[0].mxu0 %v3926
    %v4300 = vpop.f32.mrb[0].mxu0
    %v4301 = vadd.f32 %v1640, %v4300
    %v4302 = vpop.f32.mrb[0].mxu0
    %4303 = vmatprep.mubr.f32.mxu0 0.0
    %4304 = vmatmul.mubr.f32.gmra.mrb[0].mxu0 %v3927
    %v4305 = vpop.f32.mrb[0].mxu0
    %v4306 = vadd.f32 %v1640, %v4305
    %v4307 = vpop.f32.mrb[0].mxu0
    %4308 = vmatprep.mubr.f32.mxu0 0.0
    %4309 = vmatmul.mubr.f32.gmra.mrb[0].mxu0 %v3928
    %v4310 = vpop.f32.mrb[0].mxu0
    %v4311 = vadd.f32 %v1640, %v4310
    %v4312 = vpop.f32.mrb[0].mxu0
    %4313 = vdwg.mxu0
    %v4314 = vadd.f32 %v3996, %v4001
    %v4315 = vadd.f32 %v4314, %v4006
    %v4316 = vadd.f32 %v4315, %v4011
    %v4317 = vadd.f32 %v4316, %v4016
    %v4318 = vadd.f32 %v4317, %v4021
    %v4319 = vadd.f32 %v4318, %v4026
    %v4320 = vadd.f32 %v4319, %v4031
    %v4321 = vrot.slane %v4320, 4
    %v4322 = vadd.f32 %v4320, %v4321
    %v4323 = vrot.slane %v4322, 2
    %v4324 = vadd.f32 %v4322, %v4323
    %v4325 = vrot.slane %v4324, 1
    %v4326 = vadd.f32 %v4324, %v4325
    %v4327 = vadd.f32 %v4036, %v4041
    %v4328 = vadd.f32 %v4327, %v4046
    %v4329 = vadd.f32 %v4328, %v4051
    %v4330 = vadd.f32 %v4329, %v4056
    %v4331 = vadd.f32 %v4330, %v4061
    %v4332 = vadd.f32 %v4331, %v4066
    %v4333 = vadd.f32 %v4332, %v4071
    %v4334 = vrot.slane %v4333, 4
    %v4335 = vadd.f32 %v4333, %v4334
    %v4336 = vrot.slane %v4335, 2
    %v4337 = vadd.f32 %v4335, %v4336
    %v4338 = vrot.slane %v4337, 1
    %v4339 = vadd.f32 %v4337, %v4338
    %v4340 = vadd.f32 %v4076, %v4081
    %v4341 = vadd.f32 %v4340, %v4086
    %v4342 = vadd.f32 %v4341, %v4091
    %v4343 = vadd.f32 %v4342, %v4096
    %v4344 = vadd.f32 %v4343, %v4101
    %v4345 = vadd.f32 %v4344, %v4106
    %v4346 = vadd.f32 %v4345, %v4111
    %v4347 = vrot.slane %v4346, 4
    %v4348 = vadd.f32 %v4346, %v4347
    %v4349 = vrot.slane %v4348, 2
    %v4350 = vadd.f32 %v4348, %v4349
    %v4351 = vrot.slane %v4350, 1
    %v4352 = vadd.f32 %v4350, %v4351
    %v4353 = vadd.f32 %v4116, %v4121
    %v4354 = vadd.f32 %v4353, %v4126
    %v4355 = vadd.f32 %v4354, %v4131
    %v4356 = vadd.f32 %v4355, %v4136
    %v4357 = vadd.f32 %v4356, %v4141
    %v4358 = vadd.f32 %v4357, %v4146
    %v4359 = vadd.f32 %v4358, %v4151
    %v4360 = vrot.slane %v4359, 4
    %v4361 = vadd.f32 %v4359, %v4360
    %v4362 = vrot.slane %v4361, 2
    %v4363 = vadd.f32 %v4361, %v4362
    %v4364 = vrot.slane %v4363, 1
    %v4365 = vadd.f32 %v4363, %v4364
    %v4366 = vadd.f32 %v4156, %v4161
    %v4367 = vadd.f32 %v4366, %v4166
    %v4368 = vadd.f32 %v4367, %v4171
    %v4369 = vadd.f32 %v4368, %v4176
    %v4370 = vadd.f32 %v4369, %v4181
    %v4371 = vadd.f32 %v4370, %v4186
    %v4372 = vadd.f32 %v4371, %v4191
    %v4373 = vrot.slane %v4372, 4
    %v4374 = vadd.f32 %v4372, %v4373
    %v4375 = vrot.slane %v4374, 2
    %v4376 = vadd.f32 %v4374, %v4375
    %v4377 = vrot.slane %v4376, 1
    %v4378 = vadd.f32 %v4376, %v4377
    %v4379 = vadd.f32 %v4196, %v4201
    %v4380 = vadd.f32 %v4379, %v4206
    %v4381 = vadd.f32 %v4380, %v4211
    %v4382 = vadd.f32 %v4381, %v4216
    %v4383 = vadd.f32 %v4382, %v4221
    %v4384 = vadd.f32 %v4383, %v4226
    %v4385 = vadd.f32 %v4384, %v4231
    %v4386 = vrot.slane %v4385, 4
    %v4387 = vadd.f32 %v4385, %v4386
    %v4388 = vrot.slane %v4387, 2
    %v4389 = vadd.f32 %v4387, %v4388
    %v4390 = vrot.slane %v4389, 1
    %v4391 = vadd.f32 %v4389, %v4390
    %v4392 = vadd.f32 %v4236, %v4241
    %v4393 = vadd.f32 %v4392, %v4246
    %v4394 = vadd.f32 %v4393, %v4251
    %v4395 = vadd.f32 %v4394, %v4256
    %v4396 = vadd.f32 %v4395, %v4261
    %v4397 = vadd.f32 %v4396, %v4266
    %v4398 = vadd.f32 %v4397, %v4271
    %v4399 = vrot.slane %v4398, 4
    %v4400 = vadd.f32 %v4398, %v4399
    %v4401 = vrot.slane %v4400, 2
    %v4402 = vadd.f32 %v4400, %v4401
    %v4403 = vrot.slane %v4402, 1
    %v4404 = vadd.f32 %v4402, %v4403
    %v4405 = vadd.f32 %v4276, %v4281
    %v4406 = vadd.f32 %v4405, %v4286
    %v4407 = vadd.f32 %v4406, %v4291
    %v4408 = vadd.f32 %v4407, %v4296
    %v4409 = vadd.f32 %v4408, %v4301
    %v4410 = vadd.f32 %v4409, %v4306
    %v4411 = vadd.f32 %v4410, %v4311
    %v4412 = vrot.slane %v4411, 4
    %v4413 = vadd.f32 %v4411, %v4412
    %v4414 = vrot.slane %v4413, 2
    %v4415 = vadd.f32 %v4413, %v4414
    %v4416 = vrot.slane %v4415, 1
    %v4417 = vadd.f32 %v4415, %v4416
    %v4426 = vsel %vm2496, %v4339, %v4326
    %v4427 = vsel %vm2498, %v4352, %v4426
    %v4428 = vsel %vm2500, %v4365, %v4427
    %v4429 = vsel %vm2502, %v4378, %v4428
    %v4430 = vsel %vm2504, %v4391, %v4429
    %v4431 = vsel %vm2506, %v4404, %v4430
    %v4432 = vsel %vm2508, %v4417, %v4431
    %4434 = vadd.xlane.f32.xlu0 %v4432
    %v4435 = vpop.xlane.xlu0 %4434
    %v4436 = vsub.f32 0.0, %v4435
    %v4437 = vmul.f32 %v4436, 0.00048828125
    %v4438 = vmul.f32 %v4437, 1.442695
    %v4439 = vpow.pop %v4438
    %v4440 = vadd.f32 %v4439, 1.0
    %v4441 = vrcp.pop %v4440
    %v4442 = vmul.f32 1.0, %v4441
    %4443 = vst [vmem:[#allocation8] sm:$0xff] %v4442
    // Predicated region
    $region26: #{tpu_custom_call.1} parent=1 // pred_check
      _
    $region27: #{tpu_custom_call.1} parent=1 // pred_check_branch
      %4445 = sbr.rel (0) target = $region29
    $region28: #{tpu_custom_call.1} parent=1 // pred_region
      %s4447 = ssub.s32 128, 128
      %4448 = vsyncadd [#allocation4], %s4447
      %s4450 = sshll.u32 [#allocation8], 4
      %s4451 = int_to_ptr.vmem [resolvable:$true] %s4450
      %4453 = dma.vmem_to_hbm [thread:$0]  %s4451, 128, %s3, [#allocation4]
    $region29: #{tpu_custom_call.1} parent=1 // pred_fallthru
      _
    // Predicated region
    $region30: #{tpu_custom_call.1} parent=1 // pred_check
      _
    $region31: #{tpu_custom_call.1} parent=1 // pred_check_branch
      %4455 = sbr.rel (0) target = $region33
    $region32: #{tpu_custom_call.1} parent=1 // pred_region
      %4456 = dma.done [#allocation4], 128
    $region33: #{tpu_custom_call.1} parent=1 // pred_fallthru
      _
    %4457 = vsyncpa [#allocation3], 1
    %4458 = vsyncpa [#allocation6], 1
    %4459 = vsyncpa [#allocation4], 1

</llo_original>
